<compile_context>
chip_gen: v6e
topology: v6e:2x2x1
jax: 0.10.0
libtpu: 0.0.40
codegen_flags: <defaults>
</compile_context>

<pallas_src>
import functools

import jax
import jax.numpy as jnp
import numpy as np
from jax.experimental import pallas as pl
from jax.experimental.pallas import tpu as pltpu


# ----------------------------------------------------------------------------
# Pallas kernels
# ----------------------------------------------------------------------------
def _bilstm_layer_kernel(x_ref, wih_ref, whh_ref, b_ref, out_ref, gx_scr):
    """One fused bidirectional LSTM layer.

    Grid: (2,) over direction (0 = forward, 1 = backward), "parallel" so the
    two independent directions can be sharded across TensorCores on v7x.

    x_ref  : (T*B, I)   time-major flattened layer input (shared by both dirs)
    wih_ref: (I, 4H)    this direction's input->gate weights (transposed)
    whh_ref: (H, 4H)    this direction's hidden->gate weights (transposed)
    b_ref  : (1, 4H)    b_ih + b_hh for this direction
    out_ref: (T, B, H)  this direction's hidden states (original time order)
    gx_scr : (T*B, 4H)  VMEM scratch for the hoisted input projection
    """
    d = pl.program_id(0)
    T, B, H = out_ref.shape

    # Hoisted input projection: one MXU call covering all T time steps.
    gx_scr[...] = (jnp.dot(x_ref[...], wih_ref[...],
                           preferred_element_type=jnp.float32)
                   + b_ref[...])

    whh = whh_ref[...]                                    # [H, 4H]

    def run_direction(time_order):
        # Fully unrolled static time loop; only the h @ W_hh matmul remains
        # inside the recurrence.
        h = jnp.zeros((B, H), jnp.float32)
        c = jnp.zeros((B, H), jnp.float32)
        for s in time_order:
            gx = gx_scr[s * B:(s + 1) * B, :]             # [B, 4H]
            gates = gx + jnp.dot(h, whh, preferred_element_type=jnp.float32)
            # Full-width activations on the 128-lane [B, 4H] vreg, then slice.
            sig = jax.nn.sigmoid(gates)
            tnh = jnp.tanh(gates)
            i_g = sig[:, 0 * H:1 * H]                     # PyTorch gate order:
            f_g = sig[:, 1 * H:2 * H]                     # input, forget,
            g_g = tnh[:, 2 * H:3 * H]                     # cell(g), output
            o_g = sig[:, 3 * H:4 * H]
            c = f_g * c + i_g * g_g
            h = o_g * jnp.tanh(c)
            out_ref[s] = h                                # write in time order

    @pl.when(d == 0)
    def _():
        run_direction(range(T))

    @pl.when(d == 1)
    def _():
        run_direction(range(T - 1, -1, -1))


def _linear_kernel(x_ref, w_ref, b_ref, o_ref):
    """o = x @ w + b  (full tiles, single program, lane-dense V-wide store)."""
    o_ref[...] = (jnp.dot(x_ref[...], w_ref[...],
                          preferred_element_type=jnp.float32)
                  + b_ref[...])


# ----------------------------------------------------------------------------
# Wrappers
# ----------------------------------------------------------------------------
def bilstm_layer(x_tb, wih, whh, b, *, T, B):
    """Run one fused bidirectional LSTM layer.

    x_tb : [T*B, I] float32 time-major flattened input
    wih  : [2, I, 4H], whh : [2, H, 4H], b : [2, 1, 4H]
    returns [2, T, B, H] hidden states (dir 0 = fwd, dir 1 = bwd), both in
    original time order.
    """
    TB, I = x_tb.shape
    H = whh.shape[1]
    G = 4 * H

    grid_spec = pltpu.PrefetchScalarGridSpec(
        num_scalar_prefetch=0,
        grid=(2,),
        in_specs=[
            pl.BlockSpec((TB, I), lambda d: (0, 0)),          # shared input
            pl.BlockSpec((None, I, G), lambda d: (d, 0, 0)),  # per-dir W_ih
            pl.BlockSpec((None, H, G), lambda d: (d, 0, 0)),  # per-dir W_hh
            pl.BlockSpec((None, 1, G), lambda d: (d, 0, 0)),  # per-dir bias
        ],
        out_specs=pl.BlockSpec((None, T, B, H), lambda d: (d, 0, 0, 0)),
        scratch_shapes=[pltpu.VMEM((TB, G), jnp.float32)],
    )

    return pl.pallas_call(
        _bilstm_layer_kernel,
        grid_spec=grid_spec,
        out_shape=jax.ShapeDtypeStruct((2, T, B, H), jnp.float32),
        compiler_params=pltpu.CompilerParams(
            dimension_semantics=("parallel",)),   # fwd/bwd on the 2 TCs (v7x)
    )(x_tb, wih, whh, b)


def linear_pallas(x2d, w_t, b):
    """x2d: [N, F], w_t: [F, V], b: [V] -> [N, V]."""
    N, F = x2d.shape
    V = w_t.shape[1]
    return pl.pallas_call(
        _linear_kernel,
        out_shape=jax.ShapeDtypeStruct((N, V), jnp.float32),
        in_specs=[
            pl.BlockSpec((N, F), lambda: (0, 0)),
            pl.BlockSpec((F, V), lambda: (0, 0)),
            pl.BlockSpec((1, V), lambda: (0, 0)),
        ],
        out_specs=pl.BlockSpec((N, V), lambda: (0, 0)),
    )(x2d, w_t, b.reshape(1, V))


def poem_generator_forward(params, token_ids):
    """Forward pass of PoemGenerator.

    token_ids: int32 [B, T]
    returns  : float32 [B, T, dict_size]
    """
    B, T = token_ids.shape

    # Embedding lookup (glue, plain JAX gather).
    x = jnp.take(params["embedding"], token_ids, axis=0)        # [B, T, E]
    x_tb = jnp.transpose(x, (1, 0, 2)).reshape(T * B, -1)       # [T*B, E]

    # 2-layer bidirectional LSTM: one fused Pallas call per layer.
    feat = x_tb.shape[-1]
    for layer in params["lstm"]:
        H = layer["whh"].shape[1]
        out = bilstm_layer(x_tb, layer["wih"], layer["whh"], layer["b"],
                           T=T, B=B)                            # [2, T, B, H]
        x_tb = jnp.concatenate([out[0], out[1]],
                               axis=-1).reshape(T * B, 2 * H)   # [T*B, 2H]
        feat = 2 * H

    # Back to batch-first for the final Linear (matches nn.Linear on [B,T,2H]).
    h = x_tb.reshape(T, B, feat).transpose(1, 0, 2).reshape(B * T, feat)
    logits = linear_pallas(h, params["lin_w_t"], params["lin_b"])  # [B*T, V]
    return logits.reshape(B, T, -1)


# ----------------------------------------------------------------------------
# Pure-JAX reference (for correctness check)
# ----------------------------------------------------------------------------
def _lstm_dir_ref(x_tm, wih_t, whh_t, b, reverse):
    T, B, _ = x_tm.shape
    H = whh_t.shape[0]
    xs = x_tm[::-1] if reverse else x_tm

    def step(carry, xt):
        h, c = carry
        gates = xt @ wih_t + h @ whh_t + b
        i, f, g, o = jnp.split(gates, 4, axis=-1)
        i = jax.nn.sigmoid(i); f = jax.nn.sigmoid(f)
        g = jnp.tanh(g);       o = jax.nn.sigmoid(o)
        c = f * c + i * g
        h = o * jnp.tanh(c)
        return (h, c), h

    init = (jnp.zeros((B, H), jnp.float32), jnp.zeros((B, H), jnp.float32))
    _, hs = jax.lax.scan(step, init, xs)
    return hs[::-1] if reverse else hs


def poem_generator_forward_ref(params, token_ids):
    B, T = token_ids.shape
    x = jnp.take(params["embedding"], token_ids, axis=0)
    x_tm = jnp.transpose(x, (1, 0, 2))
    for layer in params["lstm"]:
        h_fwd = _lstm_dir_ref(x_tm, layer["wih"][0], layer["whh"][0],
                              layer["b"][0, 0], False)
        h_bwd = _lstm_dir_ref(x_tm, layer["wih"][1], layer["whh"][1],
                              layer["b"][1, 0], True)
        x_tm = jnp.concatenate([h_fwd, h_bwd], axis=-1)
    out = jnp.transpose(x_tm, (1, 0, 2))
    return out @ params["lin_w_t"] + params["lin_b"]


# ----------------------------------------------------------------------------
# Deterministic parameter init
# ----------------------------------------------------------------------------
def init_params(key, *, dict_size, word_embedding, num_layers, padding_idx):
    E = word_embedding
    H = word_embedding
    V = dict_size
    keys = iter(jax.random.split(key, 64))
    bound = 1.0 / np.sqrt(H)

    def u(k, shape):
        return jax.random.uniform(k, shape, jnp.float32, -bound, bound)

    emb = jax.random.normal(next(keys), (V, E), jnp.float32)
    emb = emb.at[padding_idx].set(0.0)          # padding_idx row is zero

    lstm_layers = []
    for layer in range(num_layers):
        in_size = E if layer == 0 else 2 * H
        wih_dirs, whh_dirs, b_dirs = [], [], []
        for _ in range(2):                       # forward / backward direction
            wih_dirs.append(u(next(keys), (in_size, 4 * H)))   # transposed
            whh_dirs.append(u(next(keys), (H, 4 * H)))         # transposed
            b_ih = u(next(keys), (4 * H,))
            b_hh = u(next(keys), (4 * H,))
            b_dirs.append((b_ih + b_hh).reshape(1, 4 * H))
        lstm_layers.append({
            "wih": jnp.stack(wih_dirs),          # [2, in, 4H]
            "whh": jnp.stack(whh_dirs),          # [2, H, 4H]
            "b":   jnp.stack(b_dirs),            # [2, 1, 4H]
        })

    lin_w_t = u(next(keys), (2 * H, V))          # transposed Linear weight
    lin_b = u(next(keys), (V,))

    return {"embedding": emb, "lstm": lstm_layers,
            "lin_w_t": lin_w_t, "lin_b": lin_b}


# ----------------------------------------------------------------------------
# Main
# ----------------------------------------------------------------------------
if __name__ == "__main__":
    # Small shapes consistent with the module (word_embedding=hidden, 2-layer
    # bidirectional LSTM, Linear to dict_size).
    B, T = 2, 8
    WORD_EMBEDDING = 32
    DICT_SIZE = 128
    PADDING_IDX = DICT_SIZE - 1
    NUM_LAYERS = 2

    key = jax.random.PRNGKey(0)
    pkey, dkey = jax.random.split(key)
    params = init_params(pkey,
                         dict_size=DICT_SIZE,
                         word_embedding=WORD_EMBEDDING,
                         num_layers=NUM_LAYERS,
                         padding_idx=PADDING_IDX)

    token_ids = jax.random.randint(dkey, (B, T), 0, DICT_SIZE, dtype=jnp.int32)

    fwd = jax.jit(functools.partial(poem_generator_forward, params))
    logits = fwd(token_ids)
    jax.block_until_ready(logits)

    # Validate against a pure-JAX reference.
    logits_ref = poem_generator_forward_ref(params, token_ids)
    assert logits.shape == (B, T, DICT_SIZE)
    np.testing.assert_allclose(np.asarray(logits), np.asarray(logits_ref),
                               rtol=1e-4, atol=1e-4)

    print("KERNEL_OK")
</pallas_src>

<mosaic_0001>
module attributes {stable_mosaic.version = 11 : i64} {
  func.func @_bilstm_layer_kernel(%arg0: i32, %arg1: memref<16x64xf32, #tpu.memory_space<vmem>>, %arg2: memref<1x64x128xf32, #tpu.memory_space<vmem>>, %arg3: memref<1x32x128xf32, #tpu.memory_space<vmem>>, %arg4: memref<1x1x128xf32, #tpu.memory_space<vmem>>, %arg5: memref<1x8x2x32xf32, #tpu.memory_space<vmem>>, %arg6: memref<16x128xf32, #tpu.memory_space<vmem>>) attributes {dimension_semantics = [#tpu.dimension_semantics<parallel>], iteration_bounds = array<i64: 2>, scalar_prefetch = 0 : i64, scratch_operands = 1 : i64, tpu.core_type = #tpu.core_type<tc>, window_params = [{pipeline_mode = #tpu.pipeline_mode<synchronous>, transform_indices = @transform_0, window_bounds = array<i64: 16, 64>}, {transform_indices = @transform_1, window_bounds = array<i64: 1, 64, 128>}, {transform_indices = @transform_2, window_bounds = array<i64: 1, 32, 128>}, {transform_indices = @transform_3, window_bounds = array<i64: 1, 1, 128>}, {transform_indices = @transform_4, window_bounds = array<i64: 1, 8, 2, 32>}]} {
    %c0 = arith.constant 0 : index
    %c0_0 = arith.constant 0 : index
    %0 = vector.load %arg1[%c0, %c0_0] : memref<16x64xf32, #tpu.memory_space<vmem>>, vector<16x64xf32>
    %c0_1 = arith.constant 0 : index
    %c0_2 = arith.constant 0 : index
    %c0_3 = arith.constant 0 : index
    %1 = vector.load %arg2[%c0_1, %c0_2, %c0_3] : memref<1x64x128xf32, #tpu.memory_space<vmem>>, vector<1x64x128xf32>
    %2 = vector.shape_cast %1 : vector<1x64x128xf32> to vector<64x128xf32>
    %cst = arith.constant dense<0.000000e+00> : vector<16x128xf32>
    %3 = tpu.matmul %0, %2, %cst {dimension_numbers = #tpu.dot_dimension_numbers<[1], [0], [0], [1], [0, 0, 1, 1], [], []>} : vector<16x64xf32>, vector<64x128xf32>, vector<16x128xf32> -> vector<16x128xf32>
    %c0_4 = arith.constant 0 : index
    %c0_5 = arith.constant 0 : index
    %c0_6 = arith.constant 0 : index
    %4 = vector.load %arg4[%c0_4, %c0_5, %c0_6] : memref<1x1x128xf32, #tpu.memory_space<vmem>>, vector<1x1x128xf32>
    %5 = vector.shape_cast %4 : vector<1x1x128xf32> to vector<1x128xf32>
    %6 = vector.broadcast %5 : vector<1x128xf32> to vector<16x128xf32>
    %7 = arith.addf %3, %6 : vector<16x128xf32>
    %c0_7 = arith.constant 0 : index
    %c0_8 = arith.constant 0 : index
    %8 = vector.load %arg6[%c0_7, %c0_8] : memref<16x128xf32, #tpu.memory_space<vmem>>, vector<16x128xf32>
    tpu.vector_store %arg6[%c0_7, %c0_8], %7 {strides = array<i32>} : memref<16x128xf32, #tpu.memory_space<vmem>>, vector<16x128xf32>,
    %c0_9 = arith.constant 0 : index
    %c0_10 = arith.constant 0 : index
    %c0_11 = arith.constant 0 : index
    %9 = vector.load %arg3[%c0_9, %c0_10, %c0_11] : memref<1x32x128xf32, #tpu.memory_space<vmem>>, vector<1x32x128xf32>
    %10 = vector.shape_cast %9 : vector<1x32x128xf32> to vector<32x128xf32>
    %c0_i32 = arith.constant 0 : i32
    %11 = arith.cmpi eq, %arg0, %c0_i32 : i32
    %12 = arith.extui %11 : i1 to i32
    %c0_i32_12 = arith.constant 0 : i32
    %13 = arith.cmpi ne, %12, %c0_i32_12 : i32
    scf.if %13 {
      %cst_14 = arith.constant 0.000000e+00 : f32
      %17 = vector.broadcast %cst_14 : f32 to vector<2x32xf32>
      %cst_15 = arith.constant 0.000000e+00 : f32
      %18 = vector.broadcast %cst_15 : f32 to vector<2x32xf32>
      %c0_16 = arith.constant 0 : index
      %c0_17 = arith.constant 0 : index
      %19 = vector.load %arg6[%c0_16, %c0_17] : memref<16x128xf32, #tpu.memory_space<vmem>>, vector<2x128xf32>
      %cst_18 = arith.constant dense<0.000000e+00> : vector<2x128xf32>
      %20 = tpu.matmul %17, %10, %cst_18 {dimension_numbers = #tpu.dot_dimension_numbers<[1], [0], [0], [1], [0, 0, 1, 1], [], []>} : vector<2x32xf32>, vector<32x128xf32>, vector<2x128xf32> -> vector<2x128xf32>
      %21 = arith.addf %19, %20 : vector<2x128xf32>
      %22 = arith.negf %21 : vector<2x128xf32>
      %23 = math.exp %22 : vector<2x128xf32>
      %cst_19 = arith.constant 1.000000e+00 : f32
      %24 = vector.broadcast %cst_19 : f32 to vector<2x128xf32>
      %25 = arith.addf %24, %23 : vector<2x128xf32>
      %26 = arith.divf %24, %25 : vector<2x128xf32>
      %27 = math.tanh %21 : vector<2x128xf32>
      %28 = vector.extract_strided_slice %26 {offsets = [0, 0], sizes = [2, 32], strides = [1, 1]} : vector<2x128xf32> to vector<2x32xf32>
      %29 = vector.extract_strided_slice %26 {offsets = [0, 32], sizes = [2, 32], strides = [1, 1]} : vector<2x128xf32> to vector<2x32xf32>
      %30 = vector.extract_strided_slice %27 {offsets = [0, 64], sizes = [2, 32], strides = [1, 1]} : vector<2x128xf32> to vector<2x32xf32>
      %31 = vector.extract_strided_slice %26 {offsets = [0, 96], sizes = [2, 32], strides = [1, 1]} : vector<2x128xf32> to vector<2x32xf32>
      %32 = arith.mulf %29, %18 : vector<2x32xf32>
      %33 = arith.mulf %28, %30 : vector<2x32xf32>
      %34 = arith.addf %32, %33 : vector<2x32xf32>
      %35 = math.tanh %34 : vector<2x32xf32>
      %36 = arith.mulf %31, %35 : vector<2x32xf32>
      %c0_20 = arith.constant 0 : index
      %c0_21 = arith.constant 0 : index
      %c0_22 = arith.constant 0 : index
      %c0_23 = arith.constant 0 : index
      %37 = vector.load %arg5[%c0_20, %c0_21, %c0_22, %c0_23] : memref<1x8x2x32xf32, #tpu.memory_space<vmem>>, vector<1x1x2x32xf32>
      %38 = vector.shape_cast %37 : vector<1x1x2x32xf32> to vector<2x32xf32>
      %39 = vector.shape_cast %36 : vector<2x32xf32> to vector<1x1x2x32xf32>
      tpu.vector_store %arg5[%c0_20, %c0_21, %c0_22, %c0_23], %39 {strides = array<i32>} : memref<1x8x2x32xf32, #tpu.memory_space<vmem>>, vector<1x1x2x32xf32>,
      %c2 = arith.constant 2 : index
      %c0_24 = arith.constant 0 : index
      %40 = vector.load %arg6[%c2, %c0_24] : memref<16x128xf32, #tpu.memory_space<vmem>>, vector<2x128xf32>
      %cst_25 = arith.constant dense<0.000000e+00> : vector<2x128xf32>
      %41 = tpu.matmul %36, %10, %cst_25 {dimension_numbers = #tpu.dot_dimension_numbers<[1], [0], [0], [1], [0, 0, 1, 1], [], []>} : vector<2x32xf32>, vector<32x128xf32>, vector<2x128xf32> -> vector<2x128xf32>
      %42 = arith.addf %40, %41 : vector<2x128xf32>
      %43 = arith.negf %42 : vector<2x128xf32>
      %44 = math.exp %43 : vector<2x128xf32>
      %cst_26 = arith.constant 1.000000e+00 : f32
      %45 = vector.broadcast %cst_26 : f32 to vector<2x128xf32>
      %46 = arith.addf %45, %44 : vector<2x128xf32>
      %47 = arith.divf %45, %46 : vector<2x128xf32>
      %48 = math.tanh %42 : vector<2x128xf32>
      %49 = vector.extract_strided_slice %47 {offsets = [0, 0], sizes = [2, 32], strides = [1, 1]} : vector<2x128xf32> to vector<2x32xf32>
      %50 = vector.extract_strided_slice %47 {offsets = [0, 32], sizes = [2, 32], strides = [1, 1]} : vector<2x128xf32> to vector<2x32xf32>
      %51 = vector.extract_strided_slice %48 {offsets = [0, 64], sizes = [2, 32], strides = [1, 1]} : vector<2x128xf32> to vector<2x32xf32>
      %52 = vector.extract_strided_slice %47 {offsets = [0, 96], sizes = [2, 32], strides = [1, 1]} : vector<2x128xf32> to vector<2x32xf32>
      %53 = arith.mulf %50, %34 : vector<2x32xf32>
      %54 = arith.mulf %49, %51 : vector<2x32xf32>
      %55 = arith.addf %53, %54 : vector<2x32xf32>
      %56 = math.tanh %55 : vector<2x32xf32>
      %57 = arith.mulf %52, %56 : vector<2x32xf32>
      %c0_27 = arith.constant 0 : index
      %c1 = arith.constant 1 : index
      %c0_28 = arith.constant 0 : index
      %c0_29 = arith.constant 0 : index
      %58 = vector.load %arg5[%c0_27, %c1, %c0_28, %c0_29] : memref<1x8x2x32xf32, #tpu.memory_space<vmem>>, vector<1x1x2x32xf32>
      %59 = vector.shape_cast %58 : vector<1x1x2x32xf32> to vector<2x32xf32>
      %60 = vector.shape_cast %57 : vector<2x32xf32> to vector<1x1x2x32xf32>
      tpu.vector_store %arg5[%c0_27, %c1, %c0_28, %c0_29], %60 {strides = array<i32>} : memref<1x8x2x32xf32, #tpu.memory_space<vmem>>, vector<1x1x2x32xf32>,
      %c4 = arith.constant 4 : index
      %c0_30 = arith.constant 0 : index
      %61 = vector.load %arg6[%c4, %c0_30] : memref<16x128xf32, #tpu.memory_space<vmem>>, vector<2x128xf32>
      %cst_31 = arith.constant dense<0.000000e+00> : vector<2x128xf32>
      %62 = tpu.matmul %57, %10, %cst_31 {dimension_numbers = #tpu.dot_dimension_numbers<[1], [0], [0], [1], [0, 0, 1, 1], [], []>} : vector<2x32xf32>, vector<32x128xf32>, vector<2x128xf32> -> vector<2x128xf32>
      %63 = arith.addf %61, %62 : vector<2x128xf32>
      %64 = arith.negf %63 : vector<2x128xf32>
      %65 = math.exp %64 : vector<2x128xf32>
      %cst_32 = arith.constant 1.000000e+00 : f32
      %66 = vector.broadcast %cst_32 : f32 to vector<2x128xf32>
      %67 = arith.addf %66, %65 : vector<2x128xf32>
      %68 = arith.divf %66, %67 : vector<2x128xf32>
      %69 = math.tanh %63 : vector<2x128xf32>
      %70 = vector.extract_strided_slice %68 {offsets = [0, 0], sizes = [2, 32], strides = [1, 1]} : vector<2x128xf32> to vector<2x32xf32>
      %71 = vector.extract_strided_slice %68 {offsets = [0, 32], sizes = [2, 32], strides = [1, 1]} : vector<2x128xf32> to vector<2x32xf32>
      %72 = vector.extract_strided_slice %69 {offsets = [0, 64], sizes = [2, 32], strides = [1, 1]} : vector<2x128xf32> to vector<2x32xf32>
      %73 = vector.extract_strided_slice %68 {offsets = [0, 96], sizes = [2, 32], strides = [1, 1]} : vector<2x128xf32> to vector<2x32xf32>
      %74 = arith.mulf %71, %55 : vector<2x32xf32>
      %75 = arith.mulf %70, %72 : vector<2x32xf32>
      %76 = arith.addf %74, %75 : vector<2x32xf32>
      %77 = math.tanh %76 : vector<2x32xf32>
      %78 = arith.mulf %73, %77 : vector<2x32xf32>
      %c0_33 = arith.constant 0 : index
      %c2_34 = arith.constant 2 : index
      %c0_35 = arith.constant 0 : index
      %c0_36 = arith.constant 0 : index
      %79 = vector.load %arg5[%c0_33, %c2_34, %c0_35, %c0_36] : memref<1x8x2x32xf32, #tpu.memory_space<vmem>>, vector<1x1x2x32xf32>
      %80 = vector.shape_cast %79 : vector<1x1x2x32xf32> to vector<2x32xf32>
      %81 = vector.shape_cast %78 : vector<2x32xf32> to vector<1x1x2x32xf32>
      tpu.vector_store %arg5[%c0_33, %c2_34, %c0_35, %c0_36], %81 {strides = array<i32>} : memref<1x8x2x32xf32, #tpu.memory_space<vmem>>, vector<1x1x2x32xf32>,
      %c6 = arith.constant 6 : index
      %c0_37 = arith.constant 0 : index
      %82 = vector.load %arg6[%c6, %c0_37] : memref<16x128xf32, #tpu.memory_space<vmem>>, vector<2x128xf32>
      %cst_38 = arith.constant dense<0.000000e+00> : vector<2x128xf32>
      %83 = tpu.matmul %78, %10, %cst_38 {dimension_numbers = #tpu.dot_dimension_numbers<[1], [0], [0], [1], [0, 0, 1, 1], [], []>} : vector<2x32xf32>, vector<32x128xf32>, vector<2x128xf32> -> vector<2x128xf32>
      %84 = arith.addf %82, %83 : vector<2x128xf32>
      %85 = arith.negf %84 : vector<2x128xf32>
      %86 = math.exp %85 : vector<2x128xf32>
      %cst_39 = arith.constant 1.000000e+00 : f32
      %87 = vector.broadcast %cst_39 : f32 to vector<2x128xf32>
      %88 = arith.addf %87, %86 : vector<2x128xf32>
      %89 = arith.divf %87, %88 : vector<2x128xf32>
      %90 = math.tanh %84 : vector<2x128xf32>
      %91 = vector.extract_strided_slice %89 {offsets = [0, 0], sizes = [2, 32], strides = [1, 1]} : vector<2x128xf32> to vector<2x32xf32>
      %92 = vector.extract_strided_slice %89 {offsets = [0, 32], sizes = [2, 32], strides = [1, 1]} : vector<2x128xf32> to vector<2x32xf32>
      %93 = vector.extract_strided_slice %90 {offsets = [0, 64], sizes = [2, 32], strides = [1, 1]} : vector<2x128xf32> to vector<2x32xf32>
      %94 = vector.extract_strided_slice %89 {offsets = [0, 96], sizes = [2, 32], strides = [1, 1]} : vector<2x128xf32> to vector<2x32xf32>
      %95 = arith.mulf %92, %76 : vector<2x32xf32>
      %96 = arith.mulf %91, %93 : vector<2x32xf32>
      %97 = arith.addf %95, %96 : vector<2x32xf32>
      %98 = math.tanh %97 : vector<2x32xf32>
      %99 = arith.mulf %94, %98 : vector<2x32xf32>
      %c0_40 = arith.constant 0 : index
      %c3 = arith.constant 3 : index
      %c0_41 = arith.constant 0 : index
      %c0_42 = arith.constant 0 : index
      %100 = vector.load %arg5[%c0_40, %c3, %c0_41, %c0_42] : memref<1x8x2x32xf32, #tpu.memory_space<vmem>>, vector<1x1x2x32xf32>
      %101 = vector.shape_cast %100 : vector<1x1x2x32xf32> to vector<2x32xf32>
      %102 = vector.shape_cast %99 : vector<2x32xf32> to vector<1x1x2x32xf32>
      tpu.vector_store %arg5[%c0_40, %c3, %c0_41, %c0_42], %102 {strides = array<i32>} : memref<1x8x2x32xf32, #tpu.memory_space<vmem>>, vector<1x1x2x32xf32>,
      %c8 = arith.constant 8 : index
      %c0_43 = arith.constant 0 : index
      %103 = vector.load %arg6[%c8, %c0_43] : memref<16x128xf32, #tpu.memory_space<vmem>>, vector<2x128xf32>
      %cst_44 = arith.constant dense<0.000000e+00> : vector<2x128xf32>
      %104 = tpu.matmul %99, %10, %cst_44 {dimension_numbers = #tpu.dot_dimension_numbers<[1], [0], [0], [1], [0, 0, 1, 1], [], []>} : vector<2x32xf32>, vector<32x128xf32>, vector<2x128xf32> -> vector<2x128xf32>
      %105 = arith.addf %103, %104 : vector<2x128xf32>
      %106 = arith.negf %105 : vector<2x128xf32>
      %107 = math.exp %106 : vector<2x128xf32>
      %cst_45 = arith.constant 1.000000e+00 : f32
      %108 = vector.broadcast %cst_45 : f32 to vector<2x128xf32>
      %109 = arith.addf %108, %107 : vector<2x128xf32>
      %110 = arith.divf %108, %109 : vector<2x128xf32>
      %111 = math.tanh %105 : vector<2x128xf32>
      %112 = vector.extract_strided_slice %110 {offsets = [0, 0], sizes = [2, 32], strides = [1, 1]} : vector<2x128xf32> to vector<2x32xf32>
      %113 = vector.extract_strided_slice %110 {offsets = [0, 32], sizes = [2, 32], strides = [1, 1]} : vector<2x128xf32> to vector<2x32xf32>
      %114 = vector.extract_strided_slice %111 {offsets = [0, 64], sizes = [2, 32], strides = [1, 1]} : vector<2x128xf32> to vector<2x32xf32>
      %115 = vector.extract_strided_slice %110 {offsets = [0, 96], sizes = [2, 32], strides = [1, 1]} : vector<2x128xf32> to vector<2x32xf32>
      %116 = arith.mulf %113, %97 : vector<2x32xf32>
      %117 = arith.mulf %112, %114 : vector<2x32xf32>
      %118 = arith.addf %116, %117 : vector<2x32xf32>
      %119 = math.tanh %118 : vector<2x32xf32>
      %120 = arith.mulf %115, %119 : vector<2x32xf32>
      %c0_46 = arith.constant 0 : index
      %c4_47 = arith.constant 4 : index
      %c0_48 = arith.constant 0 : index
      %c0_49 = arith.constant 0 : index
      %121 = vector.load %arg5[%c0_46, %c4_47, %c0_48, %c0_49] : memref<1x8x2x32xf32, #tpu.memory_space<vmem>>, vector<1x1x2x32xf32>
      %122 = vector.shape_cast %121 : vector<1x1x2x32xf32> to vector<2x32xf32>
      %123 = vector.shape_cast %120 : vector<2x32xf32> to vector<1x1x2x32xf32>
      tpu.vector_store %arg5[%c0_46, %c4_47, %c0_48, %c0_49], %123 {strides = array<i32>} : memref<1x8x2x32xf32, #tpu.memory_space<vmem>>, vector<1x1x2x32xf32>,
      %c10 = arith.constant 10 : index
      %c0_50 = arith.constant 0 : index
      %124 = vector.load %arg6[%c10, %c0_50] : memref<16x128xf32, #tpu.memory_space<vmem>>, vector<2x128xf32>
      %cst_51 = arith.constant dense<0.000000e+00> : vector<2x128xf32>
      %125 = tpu.matmul %120, %10, %cst_51 {dimension_numbers = #tpu.dot_dimension_numbers<[1], [0], [0], [1], [0, 0, 1, 1], [], []>} : vector<2x32xf32>, vector<32x128xf32>, vector<2x128xf32> -> vector<2x128xf32>
      %126 = arith.addf %124, %125 : vector<2x128xf32>
      %127 = arith.negf %126 : vector<2x128xf32>
      %128 = math.exp %127 : vector<2x128xf32>
      %cst_52 = arith.constant 1.000000e+00 : f32
      %129 = vector.broadcast %cst_52 : f32 to vector<2x128xf32>
      %130 = arith.addf %129, %128 : vector<2x128xf32>
      %131 = arith.divf %129, %130 : vector<2x128xf32>
      %132 = math.tanh %126 : vector<2x128xf32>
      %133 = vector.extract_strided_slice %131 {offsets = [0, 0], sizes = [2, 32], strides = [1, 1]} : vector<2x128xf32> to vector<2x32xf32>
      %134 = vector.extract_strided_slice %131 {offsets = [0, 32], sizes = [2, 32], strides = [1, 1]} : vector<2x128xf32> to vector<2x32xf32>
      %135 = vector.extract_strided_slice %132 {offsets = [0, 64], sizes = [2, 32], strides = [1, 1]} : vector<2x128xf32> to vector<2x32xf32>
      %136 = vector.extract_strided_slice %131 {offsets = [0, 96], sizes = [2, 32], strides = [1, 1]} : vector<2x128xf32> to vector<2x32xf32>
      %137 = arith.mulf %134, %118 : vector<2x32xf32>
      %138 = arith.mulf %133, %135 : vector<2x32xf32>
      %139 = arith.addf %137, %138 : vector<2x32xf32>
      %140 = math.tanh %139 : vector<2x32xf32>
      %141 = arith.mulf %136, %140 : vector<2x32xf32>
      %c0_53 = arith.constant 0 : index
      %c5 = arith.constant 5 : index
      %c0_54 = arith.constant 0 : index
      %c0_55 = arith.constant 0 : index
      %142 = vector.load %arg5[%c0_53, %c5, %c0_54, %c0_55] : memref<1x8x2x32xf32, #tpu.memory_space<vmem>>, vector<1x1x2x32xf32>
      %143 = vector.shape_cast %142 : vector<1x1x2x32xf32> to vector<2x32xf32>
      %144 = vector.shape_cast %141 : vector<2x32xf32> to vector<1x1x2x32xf32>
      tpu.vector_store %arg5[%c0_53, %c5, %c0_54, %c0_55], %144 {strides = array<i32>} : memref<1x8x2x32xf32, #tpu.memory_space<vmem>>, vector<1x1x2x32xf32>,
      %c12 = arith.constant 12 : index
      %c0_56 = arith.constant 0 : index
      %145 = vector.load %arg6[%c12, %c0_56] : memref<16x128xf32, #tpu.memory_space<vmem>>, vector<2x128xf32>
      %cst_57 = arith.constant dense<0.000000e+00> : vector<2x128xf32>
      %146 = tpu.matmul %141, %10, %cst_57 {dimension_numbers = #tpu.dot_dimension_numbers<[1], [0], [0], [1], [0, 0, 1, 1], [], []>} : vector<2x32xf32>, vector<32x128xf32>, vector<2x128xf32> -> vector<2x128xf32>
      %147 = arith.addf %145, %146 : vector<2x128xf32>
      %148 = arith.negf %147 : vector<2x128xf32>
      %149 = math.exp %148 : vector<2x128xf32>
      %cst_58 = arith.constant 1.000000e+00 : f32
      %150 = vector.broadcast %cst_58 : f32 to vector<2x128xf32>
      %151 = arith.addf %150, %149 : vector<2x128xf32>
      %152 = arith.divf %150, %151 : vector<2x128xf32>
      %153 = math.tanh %147 : vector<2x128xf32>
      %154 = vector.extract_strided_slice %152 {offsets = [0, 0], sizes = [2, 32], strides = [1, 1]} : vector<2x128xf32> to vector<2x32xf32>
      %155 = vector.extract_strided_slice %152 {offsets = [0, 32], sizes = [2, 32], strides = [1, 1]} : vector<2x128xf32> to vector<2x32xf32>
      %156 = vector.extract_strided_slice %153 {offsets = [0, 64], sizes = [2, 32], strides = [1, 1]} : vector<2x128xf32> to vector<2x32xf32>
      %157 = vector.extract_strided_slice %152 {offsets = [0, 96], sizes = [2, 32], strides = [1, 1]} : vector<2x128xf32> to vector<2x32xf32>
      %158 = arith.mulf %155, %139 : vector<2x32xf32>
      %159 = arith.mulf %154, %156 : vector<2x32xf32>
      %160 = arith.addf %158, %159 : vector<2x32xf32>
      %161 = math.tanh %160 : vector<2x32xf32>
      %162 = arith.mulf %157, %161 : vector<2x32xf32>
      %c0_59 = arith.constant 0 : index
      %c6_60 = arith.constant 6 : index
      %c0_61 = arith.constant 0 : index
      %c0_62 = arith.constant 0 : index
      %163 = vector.load %arg5[%c0_59, %c6_60, %c0_61, %c0_62] : memref<1x8x2x32xf32, #tpu.memory_space<vmem>>, vector<1x1x2x32xf32>
      %164 = vector.shape_cast %163 : vector<1x1x2x32xf32> to vector<2x32xf32>
      %165 = vector.shape_cast %162 : vector<2x32xf32> to vector<1x1x2x32xf32>
      tpu.vector_store %arg5[%c0_59, %c6_60, %c0_61, %c0_62], %165 {strides = array<i32>} : memref<1x8x2x32xf32, #tpu.memory_space<vmem>>, vector<1x1x2x32xf32>,
      %c14 = arith.constant 14 : index
      %c0_63 = arith.constant 0 : index
      %166 = vector.load %arg6[%c14, %c0_63] : memref<16x128xf32, #tpu.memory_space<vmem>>, vector<2x128xf32>
      %cst_64 = arith.constant dense<0.000000e+00> : vector<2x128xf32>
      %167 = tpu.matmul %162, %10, %cst_64 {dimension_numbers = #tpu.dot_dimension_numbers<[1], [0], [0], [1], [0, 0, 1, 1], [], []>} : vector<2x32xf32>, vector<32x128xf32>, vector<2x128xf32> -> vector<2x128xf32>
      %168 = arith.addf %166, %167 : vector<2x128xf32>
      %169 = arith.negf %168 : vector<2x128xf32>
      %170 = math.exp %169 : vector<2x128xf32>
      %cst_65 = arith.constant 1.000000e+00 : f32
      %171 = vector.broadcast %cst_65 : f32 to vector<2x128xf32>
      %172 = arith.addf %171, %170 : vector<2x128xf32>
      %173 = arith.divf %171, %172 : vector<2x128xf32>
      %174 = math.tanh %168 : vector<2x128xf32>
      %175 = vector.extract_strided_slice %173 {offsets = [0, 0], sizes = [2, 32], strides = [1, 1]} : vector<2x128xf32> to vector<2x32xf32>
      %176 = vector.extract_strided_slice %173 {offsets = [0, 32], sizes = [2, 32], strides = [1, 1]} : vector<2x128xf32> to vector<2x32xf32>
      %177 = vector.extract_strided_slice %174 {offsets = [0, 64], sizes = [2, 32], strides = [1, 1]} : vector<2x128xf32> to vector<2x32xf32>
      %178 = vector.extract_strided_slice %173 {offsets = [0, 96], sizes = [2, 32], strides = [1, 1]} : vector<2x128xf32> to vector<2x32xf32>
      %179 = arith.mulf %176, %160 : vector<2x32xf32>
      %180 = arith.mulf %175, %177 : vector<2x32xf32>
      %181 = arith.addf %179, %180 : vector<2x32xf32>
      %182 = math.tanh %181 : vector<2x32xf32>
      %183 = arith.mulf %178, %182 : vector<2x32xf32>
      %c0_66 = arith.constant 0 : index
      %c7 = arith.constant 7 : index
      %c0_67 = arith.constant 0 : index
      %c0_68 = arith.constant 0 : index
      %184 = vector.load %arg5[%c0_66, %c7, %c0_67, %c0_68] : memref<1x8x2x32xf32, #tpu.memory_space<vmem>>, vector<1x1x2x32xf32>
      %185 = vector.shape_cast %184 : vector<1x1x2x32xf32> to vector<2x32xf32>
      %186 = vector.shape_cast %183 : vector<2x32xf32> to vector<1x1x2x32xf32>
      tpu.vector_store %arg5[%c0_66, %c7, %c0_67, %c0_68], %186 {strides = array<i32>} : memref<1x8x2x32xf32, #tpu.memory_space<vmem>>, vector<1x1x2x32xf32>,
    } else {
    }
    %c1_i32 = arith.constant 1 : i32
    %14 = arith.cmpi eq, %arg0, %c1_i32 : i32
    %15 = arith.extui %14 : i1 to i32
    %c0_i32_13 = arith.constant 0 : i32
    %16 = arith.cmpi ne, %15, %c0_i32_13 : i32
    scf.if %16 {
      %cst_14 = arith.constant 0.000000e+00 : f32
      %17 = vector.broadcast %cst_14 : f32 to vector<2x32xf32>
      %cst_15 = arith.constant 0.000000e+00 : f32
      %18 = vector.broadcast %cst_15 : f32 to vector<2x32xf32>
      %c14 = arith.constant 14 : index
      %c0_16 = arith.constant 0 : index
      %19 = vector.load %arg6[%c14, %c0_16] : memref<16x128xf32, #tpu.memory_space<vmem>>, vector<2x128xf32>
      %cst_17 = arith.constant dense<0.000000e+00> : vector<2x128xf32>
      %20 = tpu.matmul %17, %10, %cst_17 {dimension_numbers = #tpu.dot_dimension_numbers<[1], [0], [0], [1], [0, 0, 1, 1], [], []>} : vector<2x32xf32>, vector<32x128xf32>, vector<2x128xf32> -> vector<2x128xf32>
      %21 = arith.addf %19, %20 : vector<2x128xf32>
      %22 = arith.negf %21 : vector<2x128xf32>
      %23 = math.exp %22 : vector<2x128xf32>
      %cst_18 = arith.constant 1.000000e+00 : f32
      %24 = vector.broadcast %cst_18 : f32 to vector<2x128xf32>
      %25 = arith.addf %24, %23 : vector<2x128xf32>
      %26 = arith.divf %24, %25 : vector<2x128xf32>
      %27 = math.tanh %21 : vector<2x128xf32>
      %28 = vector.extract_strided_slice %26 {offsets = [0, 0], sizes = [2, 32], strides = [1, 1]} : vector<2x128xf32> to vector<2x32xf32>
      %29 = vector.extract_strided_slice %26 {offsets = [0, 32], sizes = [2, 32], strides = [1, 1]} : vector<2x128xf32> to vector<2x32xf32>
      %30 = vector.extract_strided_slice %27 {offsets = [0, 64], sizes = [2, 32], strides = [1, 1]} : vector<2x128xf32> to vector<2x32xf32>
      %31 = vector.extract_strided_slice %26 {offsets = [0, 96], sizes = [2, 32], strides = [1, 1]} : vector<2x128xf32> to vector<2x32xf32>
      %32 = arith.mulf %29, %18 : vector<2x32xf32>
      %33 = arith.mulf %28, %30 : vector<2x32xf32>
      %34 = arith.addf %32, %33 : vector<2x32xf32>
      %35 = math.tanh %34 : vector<2x32xf32>
      %36 = arith.mulf %31, %35 : vector<2x32xf32>
      %c0_19 = arith.constant 0 : index
      %c7 = arith.constant 7 : index
      %c0_20 = arith.constant 0 : index
      %c0_21 = arith.constant 0 : index
      %37 = vector.load %arg5[%c0_19, %c7, %c0_20, %c0_21] : memref<1x8x2x32xf32, #tpu.memory_space<vmem>>, vector<1x1x2x32xf32>
      %38 = vector.shape_cast %37 : vector<1x1x2x32xf32> to vector<2x32xf32>
      %39 = vector.shape_cast %36 : vector<2x32xf32> to vector<1x1x2x32xf32>
      tpu.vector_store %arg5[%c0_19, %c7, %c0_20, %c0_21], %39 {strides = array<i32>} : memref<1x8x2x32xf32, #tpu.memory_space<vmem>>, vector<1x1x2x32xf32>,
      %c12 = arith.constant 12 : index
      %c0_22 = arith.constant 0 : index
      %40 = vector.load %arg6[%c12, %c0_22] : memref<16x128xf32, #tpu.memory_space<vmem>>, vector<2x128xf32>
      %cst_23 = arith.constant dense<0.000000e+00> : vector<2x128xf32>
      %41 = tpu.matmul %36, %10, %cst_23 {dimension_numbers = #tpu.dot_dimension_numbers<[1], [0], [0], [1], [0, 0, 1, 1], [], []>} : vector<2x32xf32>, vector<32x128xf32>, vector<2x128xf32> -> vector<2x128xf32>
      %42 = arith.addf %40, %41 : vector<2x128xf32>
      %43 = arith.negf %42 : vector<2x128xf32>
      %44 = math.exp %43 : vector<2x128xf32>
      %cst_24 = arith.constant 1.000000e+00 : f32
      %45 = vector.broadcast %cst_24 : f32 to vector<2x128xf32>
      %46 = arith.addf %45, %44 : vector<2x128xf32>
      %47 = arith.divf %45, %46 : vector<2x128xf32>
      %48 = math.tanh %42 : vector<2x128xf32>
      %49 = vector.extract_strided_slice %47 {offsets = [0, 0], sizes = [2, 32], strides = [1, 1]} : vector<2x128xf32> to vector<2x32xf32>
      %50 = vector.extract_strided_slice %47 {offsets = [0, 32], sizes = [2, 32], strides = [1, 1]} : vector<2x128xf32> to vector<2x32xf32>
      %51 = vector.extract_strided_slice %48 {offsets = [0, 64], sizes = [2, 32], strides = [1, 1]} : vector<2x128xf32> to vector<2x32xf32>
      %52 = vector.extract_strided_slice %47 {offsets = [0, 96], sizes = [2, 32], strides = [1, 1]} : vector<2x128xf32> to vector<2x32xf32>
      %53 = arith.mulf %50, %34 : vector<2x32xf32>
      %54 = arith.mulf %49, %51 : vector<2x32xf32>
      %55 = arith.addf %53, %54 : vector<2x32xf32>
      %56 = math.tanh %55 : vector<2x32xf32>
      %57 = arith.mulf %52, %56 : vector<2x32xf32>
      %c0_25 = arith.constant 0 : index
      %c6 = arith.constant 6 : index
      %c0_26 = arith.constant 0 : index
      %c0_27 = arith.constant 0 : index
      %58 = vector.load %arg5[%c0_25, %c6, %c0_26, %c0_27] : memref<1x8x2x32xf32, #tpu.memory_space<vmem>>, vector<1x1x2x32xf32>
      %59 = vector.shape_cast %58 : vector<1x1x2x32xf32> to vector<2x32xf32>
      %60 = vector.shape_cast %57 : vector<2x32xf32> to vector<1x1x2x32xf32>
      tpu.vector_store %arg5[%c0_25, %c6, %c0_26, %c0_27], %60 {strides = array<i32>} : memref<1x8x2x32xf32, #tpu.memory_space<vmem>>, vector<1x1x2x32xf32>,
      %c10 = arith.constant 10 : index
      %c0_28 = arith.constant 0 : index
      %61 = vector.load %arg6[%c10, %c0_28] : memref<16x128xf32, #tpu.memory_space<vmem>>, vector<2x128xf32>
      %cst_29 = arith.constant dense<0.000000e+00> : vector<2x128xf32>
      %62 = tpu.matmul %57, %10, %cst_29 {dimension_numbers = #tpu.dot_dimension_numbers<[1], [0], [0], [1], [0, 0, 1, 1], [], []>} : vector<2x32xf32>, vector<32x128xf32>, vector<2x128xf32> -> vector<2x128xf32>
      %63 = arith.addf %61, %62 : vector<2x128xf32>
      %64 = arith.negf %63 : vector<2x128xf32>
      %65 = math.exp %64 : vector<2x128xf32>
      %cst_30 = arith.constant 1.000000e+00 : f32
      %66 = vector.broadcast %cst_30 : f32 to vector<2x128xf32>
      %67 = arith.addf %66, %65 : vector<2x128xf32>
      %68 = arith.divf %66, %67 : vector<2x128xf32>
      %69 = math.tanh %63 : vector<2x128xf32>
      %70 = vector.extract_strided_slice %68 {offsets = [0, 0], sizes = [2, 32], strides = [1, 1]} : vector<2x128xf32> to vector<2x32xf32>
      %71 = vector.extract_strided_slice %68 {offsets = [0, 32], sizes = [2, 32], strides = [1, 1]} : vector<2x128xf32> to vector<2x32xf32>
      %72 = vector.extract_strided_slice %69 {offsets = [0, 64], sizes = [2, 32], strides = [1, 1]} : vector<2x128xf32> to vector<2x32xf32>
      %73 = vector.extract_strided_slice %68 {offsets = [0, 96], sizes = [2, 32], strides = [1, 1]} : vector<2x128xf32> to vector<2x32xf32>
      %74 = arith.mulf %71, %55 : vector<2x32xf32>
      %75 = arith.mulf %70, %72 : vector<2x32xf32>
      %76 = arith.addf %74, %75 : vector<2x32xf32>
      %77 = math.tanh %76 : vector<2x32xf32>
      %78 = arith.mulf %73, %77 : vector<2x32xf32>
      %c0_31 = arith.constant 0 : index
      %c5 = arith.constant 5 : index
      %c0_32 = arith.constant 0 : index
      %c0_33 = arith.constant 0 : index
      %79 = vector.load %arg5[%c0_31, %c5, %c0_32, %c0_33] : memref<1x8x2x32xf32, #tpu.memory_space<vmem>>, vector<1x1x2x32xf32>
      %80 = vector.shape_cast %79 : vector<1x1x2x32xf32> to vector<2x32xf32>
      %81 = vector.shape_cast %78 : vector<2x32xf32> to vector<1x1x2x32xf32>
      tpu.vector_store %arg5[%c0_31, %c5, %c0_32, %c0_33], %81 {strides = array<i32>} : memref<1x8x2x32xf32, #tpu.memory_space<vmem>>, vector<1x1x2x32xf32>,
      %c8 = arith.constant 8 : index
      %c0_34 = arith.constant 0 : index
      %82 = vector.load %arg6[%c8, %c0_34] : memref<16x128xf32, #tpu.memory_space<vmem>>, vector<2x128xf32>
      %cst_35 = arith.constant dense<0.000000e+00> : vector<2x128xf32>
      %83 = tpu.matmul %78, %10, %cst_35 {dimension_numbers = #tpu.dot_dimension_numbers<[1], [0], [0], [1], [0, 0, 1, 1], [], []>} : vector<2x32xf32>, vector<32x128xf32>, vector<2x128xf32> -> vector<2x128xf32>
      %84 = arith.addf %82, %83 : vector<2x128xf32>
      %85 = arith.negf %84 : vector<2x128xf32>
      %86 = math.exp %85 : vector<2x128xf32>
      %cst_36 = arith.constant 1.000000e+00 : f32
      %87 = vector.broadcast %cst_36 : f32 to vector<2x128xf32>
      %88 = arith.addf %87, %86 : vector<2x128xf32>
      %89 = arith.divf %87, %88 : vector<2x128xf32>
      %90 = math.tanh %84 : vector<2x128xf32>
      %91 = vector.extract_strided_slice %89 {offsets = [0, 0], sizes = [2, 32], strides = [1, 1]} : vector<2x128xf32> to vector<2x32xf32>
      %92 = vector.extract_strided_slice %89 {offsets = [0, 32], sizes = [2, 32], strides = [1, 1]} : vector<2x128xf32> to vector<2x32xf32>
      %93 = vector.extract_strided_slice %90 {offsets = [0, 64], sizes = [2, 32], strides = [1, 1]} : vector<2x128xf32> to vector<2x32xf32>
      %94 = vector.extract_strided_slice %89 {offsets = [0, 96], sizes = [2, 32], strides = [1, 1]} : vector<2x128xf32> to vector<2x32xf32>
      %95 = arith.mulf %92, %76 : vector<2x32xf32>
      %96 = arith.mulf %91, %93 : vector<2x32xf32>
      %97 = arith.addf %95, %96 : vector<2x32xf32>
      %98 = math.tanh %97 : vector<2x32xf32>
      %99 = arith.mulf %94, %98 : vector<2x32xf32>
      %c0_37 = arith.constant 0 : index
      %c4 = arith.constant 4 : index
      %c0_38 = arith.constant 0 : index
      %c0_39 = arith.constant 0 : index
      %100 = vector.load %arg5[%c0_37, %c4, %c0_38, %c0_39] : memref<1x8x2x32xf32, #tpu.memory_space<vmem>>, vector<1x1x2x32xf32>
      %101 = vector.shape_cast %100 : vector<1x1x2x32xf32> to vector<2x32xf32>
      %102 = vector.shape_cast %99 : vector<2x32xf32> to vector<1x1x2x32xf32>
      tpu.vector_store %arg5[%c0_37, %c4, %c0_38, %c0_39], %102 {strides = array<i32>} : memref<1x8x2x32xf32, #tpu.memory_space<vmem>>, vector<1x1x2x32xf32>,
      %c6_40 = arith.constant 6 : index
      %c0_41 = arith.constant 0 : index
      %103 = vector.load %arg6[%c6_40, %c0_41] : memref<16x128xf32, #tpu.memory_space<vmem>>, vector<2x128xf32>
      %cst_42 = arith.constant dense<0.000000e+00> : vector<2x128xf32>
      %104 = tpu.matmul %99, %10, %cst_42 {dimension_numbers = #tpu.dot_dimension_numbers<[1], [0], [0], [1], [0, 0, 1, 1], [], []>} : vector<2x32xf32>, vector<32x128xf32>, vector<2x128xf32> -> vector<2x128xf32>
      %105 = arith.addf %103, %104 : vector<2x128xf32>
      %106 = arith.negf %105 : vector<2x128xf32>
      %107 = math.exp %106 : vector<2x128xf32>
      %cst_43 = arith.constant 1.000000e+00 : f32
      %108 = vector.broadcast %cst_43 : f32 to vector<2x128xf32>
      %109 = arith.addf %108, %107 : vector<2x128xf32>
      %110 = arith.divf %108, %109 : vector<2x128xf32>
      %111 = math.tanh %105 : vector<2x128xf32>
      %112 = vector.extract_strided_slice %110 {offsets = [0, 0], sizes = [2, 32], strides = [1, 1]} : vector<2x128xf32> to vector<2x32xf32>
      %113 = vector.extract_strided_slice %110 {offsets = [0, 32], sizes = [2, 32], strides = [1, 1]} : vector<2x128xf32> to vector<2x32xf32>
      %114 = vector.extract_strided_slice %111 {offsets = [0, 64], sizes = [2, 32], strides = [1, 1]} : vector<2x128xf32> to vector<2x32xf32>
      %115 = vector.extract_strided_slice %110 {offsets = [0, 96], sizes = [2, 32], strides = [1, 1]} : vector<2x128xf32> to vector<2x32xf32>
      %116 = arith.mulf %113, %97 : vector<2x32xf32>
      %117 = arith.mulf %112, %114 : vector<2x32xf32>
      %118 = arith.addf %116, %117 : vector<2x32xf32>
      %119 = math.tanh %118 : vector<2x32xf32>
      %120 = arith.mulf %115, %119 : vector<2x32xf32>
      %c0_44 = arith.constant 0 : index
      %c3 = arith.constant 3 : index
      %c0_45 = arith.constant 0 : index
      %c0_46 = arith.constant 0 : index
      %121 = vector.load %arg5[%c0_44, %c3, %c0_45, %c0_46] : memref<1x8x2x32xf32, #tpu.memory_space<vmem>>, vector<1x1x2x32xf32>
      %122 = vector.shape_cast %121 : vector<1x1x2x32xf32> to vector<2x32xf32>
      %123 = vector.shape_cast %120 : vector<2x32xf32> to vector<1x1x2x32xf32>
      tpu.vector_store %arg5[%c0_44, %c3, %c0_45, %c0_46], %123 {strides = array<i32>} : memref<1x8x2x32xf32, #tpu.memory_space<vmem>>, vector<1x1x2x32xf32>,
      %c4_47 = arith.constant 4 : index
      %c0_48 = arith.constant 0 : index
      %124 = vector.load %arg6[%c4_47, %c0_48] : memref<16x128xf32, #tpu.memory_space<vmem>>, vector<2x128xf32>
      %cst_49 = arith.constant dense<0.000000e+00> : vector<2x128xf32>
      %125 = tpu.matmul %120, %10, %cst_49 {dimension_numbers = #tpu.dot_dimension_numbers<[1], [0], [0], [1], [0, 0, 1, 1], [], []>} : vector<2x32xf32>, vector<32x128xf32>, vector<2x128xf32> -> vector<2x128xf32>
      %126 = arith.addf %124, %125 : vector<2x128xf32>
      %127 = arith.negf %126 : vector<2x128xf32>
      %128 = math.exp %127 : vector<2x128xf32>
      %cst_50 = arith.constant 1.000000e+00 : f32
      %129 = vector.broadcast %cst_50 : f32 to vector<2x128xf32>
      %130 = arith.addf %129, %128 : vector<2x128xf32>
      %131 = arith.divf %129, %130 : vector<2x128xf32>
      %132 = math.tanh %126 : vector<2x128xf32>
      %133 = vector.extract_strided_slice %131 {offsets = [0, 0], sizes = [2, 32], strides = [1, 1]} : vector<2x128xf32> to vector<2x32xf32>
      %134 = vector.extract_strided_slice %131 {offsets = [0, 32], sizes = [2, 32], strides = [1, 1]} : vector<2x128xf32> to vector<2x32xf32>
      %135 = vector.extract_strided_slice %132 {offsets = [0, 64], sizes = [2, 32], strides = [1, 1]} : vector<2x128xf32> to vector<2x32xf32>
      %136 = vector.extract_strided_slice %131 {offsets = [0, 96], sizes = [2, 32], strides = [1, 1]} : vector<2x128xf32> to vector<2x32xf32>
      %137 = arith.mulf %134, %118 : vector<2x32xf32>
      %138 = arith.mulf %133, %135 : vector<2x32xf32>
      %139 = arith.addf %137, %138 : vector<2x32xf32>
      %140 = math.tanh %139 : vector<2x32xf32>
      %141 = arith.mulf %136, %140 : vector<2x32xf32>
      %c0_51 = arith.constant 0 : index
      %c2 = arith.constant 2 : index
      %c0_52 = arith.constant 0 : index
      %c0_53 = arith.constant 0 : index
      %142 = vector.load %arg5[%c0_51, %c2, %c0_52, %c0_53] : memref<1x8x2x32xf32, #tpu.memory_space<vmem>>, vector<1x1x2x32xf32>
      %143 = vector.shape_cast %142 : vector<1x1x2x32xf32> to vector<2x32xf32>
      %144 = vector.shape_cast %141 : vector<2x32xf32> to vector<1x1x2x32xf32>
      tpu.vector_store %arg5[%c0_51, %c2, %c0_52, %c0_53], %144 {strides = array<i32>} : memref<1x8x2x32xf32, #tpu.memory_space<vmem>>, vector<1x1x2x32xf32>,
      %c2_54 = arith.constant 2 : index
      %c0_55 = arith.constant 0 : index
      %145 = vector.load %arg6[%c2_54, %c0_55] : memref<16x128xf32, #tpu.memory_space<vmem>>, vector<2x128xf32>
      %cst_56 = arith.constant dense<0.000000e+00> : vector<2x128xf32>
      %146 = tpu.matmul %141, %10, %cst_56 {dimension_numbers = #tpu.dot_dimension_numbers<[1], [0], [0], [1], [0, 0, 1, 1], [], []>} : vector<2x32xf32>, vector<32x128xf32>, vector<2x128xf32> -> vector<2x128xf32>
      %147 = arith.addf %145, %146 : vector<2x128xf32>
      %148 = arith.negf %147 : vector<2x128xf32>
      %149 = math.exp %148 : vector<2x128xf32>
      %cst_57 = arith.constant 1.000000e+00 : f32
      %150 = vector.broadcast %cst_57 : f32 to vector<2x128xf32>
      %151 = arith.addf %150, %149 : vector<2x128xf32>
      %152 = arith.divf %150, %151 : vector<2x128xf32>
      %153 = math.tanh %147 : vector<2x128xf32>
      %154 = vector.extract_strided_slice %152 {offsets = [0, 0], sizes = [2, 32], strides = [1, 1]} : vector<2x128xf32> to vector<2x32xf32>
      %155 = vector.extract_strided_slice %152 {offsets = [0, 32], sizes = [2, 32], strides = [1, 1]} : vector<2x128xf32> to vector<2x32xf32>
      %156 = vector.extract_strided_slice %153 {offsets = [0, 64], sizes = [2, 32], strides = [1, 1]} : vector<2x128xf32> to vector<2x32xf32>
      %157 = vector.extract_strided_slice %152 {offsets = [0, 96], sizes = [2, 32], strides = [1, 1]} : vector<2x128xf32> to vector<2x32xf32>
      %158 = arith.mulf %155, %139 : vector<2x32xf32>
      %159 = arith.mulf %154, %156 : vector<2x32xf32>
      %160 = arith.addf %158, %159 : vector<2x32xf32>
      %161 = math.tanh %160 : vector<2x32xf32>
      %162 = arith.mulf %157, %161 : vector<2x32xf32>
      %c0_58 = arith.constant 0 : index
      %c1 = arith.constant 1 : index
      %c0_59 = arith.constant 0 : index
      %c0_60 = arith.constant 0 : index
      %163 = vector.load %arg5[%c0_58, %c1, %c0_59, %c0_60] : memref<1x8x2x32xf32, #tpu.memory_space<vmem>>, vector<1x1x2x32xf32>
      %164 = vector.shape_cast %163 : vector<1x1x2x32xf32> to vector<2x32xf32>
      %165 = vector.shape_cast %162 : vector<2x32xf32> to vector<1x1x2x32xf32>
      tpu.vector_store %arg5[%c0_58, %c1, %c0_59, %c0_60], %165 {strides = array<i32>} : memref<1x8x2x32xf32, #tpu.memory_space<vmem>>, vector<1x1x2x32xf32>,
      %c0_61 = arith.constant 0 : index
      %c0_62 = arith.constant 0 : index
      %166 = vector.load %arg6[%c0_61, %c0_62] : memref<16x128xf32, #tpu.memory_space<vmem>>, vector<2x128xf32>
      %cst_63 = arith.constant dense<0.000000e+00> : vector<2x128xf32>
      %167 = tpu.matmul %162, %10, %cst_63 {dimension_numbers = #tpu.dot_dimension_numbers<[1], [0], [0], [1], [0, 0, 1, 1], [], []>} : vector<2x32xf32>, vector<32x128xf32>, vector<2x128xf32> -> vector<2x128xf32>
      %168 = arith.addf %166, %167 : vector<2x128xf32>
      %169 = arith.negf %168 : vector<2x128xf32>
      %170 = math.exp %169 : vector<2x128xf32>
      %cst_64 = arith.constant 1.000000e+00 : f32
      %171 = vector.broadcast %cst_64 : f32 to vector<2x128xf32>
      %172 = arith.addf %171, %170 : vector<2x128xf32>
      %173 = arith.divf %171, %172 : vector<2x128xf32>
      %174 = math.tanh %168 : vector<2x128xf32>
      %175 = vector.extract_strided_slice %173 {offsets = [0, 0], sizes = [2, 32], strides = [1, 1]} : vector<2x128xf32> to vector<2x32xf32>
      %176 = vector.extract_strided_slice %173 {offsets = [0, 32], sizes = [2, 32], strides = [1, 1]} : vector<2x128xf32> to vector<2x32xf32>
      %177 = vector.extract_strided_slice %174 {offsets = [0, 64], sizes = [2, 32], strides = [1, 1]} : vector<2x128xf32> to vector<2x32xf32>
      %178 = vector.extract_strided_slice %173 {offsets = [0, 96], sizes = [2, 32], strides = [1, 1]} : vector<2x128xf32> to vector<2x32xf32>
      %179 = arith.mulf %176, %160 : vector<2x32xf32>
      %180 = arith.mulf %175, %177 : vector<2x32xf32>
      %181 = arith.addf %179, %180 : vector<2x32xf32>
      %182 = math.tanh %181 : vector<2x32xf32>
      %183 = arith.mulf %178, %182 : vector<2x32xf32>
      %c0_65 = arith.constant 0 : index
      %c0_66 = arith.constant 0 : index
      %c0_67 = arith.constant 0 : index
      %c0_68 = arith.constant 0 : index
      %184 = vector.load %arg5[%c0_65, %c0_66, %c0_67, %c0_68] : memref<1x8x2x32xf32, #tpu.memory_space<vmem>>, vector<1x1x2x32xf32>
      %185 = vector.shape_cast %184 : vector<1x1x2x32xf32> to vector<2x32xf32>
      %186 = vector.shape_cast %183 : vector<2x32xf32> to vector<1x1x2x32xf32>
      tpu.vector_store %arg5[%c0_65, %c0_66, %c0_67, %c0_68], %186 {strides = array<i32>} : memref<1x8x2x32xf32, #tpu.memory_space<vmem>>, vector<1x1x2x32xf32>,
    } else {
    }
    return
  }
  func.func @transform_0(%arg0: i32) -> (i32, i32) {
    %c0_i32 = arith.constant 0 : i32
    %c0_i32_0 = arith.constant 0 : i32
    %c0_i32_1 = arith.constant 0 : i32
    return %c0_i32, %c0_i32_0 : i32, i32
  }
  func.func @transform_1(%arg0: i32) -> (i32, i32, i32) {
    %c0_i32 = arith.constant 0 : i32
    %c0_i32_0 = arith.constant 0 : i32
    %c0_i32_1 = arith.constant 0 : i32
    return %arg0, %c0_i32, %c0_i32_0 : i32, i32, i32
  }
  func.func @transform_2(%arg0: i32) -> (i32, i32, i32) {
    %c0_i32 = arith.constant 0 : i32
    %c0_i32_0 = arith.constant 0 : i32
    %c0_i32_1 = arith.constant 0 : i32
    return %arg0, %c0_i32, %c0_i32_0 : i32, i32, i32
  }
  func.func @transform_3(%arg0: i32) -> (i32, i32, i32) {
    %c0_i32 = arith.constant 0 : i32
    %c0_i32_0 = arith.constant 0 : i32
    %c0_i32_1 = arith.constant 0 : i32
    return %arg0, %c0_i32, %c0_i32_0 : i32, i32, i32
  }
  func.func @transform_4(%arg0: i32) -> (i32, i32, i32, i32) {
    %c0_i32 = arith.constant 0 : i32
    %c0_i32_0 = arith.constant 0 : i32
    %c0_i32_1 = arith.constant 0 : i32
    %c0_i32_2 = arith.constant 0 : i32
    return %arg0, %c0_i32, %c0_i32_0, %c0_i32_1 : i32, i32, i32, i32
  }
}

module attributes {stable_mosaic.version = 11 : i64} {
  func.func @_linear_kernel(%arg0: memref<16x64xf32, #tpu.memory_space<vmem>>, %arg1: memref<64x128xf32, #tpu.memory_space<vmem>>, %arg2: memref<1x128xf32, #tpu.memory_space<vmem>>, %arg3: memref<16x128xf32, #tpu.memory_space<vmem>>) attributes {dimension_semantics = [], scalar_prefetch = 0 : i64, scratch_operands = 0 : i64, tpu.core_type = #tpu.core_type<tc>} {
    %c0 = arith.constant 0 : index
    %c0_0 = arith.constant 0 : index
    %0 = vector.load %arg0[%c0, %c0_0] : memref<16x64xf32, #tpu.memory_space<vmem>>, vector<16x64xf32>
    %c0_1 = arith.constant 0 : index
    %c0_2 = arith.constant 0 : index
    %1 = vector.load %arg1[%c0_1, %c0_2] : memref<64x128xf32, #tpu.memory_space<vmem>>, vector<64x128xf32>
    %cst = arith.constant dense<0.000000e+00> : vector<16x128xf32>
    %2 = tpu.matmul %0, %1, %cst {dimension_numbers = #tpu.dot_dimension_numbers<[1], [0], [0], [1], [0, 0, 1, 1], [], []>} : vector<16x64xf32>, vector<64x128xf32>, vector<16x128xf32> -> vector<16x128xf32>
    %c0_3 = arith.constant 0 : index
    %c0_4 = arith.constant 0 : index
    %3 = vector.load %arg2[%c0_3, %c0_4] : memref<1x128xf32, #tpu.memory_space<vmem>>, vector<1x128xf32>
    %4 = vector.broadcast %3 : vector<1x128xf32> to vector<16x128xf32>
    %5 = arith.addf %2, %4 : vector<16x128xf32>
    %c0_5 = arith.constant 0 : index
    %c0_6 = arith.constant 0 : index
    %6 = vector.load %arg3[%c0_5, %c0_6] : memref<16x128xf32, #tpu.memory_space<vmem>>, vector<16x128xf32>
    tpu.vector_store %arg3[%c0_5, %c0_6], %5 {strides = array<i32>} : memref<16x128xf32, #tpu.memory_space<vmem>>, vector<16x128xf32>,
    return
  }
}

module attributes {stable_mosaic.version = 11 : i64} {
  func.func @_bilstm_layer_kernel(%arg0: i32, %arg1: memref<16x32xf32, #tpu.memory_space<vmem>>, %arg2: memref<1x32x128xf32, #tpu.memory_space<vmem>>, %arg3: memref<1x32x128xf32, #tpu.memory_space<vmem>>, %arg4: memref<1x1x128xf32, #tpu.memory_space<vmem>>, %arg5: memref<1x8x2x32xf32, #tpu.memory_space<vmem>>, %arg6: memref<16x128xf32, #tpu.memory_space<vmem>>) attributes {dimension_semantics = [#tpu.dimension_semantics<parallel>], iteration_bounds = array<i64: 2>, scalar_prefetch = 0 : i64, scratch_operands = 1 : i64, tpu.core_type = #tpu.core_type<tc>, window_params = [{pipeline_mode = #tpu.pipeline_mode<synchronous>, transform_indices = @transform_0, window_bounds = array<i64: 16, 32>}, {transform_indices = @transform_1, window_bounds = array<i64: 1, 32, 128>}, {transform_indices = @transform_2, window_bounds = array<i64: 1, 32, 128>}, {transform_indices = @transform_3, window_bounds = array<i64: 1, 1, 128>}, {transform_indices = @transform_4, window_bounds = array<i64: 1, 8, 2, 32>}]} {
    %c0 = arith.constant 0 : index
    %c0_0 = arith.constant 0 : index
    %0 = vector.load %arg1[%c0, %c0_0] : memref<16x32xf32, #tpu.memory_space<vmem>>, vector<16x32xf32>
    %c0_1 = arith.constant 0 : index
    %c0_2 = arith.constant 0 : index
    %c0_3 = arith.constant 0 : index
    %1 = vector.load %arg2[%c0_1, %c0_2, %c0_3] : memref<1x32x128xf32, #tpu.memory_space<vmem>>, vector<1x32x128xf32>
    %2 = vector.shape_cast %1 : vector<1x32x128xf32> to vector<32x128xf32>
    %cst = arith.constant dense<0.000000e+00> : vector<16x128xf32>
    %3 = tpu.matmul %0, %2, %cst {dimension_numbers = #tpu.dot_dimension_numbers<[1], [0], [0], [1], [0, 0, 1, 1], [], []>} : vector<16x32xf32>, vector<32x128xf32>, vector<16x128xf32> -> vector<16x128xf32>
    %c0_4 = arith.constant 0 : index
    %c0_5 = arith.constant 0 : index
    %c0_6 = arith.constant 0 : index
    %4 = vector.load %arg4[%c0_4, %c0_5, %c0_6] : memref<1x1x128xf32, #tpu.memory_space<vmem>>, vector<1x1x128xf32>
    %5 = vector.shape_cast %4 : vector<1x1x128xf32> to vector<1x128xf32>
    %6 = vector.broadcast %5 : vector<1x128xf32> to vector<16x128xf32>
    %7 = arith.addf %3, %6 : vector<16x128xf32>
    %c0_7 = arith.constant 0 : index
    %c0_8 = arith.constant 0 : index
    %8 = vector.load %arg6[%c0_7, %c0_8] : memref<16x128xf32, #tpu.memory_space<vmem>>, vector<16x128xf32>
    tpu.vector_store %arg6[%c0_7, %c0_8], %7 {strides = array<i32>} : memref<16x128xf32, #tpu.memory_space<vmem>>, vector<16x128xf32>,
    %c0_9 = arith.constant 0 : index
    %c0_10 = arith.constant 0 : index
    %c0_11 = arith.constant 0 : index
    %9 = vector.load %arg3[%c0_9, %c0_10, %c0_11] : memref<1x32x128xf32, #tpu.memory_space<vmem>>, vector<1x32x128xf32>
    %10 = vector.shape_cast %9 : vector<1x32x128xf32> to vector<32x128xf32>
    %c0_i32 = arith.constant 0 : i32
    %11 = arith.cmpi eq, %arg0, %c0_i32 : i32
    %12 = arith.extui %11 : i1 to i32
    %c0_i32_12 = arith.constant 0 : i32
    %13 = arith.cmpi ne, %12, %c0_i32_12 : i32
    scf.if %13 {
      %cst_14 = arith.constant 0.000000e+00 : f32
      %17 = vector.broadcast %cst_14 : f32 to vector<2x32xf32>
      %cst_15 = arith.constant 0.000000e+00 : f32
      %18 = vector.broadcast %cst_15 : f32 to vector<2x32xf32>
      %c0_16 = arith.constant 0 : index
      %c0_17 = arith.constant 0 : index
      %19 = vector.load %arg6[%c0_16, %c0_17] : memref<16x128xf32, #tpu.memory_space<vmem>>, vector<2x128xf32>
      %cst_18 = arith.constant dense<0.000000e+00> : vector<2x128xf32>
      %20 = tpu.matmul %17, %10, %cst_18 {dimension_numbers = #tpu.dot_dimension_numbers<[1], [0], [0], [1], [0, 0, 1, 1], [], []>} : vector<2x32xf32>, vector<32x128xf32>, vector<2x128xf32> -> vector<2x128xf32>
      %21 = arith.addf %19, %20 : vector<2x128xf32>
      %22 = arith.negf %21 : vector<2x128xf32>
      %23 = math.exp %22 : vector<2x128xf32>
      %cst_19 = arith.constant 1.000000e+00 : f32
      %24 = vector.broadcast %cst_19 : f32 to vector<2x128xf32>
      %25 = arith.addf %24, %23 : vector<2x128xf32>
      %26 = arith.divf %24, %25 : vector<2x128xf32>
      %27 = math.tanh %21 : vector<2x128xf32>
      %28 = vector.extract_strided_slice %26 {offsets = [0, 0], sizes = [2, 32], strides = [1, 1]} : vector<2x128xf32> to vector<2x32xf32>
      %29 = vector.extract_strided_slice %26 {offsets = [0, 32], sizes = [2, 32], strides = [1, 1]} : vector<2x128xf32> to vector<2x32xf32>
      %30 = vector.extract_strided_slice %27 {offsets = [0, 64], sizes = [2, 32], strides = [1, 1]} : vector<2x128xf32> to vector<2x32xf32>
      %31 = vector.extract_strided_slice %26 {offsets = [0, 96], sizes = [2, 32], strides = [1, 1]} : vector<2x128xf32> to vector<2x32xf32>
      %32 = arith.mulf %29, %18 : vector<2x32xf32>
      %33 = arith.mulf %28, %30 : vector<2x32xf32>
      %34 = arith.addf %32, %33 : vector<2x32xf32>
      %35 = math.tanh %34 : vector<2x32xf32>
      %36 = arith.mulf %31, %35 : vector<2x32xf32>
      %c0_20 = arith.constant 0 : index
      %c0_21 = arith.constant 0 : index
      %c0_22 = arith.constant 0 : index
      %c0_23 = arith.constant 0 : index
      %37 = vector.load %arg5[%c0_20, %c0_21, %c0_22, %c0_23] : memref<1x8x2x32xf32, #tpu.memory_space<vmem>>, vector<1x1x2x32xf32>
      %38 = vector.shape_cast %37 : vector<1x1x2x32xf32> to vector<2x32xf32>
      %39 = vector.shape_cast %36 : vector<2x32xf32> to vector<1x1x2x32xf32>
      tpu.vector_store %arg5[%c0_20, %c0_21, %c0_22, %c0_23], %39 {strides = array<i32>} : memref<1x8x2x32xf32, #tpu.memory_space<vmem>>, vector<1x1x2x32xf32>,
      %c2 = arith.constant 2 : index
      %c0_24 = arith.constant 0 : index
      %40 = vector.load %arg6[%c2, %c0_24] : memref<16x128xf32, #tpu.memory_space<vmem>>, vector<2x128xf32>
      %cst_25 = arith.constant dense<0.000000e+00> : vector<2x128xf32>
      %41 = tpu.matmul %36, %10, %cst_25 {dimension_numbers = #tpu.dot_dimension_numbers<[1], [0], [0], [1], [0, 0, 1, 1], [], []>} : vector<2x32xf32>, vector<32x128xf32>, vector<2x128xf32> -> vector<2x128xf32>
      %42 = arith.addf %40, %41 : vector<2x128xf32>
      %43 = arith.negf %42 : vector<2x128xf32>
      %44 = math.exp %43 : vector<2x128xf32>
      %cst_26 = arith.constant 1.000000e+00 : f32
      %45 = vector.broadcast %cst_26 : f32 to vector<2x128xf32>
      %46 = arith.addf %45, %44 : vector<2x128xf32>
      %47 = arith.divf %45, %46 : vector<2x128xf32>
      %48 = math.tanh %42 : vector<2x128xf32>
      %49 = vector.extract_strided_slice %47 {offsets = [0, 0], sizes = [2, 32], strides = [1, 1]} : vector<2x128xf32> to vector<2x32xf32>
      %50 = vector.extract_strided_slice %47 {offsets = [0, 32], sizes = [2, 32], strides = [1, 1]} : vector<2x128xf32> to vector<2x32xf32>
      %51 = vector.extract_strided_slice %48 {offsets = [0, 64], sizes = [2, 32], strides = [1, 1]} : vector<2x128xf32> to vector<2x32xf32>
      %52 = vector.extract_strided_slice %47 {offsets = [0, 96], sizes = [2, 32], strides = [1, 1]} : vector<2x128xf32> to vector<2x32xf32>
      %53 = arith.mulf %50, %34 : vector<2x32xf32>
      %54 = arith.mulf %49, %51 : vector<2x32xf32>
      %55 = arith.addf %53, %54 : vector<2x32xf32>
      %56 = math.tanh %55 : vector<2x32xf32>
      %57 = arith.mulf %52, %56 : vector<2x32xf32>
      %c0_27 = arith.constant 0 : index
      %c1 = arith.constant 1 : index
      %c0_28 = arith.constant 0 : index
      %c0_29 = arith.constant 0 : index
      %58 = vector.load %arg5[%c0_27, %c1, %c0_28, %c0_29] : memref<1x8x2x32xf32, #tpu.memory_space<vmem>>, vector<1x1x2x32xf32>
      %59 = vector.shape_cast %58 : vector<1x1x2x32xf32> to vector<2x32xf32>
      %60 = vector.shape_cast %57 : vector<2x32xf32> to vector<1x1x2x32xf32>
      tpu.vector_store %arg5[%c0_27, %c1, %c0_28, %c0_29], %60 {strides = array<i32>} : memref<1x8x2x32xf32, #tpu.memory_space<vmem>>, vector<1x1x2x32xf32>,
      %c4 = arith.constant 4 : index
      %c0_30 = arith.constant 0 : index
      %61 = vector.load %arg6[%c4, %c0_30] : memref<16x128xf32, #tpu.memory_space<vmem>>, vector<2x128xf32>
      %cst_31 = arith.constant dense<0.000000e+00> : vector<2x128xf32>
      %62 = tpu.matmul %57, %10, %cst_31 {dimension_numbers = #tpu.dot_dimension_numbers<[1], [0], [0], [1], [0, 0, 1, 1], [], []>} : vector<2x32xf32>, vector<32x128xf32>, vector<2x128xf32> -> vector<2x128xf32>
      %63 = arith.addf %61, %62 : vector<2x128xf32>
      %64 = arith.negf %63 : vector<2x128xf32>
      %65 = math.exp %64 : vector<2x128xf32>
      %cst_32 = arith.constant 1.000000e+00 : f32
      %66 = vector.broadcast %cst_32 : f32 to vector<2x128xf32>
      %67 = arith.addf %66, %65 : vector<2x128xf32>
      %68 = arith.divf %66, %67 : vector<2x128xf32>
      %69 = math.tanh %63 : vector<2x128xf32>
      %70 = vector.extract_strided_slice %68 {offsets = [0, 0], sizes = [2, 32], strides = [1, 1]} : vector<2x128xf32> to vector<2x32xf32>
      %71 = vector.extract_strided_slice %68 {offsets = [0, 32], sizes = [2, 32], strides = [1, 1]} : vector<2x128xf32> to vector<2x32xf32>
      %72 = vector.extract_strided_slice %69 {offsets = [0, 64], sizes = [2, 32], strides = [1, 1]} : vector<2x128xf32> to vector<2x32xf32>
      %73 = vector.extract_strided_slice %68 {offsets = [0, 96], sizes = [2, 32], strides = [1, 1]} : vector<2x128xf32> to vector<2x32xf32>
      %74 = arith.mulf %71, %55 : vector<2x32xf32>
      %75 = arith.mulf %70, %72 : vector<2x32xf32>
      %76 = arith.addf %74, %75 : vector<2x32xf32>
      %77 = math.tanh %76 : vector<2x32xf32>
      %78 = arith.mulf %73, %77 : vector<2x32xf32>
      %c0_33 = arith.constant 0 : index
      %c2_34 = arith.constant 2 : index
      %c0_35 = arith.constant 0 : index
      %c0_36 = arith.constant 0 : index
      %79 = vector.load %arg5[%c0_33, %c2_34, %c0_35, %c0_36] : memref<1x8x2x32xf32, #tpu.memory_space<vmem>>, vector<1x1x2x32xf32>
      %80 = vector.shape_cast %79 : vector<1x1x2x32xf32> to vector<2x32xf32>
      %81 = vector.shape_cast %78 : vector<2x32xf32> to vector<1x1x2x32xf32>
      tpu.vector_store %arg5[%c0_33, %c2_34, %c0_35, %c0_36], %81 {strides = array<i32>} : memref<1x8x2x32xf32, #tpu.memory_space<vmem>>, vector<1x1x2x32xf32>,
      %c6 = arith.constant 6 : index
      %c0_37 = arith.constant 0 : index
      %82 = vector.load %arg6[%c6, %c0_37] : memref<16x128xf32, #tpu.memory_space<vmem>>, vector<2x128xf32>
      %cst_38 = arith.constant dense<0.000000e+00> : vector<2x128xf32>
      %83 = tpu.matmul %78, %10, %cst_38 {dimension_numbers = #tpu.dot_dimension_numbers<[1], [0], [0], [1], [0, 0, 1, 1], [], []>} : vector<2x32xf32>, vector<32x128xf32>, vector<2x128xf32> -> vector<2x128xf32>
      %84 = arith.addf %82, %83 : vector<2x128xf32>
      %85 = arith.negf %84 : vector<2x128xf32>
      %86 = math.exp %85 : vector<2x128xf32>
      %cst_39 = arith.constant 1.000000e+00 : f32
      %87 = vector.broadcast %cst_39 : f32 to vector<2x128xf32>
      %88 = arith.addf %87, %86 : vector<2x128xf32>
      %89 = arith.divf %87, %88 : vector<2x128xf32>
      %90 = math.tanh %84 : vector<2x128xf32>
      %91 = vector.extract_strided_slice %89 {offsets = [0, 0], sizes = [2, 32], strides = [1, 1]} : vector<2x128xf32> to vector<2x32xf32>
      %92 = vector.extract_strided_slice %89 {offsets = [0, 32], sizes = [2, 32], strides = [1, 1]} : vector<2x128xf32> to vector<2x32xf32>
      %93 = vector.extract_strided_slice %90 {offsets = [0, 64], sizes = [2, 32], strides = [1, 1]} : vector<2x128xf32> to vector<2x32xf32>
      %94 = vector.extract_strided_slice %89 {offsets = [0, 96], sizes = [2, 32], strides = [1, 1]} : vector<2x128xf32> to vector<2x32xf32>
      %95 = arith.mulf %92, %76 : vector<2x32xf32>
      %96 = arith.mulf %91, %93 : vector<2x32xf32>
      %97 = arith.addf %95, %96 : vector<2x32xf32>
      %98 = math.tanh %97 : vector<2x32xf32>
      %99 = arith.mulf %94, %98 : vector<2x32xf32>
      %c0_40 = arith.constant 0 : index
      %c3 = arith.constant 3 : index
      %c0_41 = arith.constant 0 : index
      %c0_42 = arith.constant 0 : index
      %100 = vector.load %arg5[%c0_40, %c3, %c0_41, %c0_42] : memref<1x8x2x32xf32, #tpu.memory_space<vmem>>, vector<1x1x2x32xf32>
      %101 = vector.shape_cast %100 : vector<1x1x2x32xf32> to vector<2x32xf32>
      %102 = vector.shape_cast %99 : vector<2x32xf32> to vector<1x1x2x32xf32>
      tpu.vector_store %arg5[%c0_40, %c3, %c0_41, %c0_42], %102 {strides = array<i32>} : memref<1x8x2x32xf32, #tpu.memory_space<vmem>>, vector<1x1x2x32xf32>,
      %c8 = arith.constant 8 : index
      %c0_43 = arith.constant 0 : index
      %103 = vector.load %arg6[%c8, %c0_43] : memref<16x128xf32, #tpu.memory_space<vmem>>, vector<2x128xf32>
      %cst_44 = arith.constant dense<0.000000e+00> : vector<2x128xf32>
      %104 = tpu.matmul %99, %10, %cst_44 {dimension_numbers = #tpu.dot_dimension_numbers<[1], [0], [0], [1], [0, 0, 1, 1], [], []>} : vector<2x32xf32>, vector<32x128xf32>, vector<2x128xf32> -> vector<2x128xf32>
      %105 = arith.addf %103, %104 : vector<2x128xf32>
      %106 = arith.negf %105 : vector<2x128xf32>
      %107 = math.exp %106 : vector<2x128xf32>
      %cst_45 = arith.constant 1.000000e+00 : f32
      %108 = vector.broadcast %cst_45 : f32 to vector<2x128xf32>
      %109 = arith.addf %108, %107 : vector<2x128xf32>
      %110 = arith.divf %108, %109 : vector<2x128xf32>
      %111 = math.tanh %105 : vector<2x128xf32>
      %112 = vector.extract_strided_slice %110 {offsets = [0, 0], sizes = [2, 32], strides = [1, 1]} : vector<2x128xf32> to vector<2x32xf32>
      %113 = vector.extract_strided_slice %110 {offsets = [0, 32], sizes = [2, 32], strides = [1, 1]} : vector<2x128xf32> to vector<2x32xf32>
      %114 = vector.extract_strided_slice %111 {offsets = [0, 64], sizes = [2, 32], strides = [1, 1]} : vector<2x128xf32> to vector<2x32xf32>
      %115 = vector.extract_strided_slice %110 {offsets = [0, 96], sizes = [2, 32], strides = [1, 1]} : vector<2x128xf32> to vector<2x32xf32>
      %116 = arith.mulf %113, %97 : vector<2x32xf32>
      %117 = arith.mulf %112, %114 : vector<2x32xf32>
      %118 = arith.addf %116, %117 : vector<2x32xf32>
      %119 = math.tanh %118 : vector<2x32xf32>
      %120 = arith.mulf %115, %119 : vector<2x32xf32>
      %c0_46 = arith.constant 0 : index
      %c4_47 = arith.constant 4 : index
      %c0_48 = arith.constant 0 : index
      %c0_49 = arith.constant 0 : index
      %121 = vector.load %arg5[%c0_46, %c4_47, %c0_48, %c0_49] : memref<1x8x2x32xf32, #tpu.memory_space<vmem>>, vector<1x1x2x32xf32>
      %122 = vector.shape_cast %121 : vector<1x1x2x32xf32> to vector<2x32xf32>
      %123 = vector.shape_cast %120 : vector<2x32xf32> to vector<1x1x2x32xf32>
      tpu.vector_store %arg5[%c0_46, %c4_47, %c0_48, %c0_49], %123 {strides = array<i32>} : memref<1x8x2x32xf32, #tpu.memory_space<vmem>>, vector<1x1x2x32xf32>,
      %c10 = arith.constant 10 : index
      %c0_50 = arith.constant 0 : index
      %124 = vector.load %arg6[%c10, %c0_50] : memref<16x128xf32, #tpu.memory_space<vmem>>, vector<2x128xf32>
      %cst_51 = arith.constant dense<0.000000e+00> : vector<2x128xf32>
      %125 = tpu.matmul %120, %10, %cst_51 {dimension_numbers = #tpu.dot_dimension_numbers<[1], [0], [0], [1], [0, 0, 1, 1], [], []>} : vector<2x32xf32>, vector<32x128xf32>, vector<2x128xf32> -> vector<2x128xf32>
      %126 = arith.addf %124, %125 : vector<2x128xf32>
      %127 = arith.negf %126 : vector<2x128xf32>
      %128 = math.exp %127 : vector<2x128xf32>
      %cst_52 = arith.constant 1.000000e+00 : f32
      %129 = vector.broadcast %cst_52 : f32 to vector<2x128xf32>
      %130 = arith.addf %129, %128 : vector<2x128xf32>
      %131 = arith.divf %129, %130 : vector<2x128xf32>
      %132 = math.tanh %126 : vector<2x128xf32>
      %133 = vector.extract_strided_slice %131 {offsets = [0, 0], sizes = [2, 32], strides = [1, 1]} : vector<2x128xf32> to vector<2x32xf32>
      %134 = vector.extract_strided_slice %131 {offsets = [0, 32], sizes = [2, 32], strides = [1, 1]} : vector<2x128xf32> to vector<2x32xf32>
      %135 = vector.extract_strided_slice %132 {offsets = [0, 64], sizes = [2, 32], strides = [1, 1]} : vector<2x128xf32> to vector<2x32xf32>
      %136 = vector.extract_strided_slice %131 {offsets = [0, 96], sizes = [2, 32], strides = [1, 1]} : vector<2x128xf32> to vector<2x32xf32>
      %137 = arith.mulf %134, %118 : vector<2x32xf32>
      %138 = arith.mulf %133, %135 : vector<2x32xf32>
      %139 = arith.addf %137, %138 : vector<2x32xf32>
      %140 = math.tanh %139 : vector<2x32xf32>
      %141 = arith.mulf %136, %140 : vector<2x32xf32>
      %c0_53 = arith.constant 0 : index
      %c5 = arith.constant 5 : index
      %c0_54 = arith.constant 0 : index
      %c0_55 = arith.constant 0 : index
      %142 = vector.load %arg5[%c0_53, %c5, %c0_54, %c0_55] : memref<1x8x2x32xf32, #tpu.memory_space<vmem>>, vector<1x1x2x32xf32>
      %143 = vector.shape_cast %142 : vector<1x1x2x32xf32> to vector<2x32xf32>
      %144 = vector.shape_cast %141 : vector<2x32xf32> to vector<1x1x2x32xf32>
      tpu.vector_store %arg5[%c0_53, %c5, %c0_54, %c0_55], %144 {strides = array<i32>} : memref<1x8x2x32xf32, #tpu.memory_space<vmem>>, vector<1x1x2x32xf32>,
      %c12 = arith.constant 12 : index
      %c0_56 = arith.constant 0 : index
      %145 = vector.load %arg6[%c12, %c0_56] : memref<16x128xf32, #tpu.memory_space<vmem>>, vector<2x128xf32>
      %cst_57 = arith.constant dense<0.000000e+00> : vector<2x128xf32>
      %146 = tpu.matmul %141, %10, %cst_57 {dimension_numbers = #tpu.dot_dimension_numbers<[1], [0], [0], [1], [0, 0, 1, 1], [], []>} : vector<2x32xf32>, vector<32x128xf32>, vector<2x128xf32> -> vector<2x128xf32>
      %147 = arith.addf %145, %146 : vector<2x128xf32>
      %148 = arith.negf %147 : vector<2x128xf32>
      %149 = math.exp %148 : vector<2x128xf32>
      %cst_58 = arith.constant 1.000000e+00 : f32
      %150 = vector.broadcast %cst_58 : f32 to vector<2x128xf32>
      %151 = arith.addf %150, %149 : vector<2x128xf32>
      %152 = arith.divf %150, %151 : vector<2x128xf32>
      %153 = math.tanh %147 : vector<2x128xf32>
      %154 = vector.extract_strided_slice %152 {offsets = [0, 0], sizes = [2, 32], strides = [1, 1]} : vector<2x128xf32> to vector<2x32xf32>
      %155 = vector.extract_strided_slice %152 {offsets = [0, 32], sizes = [2, 32], strides = [1, 1]} : vector<2x128xf32> to vector<2x32xf32>
      %156 = vector.extract_strided_slice %153 {offsets = [0, 64], sizes = [2, 32], strides = [1, 1]} : vector<2x128xf32> to vector<2x32xf32>
      %157 = vector.extract_strided_slice %152 {offsets = [0, 96], sizes = [2, 32], strides = [1, 1]} : vector<2x128xf32> to vector<2x32xf32>
      %158 = arith.mulf %155, %139 : vector<2x32xf32>
      %159 = arith.mulf %154, %156 : vector<2x32xf32>
      %160 = arith.addf %158, %159 : vector<2x32xf32>
      %161 = math.tanh %160 : vector<2x32xf32>
      %162 = arith.mulf %157, %161 : vector<2x32xf32>
      %c0_59 = arith.constant 0 : index
      %c6_60 = arith.constant 6 : index
      %c0_61 = arith.constant 0 : index
      %c0_62 = arith.constant 0 : index
      %163 = vector.load %arg5[%c0_59, %c6_60, %c0_61, %c0_62] : memref<1x8x2x32xf32, #tpu.memory_space<vmem>>, vector<1x1x2x32xf32>
      %164 = vector.shape_cast %163 : vector<1x1x2x32xf32> to vector<2x32xf32>
      %165 = vector.shape_cast %162 : vector<2x32xf32> to vector<1x1x2x32xf32>
      tpu.vector_store %arg5[%c0_59, %c6_60, %c0_61, %c0_62], %165 {strides = array<i32>} : memref<1x8x2x32xf32, #tpu.memory_space<vmem>>, vector<1x1x2x32xf32>,
      %c14 = arith.constant 14 : index
      %c0_63 = arith.constant 0 : index
      %166 = vector.load %arg6[%c14, %c0_63] : memref<16x128xf32, #tpu.memory_space<vmem>>, vector<2x128xf32>
      %cst_64 = arith.constant dense<0.000000e+00> : vector<2x128xf32>
      %167 = tpu.matmul %162, %10, %cst_64 {dimension_numbers = #tpu.dot_dimension_numbers<[1], [0], [0], [1], [0, 0, 1, 1], [], []>} : vector<2x32xf32>, vector<32x128xf32>, vector<2x128xf32> -> vector<2x128xf32>
      %168 = arith.addf %166, %167 : vector<2x128xf32>
      %169 = arith.negf %168 : vector<2x128xf32>
      %170 = math.exp %169 : vector<2x128xf32>
      %cst_65 = arith.constant 1.000000e+00 : f32
      %171 = vector.broadcast %cst_65 : f32 to vector<2x128xf32>
      %172 = arith.addf %171, %170 : vector<2x128xf32>
      %173 = arith.divf %171, %172 : vector<2x128xf32>
      %174 = math.tanh %168 : vector<2x128xf32>
      %175 = vector.extract_strided_slice %173 {offsets = [0, 0], sizes = [2, 32], strides = [1, 1]} : vector<2x128xf32> to vector<2x32xf32>
      %176 = vector.extract_strided_slice %173 {offsets = [0, 32], sizes = [2, 32], strides = [1, 1]} : vector<2x128xf32> to vector<2x32xf32>
      %177 = vector.extract_strided_slice %174 {offsets = [0, 64], sizes = [2, 32], strides = [1, 1]} : vector<2x128xf32> to vector<2x32xf32>
      %178 = vector.extract_strided_slice %173 {offsets = [0, 96], sizes = [2, 32], strides = [1, 1]} : vector<2x128xf32> to vector<2x32xf32>
      %179 = arith.mulf %176, %160 : vector<2x32xf32>
      %180 = arith.mulf %175, %177 : vector<2x32xf32>
      %181 = arith.addf %179, %180 : vector<2x32xf32>
      %182 = math.tanh %181 : vector<2x32xf32>
      %183 = arith.mulf %178, %182 : vector<2x32xf32>
      %c0_66 = arith.constant 0 : index
      %c7 = arith.constant 7 : index
      %c0_67 = arith.constant 0 : index
      %c0_68 = arith.constant 0 : index
      %184 = vector.load %arg5[%c0_66, %c7, %c0_67, %c0_68] : memref<1x8x2x32xf32, #tpu.memory_space<vmem>>, vector<1x1x2x32xf32>
      %185 = vector.shape_cast %184 : vector<1x1x2x32xf32> to vector<2x32xf32>
      %186 = vector.shape_cast %183 : vector<2x32xf32> to vector<1x1x2x32xf32>
      tpu.vector_store %arg5[%c0_66, %c7, %c0_67, %c0_68], %186 {strides = array<i32>} : memref<1x8x2x32xf32, #tpu.memory_space<vmem>>, vector<1x1x2x32xf32>,
    } else {
    }
    %c1_i32 = arith.constant 1 : i32
    %14 = arith.cmpi eq, %arg0, %c1_i32 : i32
    %15 = arith.extui %14 : i1 to i32
    %c0_i32_13 = arith.constant 0 : i32
    %16 = arith.cmpi ne, %15, %c0_i32_13 : i32
    scf.if %16 {
      %cst_14 = arith.constant 0.000000e+00 : f32
      %17 = vector.broadcast %cst_14 : f32 to vector<2x32xf32>
      %cst_15 = arith.constant 0.000000e+00 : f32
      %18 = vector.broadcast %cst_15 : f32 to vector<2x32xf32>
      %c14 = arith.constant 14 : index
      %c0_16 = arith.constant 0 : index
      %19 = vector.load %arg6[%c14, %c0_16] : memref<16x128xf32, #tpu.memory_space<vmem>>, vector<2x128xf32>
      %cst_17 = arith.constant dense<0.000000e+00> : vector<2x128xf32>
      %20 = tpu.matmul %17, %10, %cst_17 {dimension_numbers = #tpu.dot_dimension_numbers<[1], [0], [0], [1], [0, 0, 1, 1], [], []>} : vector<2x32xf32>, vector<32x128xf32>, vector<2x128xf32> -> vector<2x128xf32>
      %21 = arith.addf %19, %20 : vector<2x128xf32>
      %22 = arith.negf %21 : vector<2x128xf32>
      %23 = math.exp %22 : vector<2x128xf32>
      %cst_18 = arith.constant 1.000000e+00 : f32
      %24 = vector.broadcast %cst_18 : f32 to vector<2x128xf32>
      %25 = arith.addf %24, %23 : vector<2x128xf32>
      %26 = arith.divf %24, %25 : vector<2x128xf32>
      %27 = math.tanh %21 : vector<2x128xf32>
      %28 = vector.extract_strided_slice %26 {offsets = [0, 0], sizes = [2, 32], strides = [1, 1]} : vector<2x128xf32> to vector<2x32xf32>
      %29 = vector.extract_strided_slice %26 {offsets = [0, 32], sizes = [2, 32], strides = [1, 1]} : vector<2x128xf32> to vector<2x32xf32>
      %30 = vector.extract_strided_slice %27 {offsets = [0, 64], sizes = [2, 32], strides = [1, 1]} : vector<2x128xf32> to vector<2x32xf32>
      %31 = vector.extract_strided_slice %26 {offsets = [0, 96], sizes = [2, 32], strides = [1, 1]} : vector<2x128xf32> to vector<2x32xf32>
      %32 = arith.mulf %29, %18 : vector<2x32xf32>
      %33 = arith.mulf %28, %30 : vector<2x32xf32>
      %34 = arith.addf %32, %33 : vector<2x32xf32>
      %35 = math.tanh %34 : vector<2x32xf32>
      %36 = arith.mulf %31, %35 : vector<2x32xf32>
      %c0_19 = arith.constant 0 : index
      %c7 = arith.constant 7 : index
      %c0_20 = arith.constant 0 : index
      %c0_21 = arith.constant 0 : index
      %37 = vector.load %arg5[%c0_19, %c7, %c0_20, %c0_21] : memref<1x8x2x32xf32, #tpu.memory_space<vmem>>, vector<1x1x2x32xf32>
      %38 = vector.shape_cast %37 : vector<1x1x2x32xf32> to vector<2x32xf32>
      %39 = vector.shape_cast %36 : vector<2x32xf32> to vector<1x1x2x32xf32>
      tpu.vector_store %arg5[%c0_19, %c7, %c0_20, %c0_21], %39 {strides = array<i32>} : memref<1x8x2x32xf32, #tpu.memory_space<vmem>>, vector<1x1x2x32xf32>,
      %c12 = arith.constant 12 : index
      %c0_22 = arith.constant 0 : index
      %40 = vector.load %arg6[%c12, %c0_22] : memref<16x128xf32, #tpu.memory_space<vmem>>, vector<2x128xf32>
      %cst_23 = arith.constant dense<0.000000e+00> : vector<2x128xf32>
      %41 = tpu.matmul %36, %10, %cst_23 {dimension_numbers = #tpu.dot_dimension_numbers<[1], [0], [0], [1], [0, 0, 1, 1], [], []>} : vector<2x32xf32>, vector<32x128xf32>, vector<2x128xf32> -> vector<2x128xf32>
      %42 = arith.addf %40, %41 : vector<2x128xf32>
      %43 = arith.negf %42 : vector<2x128xf32>
      %44 = math.exp %43 : vector<2x128xf32>
      %cst_24 = arith.constant 1.000000e+00 : f32
      %45 = vector.broadcast %cst_24 : f32 to vector<2x128xf32>
      %46 = arith.addf %45, %44 : vector<2x128xf32>
      %47 = arith.divf %45, %46 : vector<2x128xf32>
      %48 = math.tanh %42 : vector<2x128xf32>
      %49 = vector.extract_strided_slice %47 {offsets = [0, 0], sizes = [2, 32], strides = [1, 1]} : vector<2x128xf32> to vector<2x32xf32>
      %50 = vector.extract_strided_slice %47 {offsets = [0, 32], sizes = [2, 32], strides = [1, 1]} : vector<2x128xf32> to vector<2x32xf32>
      %51 = vector.extract_strided_slice %48 {offsets = [0, 64], sizes = [2, 32], strides = [1, 1]} : vector<2x128xf32> to vector<2x32xf32>
      %52 = vector.extract_strided_slice %47 {offsets = [0, 96], sizes = [2, 32], strides = [1, 1]} : vector<2x128xf32> to vector<2x32xf32>
      %53 = arith.mulf %50, %34 : vector<2x32xf32>
      %54 = arith.mulf %49, %51 : vector<2x32xf32>
      %55 = arith.addf %53, %54 : vector<2x32xf32>
      %56 = math.tanh %55 : vector<2x32xf32>
      %57 = arith.mulf %52, %56 : vector<2x32xf32>
      %c0_25 = arith.constant 0 : index
      %c6 = arith.constant 6 : index
      %c0_26 = arith.constant 0 : index
      %c0_27 = arith.constant 0 : index
      %58 = vector.load %arg5[%c0_25, %c6, %c0_26, %c0_27] : memref<1x8x2x32xf32, #tpu.memory_space<vmem>>, vector<1x1x2x32xf32>
      %59 = vector.shape_cast %58 : vector<1x1x2x32xf32> to vector<2x32xf32>
      %60 = vector.shape_cast %57 : vector<2x32xf32> to vector<1x1x2x32xf32>
      tpu.vector_store %arg5[%c0_25, %c6, %c0_26, %c0_27], %60 {strides = array<i32>} : memref<1x8x2x32xf32, #tpu.memory_space<vmem>>, vector<1x1x2x32xf32>,
      %c10 = arith.constant 10 : index
      %c0_28 = arith.constant 0 : index
      %61 = vector.load %arg6[%c10, %c0_28] : memref<16x128xf32, #tpu.memory_space<vmem>>, vector<2x128xf32>
      %cst_29 = arith.constant dense<0.000000e+00> : vector<2x128xf32>
      %62 = tpu.matmul %57, %10, %cst_29 {dimension_numbers = #tpu.dot_dimension_numbers<[1], [0], [0], [1], [0, 0, 1, 1], [], []>} : vector<2x32xf32>, vector<32x128xf32>, vector<2x128xf32> -> vector<2x128xf32>
      %63 = arith.addf %61, %62 : vector<2x128xf32>
      %64 = arith.negf %63 : vector<2x128xf32>
      %65 = math.exp %64 : vector<2x128xf32>
      %cst_30 = arith.constant 1.000000e+00 : f32
      %66 = vector.broadcast %cst_30 : f32 to vector<2x128xf32>
      %67 = arith.addf %66, %65 : vector<2x128xf32>
      %68 = arith.divf %66, %67 : vector<2x128xf32>
      %69 = math.tanh %63 : vector<2x128xf32>
      %70 = vector.extract_strided_slice %68 {offsets = [0, 0], sizes = [2, 32], strides = [1, 1]} : vector<2x128xf32> to vector<2x32xf32>
      %71 = vector.extract_strided_slice %68 {offsets = [0, 32], sizes = [2, 32], strides = [1, 1]} : vector<2x128xf32> to vector<2x32xf32>
      %72 = vector.extract_strided_slice %69 {offsets = [0, 64], sizes = [2, 32], strides = [1, 1]} : vector<2x128xf32> to vector<2x32xf32>
      %73 = vector.extract_strided_slice %68 {offsets = [0, 96], sizes = [2, 32], strides = [1, 1]} : vector<2x128xf32> to vector<2x32xf32>
      %74 = arith.mulf %71, %55 : vector<2x32xf32>
      %75 = arith.mulf %70, %72 : vector<2x32xf32>
      %76 = arith.addf %74, %75 : vector<2x32xf32>
      %77 = math.tanh %76 : vector<2x32xf32>
      %78 = arith.mulf %73, %77 : vector<2x32xf32>
      %c0_31 = arith.constant 0 : index
      %c5 = arith.constant 5 : index
      %c0_32 = arith.constant 0 : index
      %c0_33 = arith.constant 0 : index
      %79 = vector.load %arg5[%c0_31, %c5, %c0_32, %c0_33] : memref<1x8x2x32xf32, #tpu.memory_space<vmem>>, vector<1x1x2x32xf32>
      %80 = vector.shape_cast %79 : vector<1x1x2x32xf32> to vector<2x32xf32>
      %81 = vector.shape_cast %78 : vector<2x32xf32> to vector<1x1x2x32xf32>
      tpu.vector_store %arg5[%c0_31, %c5, %c0_32, %c0_33], %81 {strides = array<i32>} : memref<1x8x2x32xf32, #tpu.memory_space<vmem>>, vector<1x1x2x32xf32>,
      %c8 = arith.constant 8 : index
      %c0_34 = arith.constant 0 : index
      %82 = vector.load %arg6[%c8, %c0_34] : memref<16x128xf32, #tpu.memory_space<vmem>>, vector<2x128xf32>
      %cst_35 = arith.constant dense<0.000000e+00> : vector<2x128xf32>
      %83 = tpu.matmul %78, %10, %cst_35 {dimension_numbers = #tpu.dot_dimension_numbers<[1], [0], [0], [1], [0, 0, 1, 1], [], []>} : vector<2x32xf32>, vector<32x128xf32>, vector<2x128xf32> -> vector<2x128xf32>
      %84 = arith.addf %82, %83 : vector<2x128xf32>
      %85 = arith.negf %84 : vector<2x128xf32>
      %86 = math.exp %85 : vector<2x128xf32>
      %cst_36 = arith.constant 1.000000e+00 : f32
      %87 = vector.broadcast %cst_36 : f32 to vector<2x128xf32>
      %88 = arith.addf %87, %86 : vector<2x128xf32>
      %89 = arith.divf %87, %88 : vector<2x128xf32>
      %90 = math.tanh %84 : vector<2x128xf32>
      %91 = vector.extract_strided_slice %89 {offsets = [0, 0], sizes = [2, 32], strides = [1, 1]} : vector<2x128xf32> to vector<2x32xf32>
      %92 = vector.extract_strided_slice %89 {offsets = [0, 32], sizes = [2, 32], strides = [1, 1]} : vector<2x128xf32> to vector<2x32xf32>
      %93 = vector.extract_strided_slice %90 {offsets = [0, 64], sizes = [2, 32], strides = [1, 1]} : vector<2x128xf32> to vector<2x32xf32>
      %94 = vector.extract_strided_slice %89 {offsets = [0, 96], sizes = [2, 32], strides = [1, 1]} : vector<2x128xf32> to vector<2x32xf32>
      %95 = arith.mulf %92, %76 : vector<2x32xf32>
      %96 = arith.mulf %91, %93 : vector<2x32xf32>
      %97 = arith.addf %95, %96 : vector<2x32xf32>
      %98 = math.tanh %97 : vector<2x32xf32>
      %99 = arith.mulf %94, %98 : vector<2x32xf32>
      %c0_37 = arith.constant 0 : index
      %c4 = arith.constant 4 : index
      %c0_38 = arith.constant 0 : index
      %c0_39 = arith.constant 0 : index
      %100 = vector.load %arg5[%c0_37, %c4, %c0_38, %c0_39] : memref<1x8x2x32xf32, #tpu.memory_space<vmem>>, vector<1x1x2x32xf32>
      %101 = vector.shape_cast %100 : vector<1x1x2x32xf32> to vector<2x32xf32>
      %102 = vector.shape_cast %99 : vector<2x32xf32> to vector<1x1x2x32xf32>
      tpu.vector_store %arg5[%c0_37, %c4, %c0_38, %c0_39], %102 {strides = array<i32>} : memref<1x8x2x32xf32, #tpu.memory_space<vmem>>, vector<1x1x2x32xf32>,
      %c6_40 = arith.constant 6 : index
      %c0_41 = arith.constant 0 : index
      %103 = vector.load %arg6[%c6_40, %c0_41] : memref<16x128xf32, #tpu.memory_space<vmem>>, vector<2x128xf32>
      %cst_42 = arith.constant dense<0.000000e+00> : vector<2x128xf32>
      %104 = tpu.matmul %99, %10, %cst_42 {dimension_numbers = #tpu.dot_dimension_numbers<[1], [0], [0], [1], [0, 0, 1, 1], [], []>} : vector<2x32xf32>, vector<32x128xf32>, vector<2x128xf32> -> vector<2x128xf32>
      %105 = arith.addf %103, %104 : vector<2x128xf32>
      %106 = arith.negf %105 : vector<2x128xf32>
      %107 = math.exp %106 : vector<2x128xf32>
      %cst_43 = arith.constant 1.000000e+00 : f32
      %108 = vector.broadcast %cst_43 : f32 to vector<2x128xf32>
      %109 = arith.addf %108, %107 : vector<2x128xf32>
      %110 = arith.divf %108, %109 : vector<2x128xf32>
      %111 = math.tanh %105 : vector<2x128xf32>
      %112 = vector.extract_strided_slice %110 {offsets = [0, 0], sizes = [2, 32], strides = [1, 1]} : vector<2x128xf32> to vector<2x32xf32>
      %113 = vector.extract_strided_slice %110 {offsets = [0, 32], sizes = [2, 32], strides = [1, 1]} : vector<2x128xf32> to vector<2x32xf32>
      %114 = vector.extract_strided_slice %111 {offsets = [0, 64], sizes = [2, 32], strides = [1, 1]} : vector<2x128xf32> to vector<2x32xf32>
      %115 = vector.extract_strided_slice %110 {offsets = [0, 96], sizes = [2, 32], strides = [1, 1]} : vector<2x128xf32> to vector<2x32xf32>
      %116 = arith.mulf %113, %97 : vector<2x32xf32>
      %117 = arith.mulf %112, %114 : vector<2x32xf32>
      %118 = arith.addf %116, %117 : vector<2x32xf32>
      %119 = math.tanh %118 : vector<2x32xf32>
      %120 = arith.mulf %115, %119 : vector<2x32xf32>
      %c0_44 = arith.constant 0 : index
      %c3 = arith.constant 3 : index
      %c0_45 = arith.constant 0 : index
      %c0_46 = arith.constant 0 : index
      %121 = vector.load %arg5[%c0_44, %c3, %c0_45, %c0_46] : memref<1x8x2x32xf32, #tpu.memory_space<vmem>>, vector<1x1x2x32xf32>
      %122 = vector.shape_cast %121 : vector<1x1x2x32xf32> to vector<2x32xf32>
      %123 = vector.shape_cast %120 : vector<2x32xf32> to vector<1x1x2x32xf32>
      tpu.vector_store %arg5[%c0_44, %c3, %c0_45, %c0_46], %123 {strides = array<i32>} : memref<1x8x2x32xf32, #tpu.memory_space<vmem>>, vector<1x1x2x32xf32>,
      %c4_47 = arith.constant 4 : index
      %c0_48 = arith.constant 0 : index
      %124 = vector.load %arg6[%c4_47, %c0_48] : memref<16x128xf32, #tpu.memory_space<vmem>>, vector<2x128xf32>
      %cst_49 = arith.constant dense<0.000000e+00> : vector<2x128xf32>
      %125 = tpu.matmul %120, %10, %cst_49 {dimension_numbers = #tpu.dot_dimension_numbers<[1], [0], [0], [1], [0, 0, 1, 1], [], []>} : vector<2x32xf32>, vector<32x128xf32>, vector<2x128xf32> -> vector<2x128xf32>
      %126 = arith.addf %124, %125 : vector<2x128xf32>
      %127 = arith.negf %126 : vector<2x128xf32>
      %128 = math.exp %127 : vector<2x128xf32>
      %cst_50 = arith.constant 1.000000e+00 : f32
      %129 = vector.broadcast %cst_50 : f32 to vector<2x128xf32>
      %130 = arith.addf %129, %128 : vector<2x128xf32>
      %131 = arith.divf %129, %130 : vector<2x128xf32>
      %132 = math.tanh %126 : vector<2x128xf32>
      %133 = vector.extract_strided_slice %131 {offsets = [0, 0], sizes = [2, 32], strides = [1, 1]} : vector<2x128xf32> to vector<2x32xf32>
      %134 = vector.extract_strided_slice %131 {offsets = [0, 32], sizes = [2, 32], strides = [1, 1]} : vector<2x128xf32> to vector<2x32xf32>
      %135 = vector.extract_strided_slice %132 {offsets = [0, 64], sizes = [2, 32], strides = [1, 1]} : vector<2x128xf32> to vector<2x32xf32>
      %136 = vector.extract_strided_slice %131 {offsets = [0, 96], sizes = [2, 32], strides = [1, 1]} : vector<2x128xf32> to vector<2x32xf32>
      %137 = arith.mulf %134, %118 : vector<2x32xf32>
      %138 = arith.mulf %133, %135 : vector<2x32xf32>
      %139 = arith.addf %137, %138 : vector<2x32xf32>
      %140 = math.tanh %139 : vector<2x32xf32>
      %141 = arith.mulf %136, %140 : vector<2x32xf32>
      %c0_51 = arith.constant 0 : index
      %c2 = arith.constant 2 : index
      %c0_52 = arith.constant 0 : index
      %c0_53 = arith.constant 0 : index
      %142 = vector.load %arg5[%c0_51, %c2, %c0_52, %c0_53] : memref<1x8x2x32xf32, #tpu.memory_space<vmem>>, vector<1x1x2x32xf32>
      %143 = vector.shape_cast %142 : vector<1x1x2x32xf32> to vector<2x32xf32>
      %144 = vector.shape_cast %141 : vector<2x32xf32> to vector<1x1x2x32xf32>
      tpu.vector_store %arg5[%c0_51, %c2, %c0_52, %c0_53], %144 {strides = array<i32>} : memref<1x8x2x32xf32, #tpu.memory_space<vmem>>, vector<1x1x2x32xf32>,
      %c2_54 = arith.constant 2 : index
      %c0_55 = arith.constant 0 : index
      %145 = vector.load %arg6[%c2_54, %c0_55] : memref<16x128xf32, #tpu.memory_space<vmem>>, vector<2x128xf32>
      %cst_56 = arith.constant dense<0.000000e+00> : vector<2x128xf32>
      %146 = tpu.matmul %141, %10, %cst_56 {dimension_numbers = #tpu.dot_dimension_numbers<[1], [0], [0], [1], [0, 0, 1, 1], [], []>} : vector<2x32xf32>, vector<32x128xf32>, vector<2x128xf32> -> vector<2x128xf32>
      %147 = arith.addf %145, %146 : vector<2x128xf32>
      %148 = arith.negf %147 : vector<2x128xf32>
      %149 = math.exp %148 : vector<2x128xf32>
      %cst_57 = arith.constant 1.000000e+00 : f32
      %150 = vector.broadcast %cst_57 : f32 to vector<2x128xf32>
      %151 = arith.addf %150, %149 : vector<2x128xf32>
      %152 = arith.divf %150, %151 : vector<2x128xf32>
      %153 = math.tanh %147 : vector<2x128xf32>
      %154 = vector.extract_strided_slice %152 {offsets = [0, 0], sizes = [2, 32], strides = [1, 1]} : vector<2x128xf32> to vector<2x32xf32>
      %155 = vector.extract_strided_slice %152 {offsets = [0, 32], sizes = [2, 32], strides = [1, 1]} : vector<2x128xf32> to vector<2x32xf32>
      %156 = vector.extract_strided_slice %153 {offsets = [0, 64], sizes = [2, 32], strides = [1, 1]} : vector<2x128xf32> to vector<2x32xf32>
      %157 = vector.extract_strided_slice %152 {offsets = [0, 96], sizes = [2, 32], strides = [1, 1]} : vector<2x128xf32> to vector<2x32xf32>
      %158 = arith.mulf %155, %139 : vector<2x32xf32>
      %159 = arith.mulf %154, %156 : vector<2x32xf32>
      %160 = arith.addf %158, %159 : vector<2x32xf32>
      %161 = math.tanh %160 : vector<2x32xf32>
      %162 = arith.mulf %157, %161 : vector<2x32xf32>
      %c0_58 = arith.constant 0 : index
      %c1 = arith.constant 1 : index
      %c0_59 = arith.constant 0 : index
      %c0_60 = arith.constant 0 : index
      %163 = vector.load %arg5[%c0_58, %c1, %c0_59, %c0_60] : memref<1x8x2x32xf32, #tpu.memory_space<vmem>>, vector<1x1x2x32xf32>
      %164 = vector.shape_cast %163 : vector<1x1x2x32xf32> to vector<2x32xf32>
      %165 = vector.shape_cast %162 : vector<2x32xf32> to vector<1x1x2x32xf32>
      tpu.vector_store %arg5[%c0_58, %c1, %c0_59, %c0_60], %165 {strides = array<i32>} : memref<1x8x2x32xf32, #tpu.memory_space<vmem>>, vector<1x1x2x32xf32>,
      %c0_61 = arith.constant 0 : index
      %c0_62 = arith.constant 0 : index
      %166 = vector.load %arg6[%c0_61, %c0_62] : memref<16x128xf32, #tpu.memory_space<vmem>>, vector<2x128xf32>
      %cst_63 = arith.constant dense<0.000000e+00> : vector<2x128xf32>
      %167 = tpu.matmul %162, %10, %cst_63 {dimension_numbers = #tpu.dot_dimension_numbers<[1], [0], [0], [1], [0, 0, 1, 1], [], []>} : vector<2x32xf32>, vector<32x128xf32>, vector<2x128xf32> -> vector<2x128xf32>
      %168 = arith.addf %166, %167 : vector<2x128xf32>
      %169 = arith.negf %168 : vector<2x128xf32>
      %170 = math.exp %169 : vector<2x128xf32>
      %cst_64 = arith.constant 1.000000e+00 : f32
      %171 = vector.broadcast %cst_64 : f32 to vector<2x128xf32>
      %172 = arith.addf %171, %170 : vector<2x128xf32>
      %173 = arith.divf %171, %172 : vector<2x128xf32>
      %174 = math.tanh %168 : vector<2x128xf32>
      %175 = vector.extract_strided_slice %173 {offsets = [0, 0], sizes = [2, 32], strides = [1, 1]} : vector<2x128xf32> to vector<2x32xf32>
      %176 = vector.extract_strided_slice %173 {offsets = [0, 32], sizes = [2, 32], strides = [1, 1]} : vector<2x128xf32> to vector<2x32xf32>
      %177 = vector.extract_strided_slice %174 {offsets = [0, 64], sizes = [2, 32], strides = [1, 1]} : vector<2x128xf32> to vector<2x32xf32>
      %178 = vector.extract_strided_slice %173 {offsets = [0, 96], sizes = [2, 32], strides = [1, 1]} : vector<2x128xf32> to vector<2x32xf32>
      %179 = arith.mulf %176, %160 : vector<2x32xf32>
      %180 = arith.mulf %175, %177 : vector<2x32xf32>
      %181 = arith.addf %179, %180 : vector<2x32xf32>
      %182 = math.tanh %181 : vector<2x32xf32>
      %183 = arith.mulf %178, %182 : vector<2x32xf32>
      %c0_65 = arith.constant 0 : index
      %c0_66 = arith.constant 0 : index
      %c0_67 = arith.constant 0 : index
      %c0_68 = arith.constant 0 : index
      %184 = vector.load %arg5[%c0_65, %c0_66, %c0_67, %c0_68] : memref<1x8x2x32xf32, #tpu.memory_space<vmem>>, vector<1x1x2x32xf32>
      %185 = vector.shape_cast %184 : vector<1x1x2x32xf32> to vector<2x32xf32>
      %186 = vector.shape_cast %183 : vector<2x32xf32> to vector<1x1x2x32xf32>
      tpu.vector_store %arg5[%c0_65, %c0_66, %c0_67, %c0_68], %186 {strides = array<i32>} : memref<1x8x2x32xf32, #tpu.memory_space<vmem>>, vector<1x1x2x32xf32>,
    } else {
    }
    return
  }
  func.func @transform_0(%arg0: i32) -> (i32, i32) {
    %c0_i32 = arith.constant 0 : i32
    %c0_i32_0 = arith.constant 0 : i32
    %c0_i32_1 = arith.constant 0 : i32
    return %c0_i32, %c0_i32_0 : i32, i32
  }
  func.func @transform_1(%arg0: i32) -> (i32, i32, i32) {
    %c0_i32 = arith.constant 0 : i32
    %c0_i32_0 = arith.constant 0 : i32
    %c0_i32_1 = arith.constant 0 : i32
    return %arg0, %c0_i32, %c0_i32_0 : i32, i32, i32
  }
  func.func @transform_2(%arg0: i32) -> (i32, i32, i32) {
    %c0_i32 = arith.constant 0 : i32
    %c0_i32_0 = arith.constant 0 : i32
    %c0_i32_1 = arith.constant 0 : i32
    return %arg0, %c0_i32, %c0_i32_0 : i32, i32, i32
  }
  func.func @transform_3(%arg0: i32) -> (i32, i32, i32) {
    %c0_i32 = arith.constant 0 : i32
    %c0_i32_0 = arith.constant 0 : i32
    %c0_i32_1 = arith.constant 0 : i32
    return %arg0, %c0_i32, %c0_i32_0 : i32, i32, i32
  }
  func.func @transform_4(%arg0: i32) -> (i32, i32, i32, i32) {
    %c0_i32 = arith.constant 0 : i32
    %c0_i32_0 = arith.constant 0 : i32
    %c0_i32_1 = arith.constant 0 : i32
    %c0_i32_2 = arith.constant 0 : i32
    return %arg0, %c0_i32, %c0_i32_0, %c0_i32_1 : i32, i32, i32, i32
  }
}

</mosaic_0001>

<llo_original>
// kernel: poem_generator_forward.5
$region0: #{poem_generator_forward.5}
  #allocation0 [shape = 'u32[]', space=smem, size = 0x4, offset = 0x4, fixed_abs, tag = 'smem constant byte address 0x4 - core index']
  #allocation1 [shape = 'u32[144,128]{1,0:T(1,128)}', space=vmem, size = 0x12000, scoped, tag = 'internal scratch']
  %s0 = inlined_call_operand.vmem [shape: f32[16,64], index: 0, kind: input, shape index: {}]
  %s1 = inlined_call_operand.vmem [shape: f32[64,128], index: 1, kind: input, shape index: {}]
  %s2 = inlined_call_operand.vmem [shape: f32[1,128], index: 2, kind: input, shape index: {}]
  %s3 = inlined_call_operand.hbm [shape: f32[16,128], index: 3, kind: output, shape index: {}]
  %s4 = sld [smem:[#allocation0]]
  $region22: #{poem_generator_forward.5} parent=0
    _
  %s6 = ssub.s32 1, %s4
  %s7 = scalar_select 0, %s6, %s4
  $region1: #{poem_generator_forward.5} parent=0
    #allocation2 [shape = 'u8[8192]{0}', space=vmem, size = 0x2000, scoped, tag = 'output window, operand 0, single buffered']
    #allocation3 [shape = 's32[1]{0}', space=sflag, size = 0x4, scoped, tag = 'scoped memory for poem_generator_forward.5']
    %8 = vsyncpa [#allocation3], 0
    // Predicated region
    $region2: #{poem_generator_forward.5} parent=1 // pred_check
      _
    $region3: #{poem_generator_forward.5} parent=1 // pred_check_branch
      %10 = sbr.rel (0) target = $region5
    $region4: #{poem_generator_forward.5} parent=1 // pred_region
      _
    $region5: #{poem_generator_forward.5} parent=1 // pred_fallthru
      _
    // Predicated region
    $region6: #{poem_generator_forward.5} parent=1 // pred_check
      _
    $region7: #{poem_generator_forward.5} parent=1 // pred_check_branch
      %12 = sbr.rel (0) target = $region9
    $region8: #{poem_generator_forward.5} parent=1 // pred_region
      _
    $region9: #{poem_generator_forward.5} parent=1 // pred_fallthru
      _
    // Predicated region
    $region10: #{poem_generator_forward.5} parent=1 // pred_check
      _
    $region11: #{poem_generator_forward.5} parent=1 // pred_check_branch
      %14 = sbr.rel (0) target = $region13
    $region12: #{poem_generator_forward.5} parent=1 // pred_region
      _
    $region13: #{poem_generator_forward.5} parent=1 // pred_fallthru
      _
    %v15 = vld [vmem:[%s0] sm:$0xff]
    %v16 = vld [vmem:[%s0 + $0x8] sm:$0xff]
    %v17 = vld [vmem:[%s1] sm:$0xff]
    %v18 = vld [vmem:[%s1 + $0x8] sm:$0xff]
    %v19 = vld [vmem:[%s1 + $0x10] sm:$0xff]
    %v20 = vld [vmem:[%s1 + $0x18] sm:$0xff]
    %v21 = vld [vmem:[%s1 + $0x20] sm:$0xff]
    %v22 = vld [vmem:[%s1 + $0x28] sm:$0xff]
    %v23 = vld [vmem:[%s1 + $0x30] sm:$0xff]
    %v24 = vld [vmem:[%s1 + $0x38] sm:$0xff]
    %v25 = vld [vmem:[%s2] sm:$0x1]
    %v27 = vlaneseq
    %v28 = vshrl.u32 %v27, 7
    %v29 = vsub.s32 0, %v28
    %v30 = vrot.slane %v25, %v29
    %vm32 = vcmask 523264
    %v34 = vsel %vm32, %v15, 0
    %v37 = vsel %vm32, %v16, 0
    %39 = vmatprep.subr.mxu0 0.0
    %40 = vmatpush1.msra.mxu0 0.0
    %41 = vmatprep.subr.mxu0 0.0
    %42 = vmatpush1.msra.mxu0 0.0
    %43 = vmatprep.subr.mxu0 0.0
    %44 = vmatpush1.msra.mxu0 0.0
    %45 = vmatprep.subr.mxu0 0.0
    %46 = vmatpush1.msra.mxu0 0.0
    %47 = vmatprep.subr.mxu0 0.0
    %48 = vmatpush1.msra.mxu0 0.0
    %49 = vmatprep.subr.mxu0 0.0
    %50 = vmatpush1.msra.mxu0 0.0
    %51 = vmatprep.subr.mxu0 0.0
    %52 = vmatpush1.msra.mxu0 0.0
    %53 = vmatprep.subr.mxu0 0.0
    %54 = vmatpush1.msra.mxu0 0.0
    %55 = vmatprep.subr.mxu0 0.0
    %56 = vmatpush1.msra.mxu0 %v24
    %57 = vmatprep.subr.mxu0 0.0
    %58 = vmatpush1.msra.mxu0 %v23
    %59 = vmatprep.subr.mxu0 0.0
    %60 = vmatpush1.msra.mxu0 %v22
    %61 = vmatprep.subr.mxu0 0.0
    %62 = vmatpush1.msra.mxu0 %v21
    %63 = vmatprep.subr.mxu0 0.0
    %64 = vmatpush1.msra.mxu0 %v20
    %65 = vmatprep.subr.mxu0 0.0
    %66 = vmatpush1.msra.mxu0 %v19
    %67 = vmatprep.subr.mxu0 0.0
    %68 = vmatpush1.msra.mxu0 %v18
    %69 = vmatprep.subr.mxu0 0.0
    %70 = vmatpush1.msra.mxu0 %v17
    %71 = vmatprep.subr.mxu0 0.0
    %72 = vmatpush2.msra.mxu0 0.0
    %73 = vmatprep.subr.mxu0 0.0
    %74 = vmatpush2.msra.mxu0 0.0
    %75 = vmatprep.subr.mxu0 0.0
    %76 = vmatpush2.msra.mxu0 0.0
    %77 = vmatprep.subr.mxu0 0.0
    %78 = vmatpush2.msra.mxu0 0.0
    %79 = vmatprep.subr.mxu0 0.0
    %80 = vmatpush2.msra.mxu0 0.0
    %81 = vmatprep.subr.mxu0 0.0
    %82 = vmatpush2.msra.mxu0 0.0
    %83 = vmatprep.subr.mxu0 0.0
    %84 = vmatpush2.msra.mxu0 0.0
    %85 = vmatprep.subr.mxu0 0.0
    %86 = vmatpush2.msra.mxu0 0.0
    %87 = vmatprep.subr.mxu0 0.0
    %88 = vmatpush2.msra.mxu0 0.0
    %89 = vmatprep.subr.mxu0 0.0
    %90 = vmatpush2.msra.mxu0 0.0
    %91 = vmatprep.subr.mxu0 0.0
    %92 = vmatpush2.msra.mxu0 0.0
    %93 = vmatprep.subr.mxu0 0.0
    %94 = vmatpush2.msra.mxu0 0.0
    %95 = vmatprep.subr.mxu0 0.0
    %96 = vmatpush2.msra.mxu0 0.0
    %97 = vmatprep.subr.mxu0 0.0
    %98 = vmatpush2.msra.mxu0 0.0
    %99 = vmatprep.subr.mxu0 0.0
    %100 = vmatpush2.msra.mxu0 0.0
    %101 = vmatprep.subr.mxu0 0.0
    %102 = vmatpush2.msra.mxu0 0.0
    %103 = vmatprep.mubr.f32.mxu0 0.0
    %104 = vmatmul.mubr.f32.gmra.mxu0 %v34
    %v105 = vpop.f32.mrf.mxu0
    %v106 = vadd.f32 %v30, %v105
    %v107 = vpop.f32.mrf.mxu0
    %108 = vmatprep.mubr.f32.mxu0 0.0
    %109 = vmatmul.mubr.f32.gmra.mxu0 %v37
    %v110 = vpop.f32.mrf.mxu0
    %v111 = vadd.f32 %v30, %v110
    %v112 = vpop.f32.mrf.mxu0
    %113 = vdwg.mxu0
    %114 = vst [vmem:[#allocation2] sm:$0xff] %v106
    %115 = vst [vmem:[#allocation2 + $0x8] sm:$0xff] %v111
    // Predicated region
    $region14: #{poem_generator_forward.5} parent=1 // pred_check
      _
    $region15: #{poem_generator_forward.5} parent=1 // pred_check_branch
      %117 = sbr.rel (0) target = $region17
    $region16: #{poem_generator_forward.5} parent=1 // pred_region
      %s119 = ssub.s32 256, 256
      %120 = vsyncadd [#allocation3], %s119
      %s121 = sshll.u32 [#allocation2], 4
      %s122 = int_to_ptr.vmem [resolvable:$true] %s121
      %127 = dma.vmem_to_hbm [thread:$0]  %s122, 256, %s3, [#allocation3], 128, 128, 8
    $region17: #{poem_generator_forward.5} parent=1 // pred_fallthru
      _
    // Predicated region
    $region18: #{poem_generator_forward.5} parent=1 // pred_check
      _
    $region19: #{poem_generator_forward.5} parent=1 // pred_check_branch
      %129 = sbr.rel (0) target = $region21
    $region20: #{poem_generator_forward.5} parent=1 // pred_region
      %130 = dma.done [#allocation3], 256
    $region21: #{poem_generator_forward.5} parent=1 // pred_fallthru
      _
    %131 = vsyncpa [#allocation3], 1

// kernel: poem_generator_forward.4
$region0: #{poem_generator_forward.4}
  #allocation0 [shape = 'u32[]', space=smem, size = 0x4, offset = 0x4, fixed_abs, tag = 'smem constant byte address 0x4 - core index']
  #allocation1 [shape = 'u32[144,128]{1,0:T(1,128)}', space=vmem, size = 0x12000, scoped, tag = 'internal scratch']
  #allocation2 [shape = 'f32[16,128]{1,0:T(8,128)}', space=vmem, size = 0x2000, scoped, tag = 'scratch operand']
  %s0 = inlined_call_operand.vmem [shape: f32[16,64], index: 0, kind: input, shape index: {}]
  %s1 = inlined_call_operand.vmem [shape: f32[2,64,128], index: 1, kind: input, shape index: {}]
  %s2 = inlined_call_operand.vmem [shape: f32[2,32,128], index: 2, kind: input, shape index: {}]
  %s3 = inlined_call_operand.vmem [shape: f32[2,1,128], index: 3, kind: input, shape index: {}]
  %s4 = inlined_call_operand.vmem [shape: f32[2,8,2,32], index: 4, kind: output, shape index: {}]
  %s5 = sld [smem:[#allocation0]]
  $region57: #{poem_generator_forward.4} parent=0
    _
  %s7 = ssub.s32 1, %s5
  %s8 = scalar_select 0, %s7, %s5
  loop: start=0, step=1, limit=4
  $region2: #{poem_generator_forward.4} parent=0 // loop_pre_header
    _
  $region3: #{poem_generator_forward.4} parent=0 // loop_header
    %s10 = sphi 0, %s14
    %p11 = scmp.ge.s32.totalorder %s10, 4
    %s18 = sphi 0, %s18
    %s20 = sphi 0, %s18
    %s21 = sphi 0, %s20
    %s35 = sphi 0, %s21
    %s41 = sphi 0, %s43
    %s44 = sphi 0, %s41
    %s45 = sphi 0, %s44
    %s61 = sphi 0, %s45
    %s67 = sphi 0, %s69
    %s70 = sphi 0, %s67
    %s71 = sphi 0, %s70
    %s87 = sphi 0, %s71
    %s93 = sphi 0, %s95
    %s96 = sphi 0, %s93
    %s97 = sphi 0, %s96
    %s113 = sphi 0, %s97
    %s119 = sphi 0, %s121
    %s122 = sphi 0, %s119
    %s123 = sphi 0, %s122
    %s139 = sphi 0, %s123
  $region4: #{poem_generator_forward.4} parent=0 // loop_header_branch
    %13 = sbr.rel (%p11) target = $region8
  $region5: #{poem_generator_forward.4} parent=0 // loop_body
    %s15 = ssub.s32 %s10, 1
    %s16 = ssub.s32 %s10, 2
    %s17 = sadd.s32 %s10, 1
    %s19 = sadd.s32 %s18, 1
    %p22 = scmp.eq.s32.totalorder %s10, 1
    %p23 = scmp.ne.s32.totalorder %s18, %s20
    %p24 = scmp.eq.s32.totalorder %s10, 0
    %p25 = por %p23, %p24
    %p26 = scmp.ne.s32.totalorder %s18, %s20
    %p27 = scmp.eq.s32.totalorder %s15, 1
    %p28 = por %p26, %p27
    %p29 = scmp.ne.s32.totalorder %s20, %s21
    %p30 = scmp.eq.s32.totalorder %s15, 0
    %p31 = por %p29, %p30
    %p32 = scmp.ne.s32.totalorder %s20, %s21
    %p33 = scmp.eq.s32.totalorder %s16, 1
    %p34 = por %p32, %p33
    %p36 = scmp.ne.s32.totalorder %s21, %s35
    %p37 = scmp.eq.s32.totalorder %s16, 0
    %p38 = por %p36, %p37
    %s39 = ssub.s32 %s10, %s17
    %p40 = scmp.eq.s32.totalorder %s39, 0
    %s42 = sadd.s32 %s41, 1
    %s43 = scalar_select %p40, %s41, %s42
    %p46 = pneg %p40
    %p47 = scmp.eq.s32.totalorder %s10, 1
    %p48 = por %p46, %p47
    %p49 = scmp.ne.s32.totalorder %s41, %s44
    %p50 = scmp.eq.s32.totalorder %s10, 0
    %p51 = por %p49, %p50
    %p52 = scmp.ne.s32.totalorder %s41, %s44
    %p53 = scmp.eq.s32.totalorder %s15, 1
    %p54 = por %p52, %p53
    %p55 = scmp.ne.s32.totalorder %s44, %s45
    %p56 = scmp.eq.s32.totalorder %s15, 0
    %p57 = por %p55, %p56
    %p58 = scmp.ne.s32.totalorder %s44, %s45
    %p59 = scmp.eq.s32.totalorder %s16, 1
    %p60 = por %p58, %p59
    %p62 = scmp.ne.s32.totalorder %s45, %s61
    %p63 = scmp.eq.s32.totalorder %s16, 0
    %p64 = por %p62, %p63
    %s65 = ssub.s32 %s10, %s17
    %p66 = scmp.eq.s32.totalorder %s65, 0
    %s68 = sadd.s32 %s67, 1
    %s69 = scalar_select %p66, %s67, %s68
    %p72 = pneg %p66
    %p73 = scmp.eq.s32.totalorder %s10, 1
    %p74 = por %p72, %p73
    %p75 = scmp.ne.s32.totalorder %s67, %s70
    %p76 = scmp.eq.s32.totalorder %s10, 0
    %p77 = por %p75, %p76
    %p78 = scmp.ne.s32.totalorder %s67, %s70
    %p79 = scmp.eq.s32.totalorder %s15, 1
    %p80 = por %p78, %p79
    %p81 = scmp.ne.s32.totalorder %s70, %s71
    %p82 = scmp.eq.s32.totalorder %s15, 0
    %p83 = por %p81, %p82
    %p84 = scmp.ne.s32.totalorder %s70, %s71
    %p85 = scmp.eq.s32.totalorder %s16, 1
    %p86 = por %p84, %p85
    %p88 = scmp.ne.s32.totalorder %s71, %s87
    %p89 = scmp.eq.s32.totalorder %s16, 0
    %p90 = por %p88, %p89
    %s91 = ssub.s32 %s10, %s17
    %p92 = scmp.eq.s32.totalorder %s91, 0
    %s94 = sadd.s32 %s93, 1
    %s95 = scalar_select %p92, %s93, %s94
    %p98 = pneg %p92
    %p99 = scmp.eq.s32.totalorder %s10, 1
    %p100 = por %p98, %p99
    %p101 = scmp.ne.s32.totalorder %s93, %s96
    %p102 = scmp.eq.s32.totalorder %s10, 0
    %p103 = por %p101, %p102
    %p104 = scmp.ne.s32.totalorder %s93, %s96
    %p105 = scmp.eq.s32.totalorder %s15, 1
    %p106 = por %p104, %p105
    %p107 = scmp.ne.s32.totalorder %s96, %s97
    %p108 = scmp.eq.s32.totalorder %s15, 0
    %p109 = por %p107, %p108
    %p110 = scmp.ne.s32.totalorder %s96, %s97
    %p111 = scmp.eq.s32.totalorder %s16, 1
    %p112 = por %p110, %p111
    %p114 = scmp.ne.s32.totalorder %s97, %s113
    %p115 = scmp.eq.s32.totalorder %s16, 0
    %p116 = por %p114, %p115
    %s117 = ssub.s32 %s10, %s17
    %p118 = scmp.eq.s32.totalorder %s117, 0
    %s120 = sadd.s32 %s119, 1
    %s121 = scalar_select %p118, %s119, %s120
    %p124 = pneg %p118
    %p125 = scmp.eq.s32.totalorder %s10, 1
    %p126 = por %p124, %p125
    %p127 = scmp.ne.s32.totalorder %s119, %s122
    %p128 = scmp.eq.s32.totalorder %s10, 0
    %p129 = por %p127, %p128
    %p130 = scmp.ne.s32.totalorder %s119, %s122
    %p131 = scmp.eq.s32.totalorder %s15, 1
    %p132 = por %p130, %p131
    %p133 = scmp.ne.s32.totalorder %s122, %s123
    %p134 = scmp.eq.s32.totalorder %s15, 0
    %p135 = por %p133, %p134
    %p136 = scmp.ne.s32.totalorder %s122, %s123
    %p137 = scmp.eq.s32.totalorder %s16, 1
    %p138 = por %p136, %p137
    %p140 = scmp.ne.s32.totalorder %s123, %s139
    %p141 = scmp.eq.s32.totalorder %s16, 0
    %p142 = por %p140, %p141
    %p143 = scmp.le.s32.totalorder 1, %s10
    %p144 = scmp.lt.s32.totalorder %s10, 3
    %p145 = pnand %p143, %p144
    %p146 = pneg %p145
    // Predicated region
    $region9: #{poem_generator_forward.4} parent=5 // pred_check
      _
    $region10: #{poem_generator_forward.4} parent=5 // pred_check_branch
      %148 = sbr.rel (%p145) target = $region12
    $region11: #{poem_generator_forward.4} parent=5 // pred_region
      %s149 = ssub.s32 %s10, 1
      // Predicated region
      $region13: #{poem_generator_forward.4} parent=11 // pred_check
        %p150 = pneg %p31
      $region14: #{poem_generator_forward.4} parent=11 // pred_check_branch
        %152 = sbr.rel (%p150) target = $region16
      $region15: #{poem_generator_forward.4} parent=11 // pred_region
        _
      $region16: #{poem_generator_forward.4} parent=11 // pred_fallthru
        _
    $region12: #{poem_generator_forward.4} parent=5 // pred_fallthru
      _
    %p153 = scmp.lt.s32.totalorder %s10, 2
    // Predicated region
    $region17: #{poem_generator_forward.4} parent=5 // pred_check
      %p154 = pneg %p153
    $region18: #{poem_generator_forward.4} parent=5 // pred_check_branch
      %156 = sbr.rel (%p154) target = $region20
    $region19: #{poem_generator_forward.4} parent=5 // pred_region
      // Predicated region
      $region21: #{poem_generator_forward.4} parent=19 // pred_check
        %p157 = pneg %p51
      $region22: #{poem_generator_forward.4} parent=19 // pred_check_branch
        %159 = sbr.rel (%p157) target = $region24
      $region23: #{poem_generator_forward.4} parent=19 // pred_region
        %p160 = scmp.lt.s32.totalorder %s10, 1
        %s161 = scalar_select %p160, %s10, 1
        %s162 = smul.addr %s161, 8
        %s163 = smul.addr %s162, 8
        %s164 = scalar_lea.vmem %s1, %s163
      $region24: #{poem_generator_forward.4} parent=19 // pred_fallthru
        _
      // Predicated region
      $region25: #{poem_generator_forward.4} parent=19 // pred_check
        %p165 = pneg %p77
      $region26: #{poem_generator_forward.4} parent=19 // pred_check_branch
        %167 = sbr.rel (%p165) target = $region28
      $region27: #{poem_generator_forward.4} parent=19 // pred_region
        %p168 = scmp.lt.s32.totalorder %s10, 1
        %s169 = scalar_select %p168, %s10, 1
        %s170 = smul.addr %s169, 4
        %s171 = smul.addr %s170, 8
        %s172 = scalar_lea.vmem %s2, %s171
      $region28: #{poem_generator_forward.4} parent=19 // pred_fallthru
        _
      // Predicated region
      $region29: #{poem_generator_forward.4} parent=19 // pred_check
        %p173 = pneg %p103
      $region30: #{poem_generator_forward.4} parent=19 // pred_check_branch
        %175 = sbr.rel (%p173) target = $region32
      $region31: #{poem_generator_forward.4} parent=19 // pred_region
        %p176 = scmp.lt.s32.totalorder %s10, 1
        %s177 = scalar_select %p176, %s10, 1
        %s178 = scalar_lea.vmem %s3, %s177
      $region32: #{poem_generator_forward.4} parent=19 // pred_fallthru
        _
    $region20: #{poem_generator_forward.4} parent=5 // pred_fallthru
      _
    %p179 = scmp.le.s32.totalorder 1, %s10
    %p180 = scmp.lt.s32.totalorder %s10, 3
    %p181 = pnand %p179, %p180
    %p182 = pneg %p181
    // Predicated region
    $region33: #{poem_generator_forward.4} parent=5 // pred_check
      _
    $region34: #{poem_generator_forward.4} parent=5 // pred_check_branch
      %184 = sbr.rel (%p181) target = $region36
    $region35: #{poem_generator_forward.4} parent=5 // pred_region
      %s185 = ssub.s32 %s10, 1
      %p186 = pneg %p31
      %p187 = pneg %p28
      %p188 = scmp.lt.s32.totalorder %s15, 1
      %s189 = scalar_select %p188, %s15, 1
      %s190 = smul.addr %s189, 8
      %s191 = smul.addr %s190, 8
      %s192 = scalar_lea.vmem %s1, %s191
      %p193 = pneg %p57
      %p194 = pneg %p54
      %p195 = scmp.lt.s32.totalorder %s15, 1
      %s196 = scalar_select %p195, %s15, 1
      %s197 = smul.addr %s196, 4
      %s198 = smul.addr %s197, 8
      %s199 = scalar_lea.vmem %s2, %s198
      %p200 = pneg %p83
      %p201 = pneg %p80
      %p202 = scmp.lt.s32.totalorder %s15, 1
      %s203 = scalar_select %p202, %s15, 1
      %s204 = scalar_lea.vmem %s3, %s203
      %p205 = pneg %p109
      %p206 = pneg %p106
      %p207 = pneg %p135
      %p208 = pneg %p132
      %p209 = scmp.lt.s32.totalorder %s15, 1
      %s210 = scalar_select %p209, %s15, 1
      %s211 = smul.addr %s210, 8
      %s212 = smul.addr %s211, 2
      %s213 = scalar_lea.vmem %s4, %s212
      %p214 = scmp.lt.s32.totalorder %s15, 1
      %s215 = scalar_select %p214, %s15, 1
      %s216 = smul.addr %s215, 8
      %s217 = smul.addr %s216, 8
      %s218 = scalar_lea.vmem %s1, %s217
      %p219 = scmp.lt.s32.totalorder %s15, 1
      %s220 = scalar_select %p219, %s15, 1
      %s221 = smul.addr %s220, 4
      %s222 = smul.addr %s221, 8
      %s223 = scalar_lea.vmem %s2, %s222
      %p224 = scmp.lt.s32.totalorder %s15, 1
      %s225 = scalar_select %p224, %s15, 1
      %s226 = scalar_lea.vmem %s3, %s225
      %p227 = scmp.lt.s32.totalorder %s15, 1
      %s228 = scalar_select %p227, %s15, 1
      %s229 = smul.addr %s228, 8
      %s230 = smul.addr %s229, 2
      %s231 = scalar_lea.vmem %s4, %s230
      %v232 = vld [vmem:[%s0] sm:$0xff]
      %v233 = vld [vmem:[%s0 + $0x8] sm:$0xff]
      %v234 = vld [vmem:[%s218] sm:$0xff]
      %v235 = vld [vmem:[%s218 + $0x8] sm:$0xff]
      %v236 = vld [vmem:[%s218 + $0x10] sm:$0xff]
      %v237 = vld [vmem:[%s218 + $0x18] sm:$0xff]
      %v238 = vld [vmem:[%s218 + $0x20] sm:$0xff]
      %v239 = vld [vmem:[%s218 + $0x28] sm:$0xff]
      %v240 = vld [vmem:[%s218 + $0x30] sm:$0xff]
      %v241 = vld [vmem:[%s218 + $0x38] sm:$0xff]
      %v242 = vld [vmem:[%s226] sm:$0x1]
      %v244 = vlaneseq
      %v245 = vshrl.u32 %v244, 7
      %v246 = vsub.s32 0, %v245
      %v247 = vrot.slane %v242, %v246
      %vm249 = vcmask 523264
      %v251 = vsel %vm249, %v232, 0
      %v254 = vsel %vm249, %v233, 0
      %256 = vmatprep.subr.mxu0 0.0
      %257 = vmatpush1.msra.mxu0 0.0
      %258 = vmatprep.subr.mxu0 0.0
      %259 = vmatpush1.msra.mxu0 0.0
      %260 = vmatprep.subr.mxu0 0.0
      %261 = vmatpush1.msra.mxu0 0.0
      %262 = vmatprep.subr.mxu0 0.0
      %263 = vmatpush1.msra.mxu0 0.0
      %264 = vmatprep.subr.mxu0 0.0
      %265 = vmatpush1.msra.mxu0 0.0
      %266 = vmatprep.subr.mxu0 0.0
      %267 = vmatpush1.msra.mxu0 0.0
      %268 = vmatprep.subr.mxu0 0.0
      %269 = vmatpush1.msra.mxu0 0.0
      %270 = vmatprep.subr.mxu0 0.0
      %271 = vmatpush1.msra.mxu0 0.0
      %272 = vmatprep.subr.mxu0 0.0
      %273 = vmatpush1.msra.mxu0 %v241
      %274 = vmatprep.subr.mxu0 0.0
      %275 = vmatpush1.msra.mxu0 %v240
      %276 = vmatprep.subr.mxu0 0.0
      %277 = vmatpush1.msra.mxu0 %v239
      %278 = vmatprep.subr.mxu0 0.0
      %279 = vmatpush1.msra.mxu0 %v238
      %280 = vmatprep.subr.mxu0 0.0
      %281 = vmatpush1.msra.mxu0 %v237
      %282 = vmatprep.subr.mxu0 0.0
      %283 = vmatpush1.msra.mxu0 %v236
      %284 = vmatprep.subr.mxu0 0.0
      %285 = vmatpush1.msra.mxu0 %v235
      %286 = vmatprep.subr.mxu0 0.0
      %287 = vmatpush1.msra.mxu0 %v234
      %288 = vmatprep.subr.mxu0 0.0
      %289 = vmatpush2.msra.mxu0 0.0
      %290 = vmatprep.subr.mxu0 0.0
      %291 = vmatpush2.msra.mxu0 0.0
      %292 = vmatprep.subr.mxu0 0.0
      %293 = vmatpush2.msra.mxu0 0.0
      %294 = vmatprep.subr.mxu0 0.0
      %295 = vmatpush2.msra.mxu0 0.0
      %296 = vmatprep.subr.mxu0 0.0
      %297 = vmatpush2.msra.mxu0 0.0
      %298 = vmatprep.subr.mxu0 0.0
      %299 = vmatpush2.msra.mxu0 0.0
      %300 = vmatprep.subr.mxu0 0.0
      %301 = vmatpush2.msra.mxu0 0.0
      %302 = vmatprep.subr.mxu0 0.0
      %303 = vmatpush2.msra.mxu0 0.0
      %304 = vmatprep.subr.mxu0 0.0
      %305 = vmatpush2.msra.mxu0 0.0
      %306 = vmatprep.subr.mxu0 0.0
      %307 = vmatpush2.msra.mxu0 0.0
      %308 = vmatprep.subr.mxu0 0.0
      %309 = vmatpush2.msra.mxu0 0.0
      %310 = vmatprep.subr.mxu0 0.0
      %311 = vmatpush2.msra.mxu0 0.0
      %312 = vmatprep.subr.mxu0 0.0
      %313 = vmatpush2.msra.mxu0 0.0
      %314 = vmatprep.subr.mxu0 0.0
      %315 = vmatpush2.msra.mxu0 0.0
      %316 = vmatprep.subr.mxu0 0.0
      %317 = vmatpush2.msra.mxu0 0.0
      %318 = vmatprep.subr.mxu0 0.0
      %319 = vmatpush2.msra.mxu0 0.0
      %320 = vmatprep.mubr.f32.mxu0 0.0
      %321 = vmatmul.mubr.f32.gmra.mxu0 %v251
      %v322 = vpop.f32.mrf.mxu0
      %v323 = vadd.f32 %v247, %v322
      %v324 = vpop.f32.mrf.mxu0
      %325 = vmatprep.mubr.f32.mxu0 0.0
      %326 = vmatmul.mubr.f32.gmra.mxu0 %v254
      %v327 = vpop.f32.mrf.mxu0
      %v328 = vadd.f32 %v247, %v327
      %v329 = vpop.f32.mrf.mxu0
      %330 = vdwg.mxu0
      %331 = vst [vmem:[#allocation2] sm:$0xff] %v323
      %332 = vst [vmem:[#allocation2 + $0x8] sm:$0xff] %v328
      %v333 = vld [vmem:[%s223] sm:$0xff]
      %v334 = vld [vmem:[%s223 + $0x8] sm:$0xff]
      %v335 = vld [vmem:[%s223 + $0x10] sm:$0xff]
      %v336 = vld [vmem:[%s223 + $0x18] sm:$0xff]
      %p337 = scmp.eq.s32.totalorder %s15, 0
      // Predicated region
      $region37: #{poem_generator_forward.4} parent=35 // pred_check
        %p338 = pneg %p337
      $region38: #{poem_generator_forward.4} parent=35 // pred_check_branch
        %340 = sbr.rel (%p338) target = $region40
      $region39: #{poem_generator_forward.4} parent=35 // pred_region
        %v341 = vld [vmem:[#allocation2] sm:$0x3]
        %vm342 = vcmask 261120
        %v344 = vsel %vm342, 0.0, 0
        %346 = vmatprep.subr.mxu0 0.0
        %347 = vmatpush1.msra.mxu0 0.0
        %348 = vmatprep.subr.mxu0 0.0
        %349 = vmatpush1.msra.mxu0 0.0
        %350 = vmatprep.subr.mxu0 0.0
        %351 = vmatpush1.msra.mxu0 0.0
        %352 = vmatprep.subr.mxu0 0.0
        %353 = vmatpush1.msra.mxu0 0.0
        %354 = vmatprep.subr.mxu0 0.0
        %355 = vmatpush1.msra.mxu0 0.0
        %356 = vmatprep.subr.mxu0 0.0
        %357 = vmatpush1.msra.mxu0 0.0
        %358 = vmatprep.subr.mxu0 0.0
        %359 = vmatpush1.msra.mxu0 0.0
        %360 = vmatprep.subr.mxu0 0.0
        %361 = vmatpush1.msra.mxu0 0.0
        %362 = vmatprep.subr.mxu0 0.0
        %363 = vmatpush1.msra.mxu0 0.0
        %364 = vmatprep.subr.mxu0 0.0
        %365 = vmatpush1.msra.mxu0 0.0
        %366 = vmatprep.subr.mxu0 0.0
        %367 = vmatpush1.msra.mxu0 0.0
        %368 = vmatprep.subr.mxu0 0.0
        %369 = vmatpush1.msra.mxu0 0.0
        %370 = vmatprep.subr.mxu0 0.0
        %371 = vmatpush1.msra.mxu0 %v336
        %372 = vmatprep.subr.mxu0 0.0
        %373 = vmatpush1.msra.mxu0 %v335
        %374 = vmatprep.subr.mxu0 0.0
        %375 = vmatpush1.msra.mxu0 %v334
        %376 = vmatprep.subr.mxu0 0.0
        %377 = vmatpush1.msra.mxu0 %v333
        %378 = vmatprep.subr.mxu0 0.0
        %379 = vmatpush2.msra.mxu0 0.0
        %380 = vmatprep.subr.mxu0 0.0
        %381 = vmatpush2.msra.mxu0 0.0
        %382 = vmatprep.subr.mxu0 0.0
        %383 = vmatpush2.msra.mxu0 0.0
        %384 = vmatprep.subr.mxu0 0.0
        %385 = vmatpush2.msra.mxu0 0.0
        %386 = vmatprep.subr.mxu0 0.0
        %387 = vmatpush2.msra.mxu0 0.0
        %388 = vmatprep.subr.mxu0 0.0
        %389 = vmatpush2.msra.mxu0 0.0
        %390 = vmatprep.subr.mxu0 0.0
        %391 = vmatpush2.msra.mxu0 0.0
        %392 = vmatprep.subr.mxu0 0.0
        %393 = vmatpush2.msra.mxu0 0.0
        %394 = vmatprep.subr.mxu0 0.0
        %395 = vmatpush2.msra.mxu0 0.0
        %396 = vmatprep.subr.mxu0 0.0
        %397 = vmatpush2.msra.mxu0 0.0
        %398 = vmatprep.subr.mxu0 0.0
        %399 = vmatpush2.msra.mxu0 0.0
        %400 = vmatprep.subr.mxu0 0.0
        %401 = vmatpush2.msra.mxu0 0.0
        %402 = vmatprep.subr.mxu0 0.0
        %403 = vmatpush2.msra.mxu0 0.0
        %404 = vmatprep.subr.mxu0 0.0
        %405 = vmatpush2.msra.mxu0 0.0
        %406 = vmatprep.subr.mxu0 0.0
        %407 = vmatpush2.msra.mxu0 0.0
        %408 = vmatprep.subr.mxu0 0.0
        %409 = vmatpush2.msra.mxu0 0.0
        %410 = vmatprep.mubr.f32.mxu0 0.0
        %411 = vmatmul.mubr.f32.gmra.mxu0 %v344
        %v412 = vpop.f32.mrf.mxu0
        %v413 = vadd.f32 0.0, %v412
        %v414 = vpop.f32.mrf.mxu0
        %415 = vdwg.mxu0
        %v416 = vadd.f32 %v341, %v413
        %v417 = vxor.u32 %v416, 2147483648
        %v418 = vmul.f32 %v417, 1.442695
        %v419 = vpow.pop %v418
        %v420 = vadd.f32 %v419, 1.0
        %v421 = vrcp.pop %v420
        %v422 = vmul.f32 1.0, %v421
        %v423 = vtanh.pop %v416
        %v424 = vmul.f32 %v422, 0.0
        %426 = vrot.lane.b32.xlu0 %v423, 64
        %v427 = vpop.permute.xlu0 %426
        %v429 = vmul.f32 %v422, %v427
        %431 = vrot.lane.b32.xlu0 %v429, 32
        %v432 = vpop.permute.xlu0 %431
        %v434 = vadd.f32 %v424, %v432
        %v435 = vtanh.pop %v434
        %437 = vrot.lane.b32.xlu0 %v435, 64
        %v438 = vpop.permute.xlu0 %437
        %v440 = vmul.f32 %v422, %v438
        %442 = vrot.lane.b32.xlu0 %v440, 32
        %v443 = vpop.permute.xlu0 %442
        %vm445 = vcmask 254976
        %446 = vst.msk [vmem:[%s231] sm:$0x3] %vm445, %v443
        %v447 = vld [vmem:[#allocation2 + $0x2] sm:$0x3]
        %v448 = vsel %vm342, %v443, 0
        %450 = vmatprep.subr.mxu0 0.0
        %451 = vmatpush1.msra.mxu0 0.0
        %452 = vmatprep.subr.mxu0 0.0
        %453 = vmatpush1.msra.mxu0 0.0
        %454 = vmatprep.subr.mxu0 0.0
        %455 = vmatpush1.msra.mxu0 0.0
        %456 = vmatprep.subr.mxu0 0.0
        %457 = vmatpush1.msra.mxu0 0.0
        %458 = vmatprep.subr.mxu0 0.0
        %459 = vmatpush1.msra.mxu0 0.0
        %460 = vmatprep.subr.mxu0 0.0
        %461 = vmatpush1.msra.mxu0 0.0
        %462 = vmatprep.subr.mxu0 0.0
        %463 = vmatpush1.msra.mxu0 0.0
        %464 = vmatprep.subr.mxu0 0.0
        %465 = vmatpush1.msra.mxu0 0.0
        %466 = vmatprep.subr.mxu0 0.0
        %467 = vmatpush1.msra.mxu0 0.0
        %468 = vmatprep.subr.mxu0 0.0
        %469 = vmatpush1.msra.mxu0 0.0
        %470 = vmatprep.subr.mxu0 0.0
        %471 = vmatpush1.msra.mxu0 0.0
        %472 = vmatprep.subr.mxu0 0.0
        %473 = vmatpush1.msra.mxu0 0.0
        %474 = vmatprep.subr.mxu0 0.0
        %475 = vmatpush1.msra.mxu0 %v336
        %476 = vmatprep.subr.mxu0 0.0
        %477 = vmatpush1.msra.mxu0 %v335
        %478 = vmatprep.subr.mxu0 0.0
        %479 = vmatpush1.msra.mxu0 %v334
        %480 = vmatprep.subr.mxu0 0.0
        %481 = vmatpush1.msra.mxu0 %v333
        %482 = vmatprep.subr.mxu0 0.0
        %483 = vmatpush2.msra.mxu0 0.0
        %484 = vmatprep.subr.mxu0 0.0
        %485 = vmatpush2.msra.mxu0 0.0
        %486 = vmatprep.subr.mxu0 0.0
        %487 = vmatpush2.msra.mxu0 0.0
        %488 = vmatprep.subr.mxu0 0.0
        %489 = vmatpush2.msra.mxu0 0.0
        %490 = vmatprep.subr.mxu0 0.0
        %491 = vmatpush2.msra.mxu0 0.0
        %492 = vmatprep.subr.mxu0 0.0
        %493 = vmatpush2.msra.mxu0 0.0
        %494 = vmatprep.subr.mxu0 0.0
        %495 = vmatpush2.msra.mxu0 0.0
        %496 = vmatprep.subr.mxu0 0.0
        %497 = vmatpush2.msra.mxu0 0.0
        %498 = vmatprep.subr.mxu0 0.0
        %499 = vmatpush2.msra.mxu0 0.0
        %500 = vmatprep.subr.mxu0 0.0
        %501 = vmatpush2.msra.mxu0 0.0
        %502 = vmatprep.subr.mxu0 0.0
        %503 = vmatpush2.msra.mxu0 0.0
        %504 = vmatprep.subr.mxu0 0.0
        %505 = vmatpush2.msra.mxu0 0.0
        %506 = vmatprep.subr.mxu0 0.0
        %507 = vmatpush2.msra.mxu0 0.0
        %508 = vmatprep.subr.mxu0 0.0
        %509 = vmatpush2.msra.mxu0 0.0
        %510 = vmatprep.subr.mxu0 0.0
        %511 = vmatpush2.msra.mxu0 0.0
        %512 = vmatprep.subr.mxu0 0.0
        %513 = vmatpush2.msra.mxu0 0.0
        %514 = vmatprep.mubr.f32.mxu0 0.0
        %515 = vmatmul.mubr.f32.gmra.mxu0 %v448
        %v516 = vpop.f32.mrf.mxu0
        %v517 = vadd.f32 0.0, %v516
        %v518 = vpop.f32.mrf.mxu0
        %519 = vdwg.mxu0
        %v520 = vadd.f32 %v447, %v517
        %v521 = vxor.u32 %v520, 2147483648
        %v522 = vmul.f32 %v521, 1.442695
        %v523 = vpow.pop %v522
        %v524 = vadd.f32 %v523, 1.0
        %v525 = vrcp.pop %v524
        %v526 = vmul.f32 1.0, %v525
        %v527 = vtanh.pop %v520
        %v528 = vmul.f32 %v526, %v434
        %530 = vrot.lane.b32.xlu0 %v527, 64
        %v531 = vpop.permute.xlu0 %530
        %v533 = vmul.f32 %v526, %v531
        %535 = vrot.lane.b32.xlu0 %v533, 32
        %v536 = vpop.permute.xlu0 %535
        %v538 = vadd.f32 %v528, %v536
        %v539 = vtanh.pop %v538
        %541 = vrot.lane.b32.xlu0 %v539, 64
        %v542 = vpop.permute.xlu0 %541
        %v544 = vmul.f32 %v526, %v542
        %546 = vrot.lane.b32.xlu0 %v544, 32
        %v547 = vpop.permute.xlu0 %546
        %s549 = scalar_lea.vmem %s231, 2
        %550 = vst.msk [vmem:[%s549] sm:$0x3] %vm445, %v547
        %v551 = vld [vmem:[#allocation2 + $0x4] sm:$0x3]
        %v552 = vsel %vm342, %v547, 0
        %554 = vmatprep.subr.mxu0 0.0
        %555 = vmatpush1.msra.mxu0 0.0
        %556 = vmatprep.subr.mxu0 0.0
        %557 = vmatpush1.msra.mxu0 0.0
        %558 = vmatprep.subr.mxu0 0.0
        %559 = vmatpush1.msra.mxu0 0.0
        %560 = vmatprep.subr.mxu0 0.0
        %561 = vmatpush1.msra.mxu0 0.0
        %562 = vmatprep.subr.mxu0 0.0
        %563 = vmatpush1.msra.mxu0 0.0
        %564 = vmatprep.subr.mxu0 0.0
        %565 = vmatpush1.msra.mxu0 0.0
        %566 = vmatprep.subr.mxu0 0.0
        %567 = vmatpush1.msra.mxu0 0.0
        %568 = vmatprep.subr.mxu0 0.0
        %569 = vmatpush1.msra.mxu0 0.0
        %570 = vmatprep.subr.mxu0 0.0
        %571 = vmatpush1.msra.mxu0 0.0
        %572 = vmatprep.subr.mxu0 0.0
        %573 = vmatpush1.msra.mxu0 0.0
        %574 = vmatprep.subr.mxu0 0.0
        %575 = vmatpush1.msra.mxu0 0.0
        %576 = vmatprep.subr.mxu0 0.0
        %577 = vmatpush1.msra.mxu0 0.0
        %578 = vmatprep.subr.mxu0 0.0
        %579 = vmatpush1.msra.mxu0 %v336
        %580 = vmatprep.subr.mxu0 0.0
        %581 = vmatpush1.msra.mxu0 %v335
        %582 = vmatprep.subr.mxu0 0.0
        %583 = vmatpush1.msra.mxu0 %v334
        %584 = vmatprep.subr.mxu0 0.0
        %585 = vmatpush1.msra.mxu0 %v333
        %586 = vmatprep.subr.mxu0 0.0
        %587 = vmatpush2.msra.mxu0 0.0
        %588 = vmatprep.subr.mxu0 0.0
        %589 = vmatpush2.msra.mxu0 0.0
        %590 = vmatprep.subr.mxu0 0.0
        %591 = vmatpush2.msra.mxu0 0.0
        %592 = vmatprep.subr.mxu0 0.0
        %593 = vmatpush2.msra.mxu0 0.0
        %594 = vmatprep.subr.mxu0 0.0
        %595 = vmatpush2.msra.mxu0 0.0
        %596 = vmatprep.subr.mxu0 0.0
        %597 = vmatpush2.msra.mxu0 0.0
        %598 = vmatprep.subr.mxu0 0.0
        %599 = vmatpush2.msra.mxu0 0.0
        %600 = vmatprep.subr.mxu0 0.0
        %601 = vmatpush2.msra.mxu0 0.0
        %602 = vmatprep.subr.mxu0 0.0
        %603 = vmatpush2.msra.mxu0 0.0
        %604 = vmatprep.subr.mxu0 0.0
        %605 = vmatpush2.msra.mxu0 0.0
        %606 = vmatprep.subr.mxu0 0.0
        %607 = vmatpush2.msra.mxu0 0.0
        %608 = vmatprep.subr.mxu0 0.0
        %609 = vmatpush2.msra.mxu0 0.0
        %610 = vmatprep.subr.mxu0 0.0
        %611 = vmatpush2.msra.mxu0 0.0
        %612 = vmatprep.subr.mxu0 0.0
        %613 = vmatpush2.msra.mxu0 0.0
        %614 = vmatprep.subr.mxu0 0.0
        %615 = vmatpush2.msra.mxu0 0.0
        %616 = vmatprep.subr.mxu0 0.0
        %617 = vmatpush2.msra.mxu0 0.0
        %618 = vmatprep.mubr.f32.mxu0 0.0
        %619 = vmatmul.mubr.f32.gmra.mxu0 %v552
        %v620 = vpop.f32.mrf.mxu0
        %v621 = vadd.f32 0.0, %v620
        %v622 = vpop.f32.mrf.mxu0
        %623 = vdwg.mxu0
        %v624 = vadd.f32 %v551, %v621
        %v625 = vxor.u32 %v624, 2147483648
        %v626 = vmul.f32 %v625, 1.442695
        %v627 = vpow.pop %v626
        %v628 = vadd.f32 %v627, 1.0
        %v629 = vrcp.pop %v628
        %v630 = vmul.f32 1.0, %v629
        %v631 = vtanh.pop %v624
        %v632 = vmul.f32 %v630, %v538
        %634 = vrot.lane.b32.xlu0 %v631, 64
        %v635 = vpop.permute.xlu0 %634
        %v637 = vmul.f32 %v630, %v635
        %639 = vrot.lane.b32.xlu0 %v637, 32
        %v640 = vpop.permute.xlu0 %639
        %v642 = vadd.f32 %v632, %v640
        %v643 = vtanh.pop %v642
        %645 = vrot.lane.b32.xlu0 %v643, 64
        %v646 = vpop.permute.xlu0 %645
        %v648 = vmul.f32 %v630, %v646
        %650 = vrot.lane.b32.xlu0 %v648, 32
        %v651 = vpop.permute.xlu0 %650
        %s653 = scalar_lea.vmem %s231, 4
        %654 = vst.msk [vmem:[%s653] sm:$0x3] %vm445, %v651
        %v655 = vld [vmem:[#allocation2 + $0x6] sm:$0x3]
        %v656 = vsel %vm342, %v651, 0
        %658 = vmatprep.subr.mxu0 0.0
        %659 = vmatpush1.msra.mxu0 0.0
        %660 = vmatprep.subr.mxu0 0.0
        %661 = vmatpush1.msra.mxu0 0.0
        %662 = vmatprep.subr.mxu0 0.0
        %663 = vmatpush1.msra.mxu0 0.0
        %664 = vmatprep.subr.mxu0 0.0
        %665 = vmatpush1.msra.mxu0 0.0
        %666 = vmatprep.subr.mxu0 0.0
        %667 = vmatpush1.msra.mxu0 0.0
        %668 = vmatprep.subr.mxu0 0.0
        %669 = vmatpush1.msra.mxu0 0.0
        %670 = vmatprep.subr.mxu0 0.0
        %671 = vmatpush1.msra.mxu0 0.0
        %672 = vmatprep.subr.mxu0 0.0
        %673 = vmatpush1.msra.mxu0 0.0
        %674 = vmatprep.subr.mxu0 0.0
        %675 = vmatpush1.msra.mxu0 0.0
        %676 = vmatprep.subr.mxu0 0.0
        %677 = vmatpush1.msra.mxu0 0.0
        %678 = vmatprep.subr.mxu0 0.0
        %679 = vmatpush1.msra.mxu0 0.0
        %680 = vmatprep.subr.mxu0 0.0
        %681 = vmatpush1.msra.mxu0 0.0
        %682 = vmatprep.subr.mxu0 0.0
        %683 = vmatpush1.msra.mxu0 %v336
        %684 = vmatprep.subr.mxu0 0.0
        %685 = vmatpush1.msra.mxu0 %v335
        %686 = vmatprep.subr.mxu0 0.0
        %687 = vmatpush1.msra.mxu0 %v334
        %688 = vmatprep.subr.mxu0 0.0
        %689 = vmatpush1.msra.mxu0 %v333
        %690 = vmatprep.subr.mxu0 0.0
        %691 = vmatpush2.msra.mxu0 0.0
        %692 = vmatprep.subr.mxu0 0.0
        %693 = vmatpush2.msra.mxu0 0.0
        %694 = vmatprep.subr.mxu0 0.0
        %695 = vmatpush2.msra.mxu0 0.0
        %696 = vmatprep.subr.mxu0 0.0
        %697 = vmatpush2.msra.mxu0 0.0
        %698 = vmatprep.subr.mxu0 0.0
        %699 = vmatpush2.msra.mxu0 0.0
        %700 = vmatprep.subr.mxu0 0.0
        %701 = vmatpush2.msra.mxu0 0.0
        %702 = vmatprep.subr.mxu0 0.0
        %703 = vmatpush2.msra.mxu0 0.0
        %704 = vmatprep.subr.mxu0 0.0
        %705 = vmatpush2.msra.mxu0 0.0
        %706 = vmatprep.subr.mxu0 0.0
        %707 = vmatpush2.msra.mxu0 0.0
        %708 = vmatprep.subr.mxu0 0.0
        %709 = vmatpush2.msra.mxu0 0.0
        %710 = vmatprep.subr.mxu0 0.0
        %711 = vmatpush2.msra.mxu0 0.0
        %712 = vmatprep.subr.mxu0 0.0
        %713 = vmatpush2.msra.mxu0 0.0
        %714 = vmatprep.subr.mxu0 0.0
        %715 = vmatpush2.msra.mxu0 0.0
        %716 = vmatprep.subr.mxu0 0.0
        %717 = vmatpush2.msra.mxu0 0.0
        %718 = vmatprep.subr.mxu0 0.0
        %719 = vmatpush2.msra.mxu0 0.0
        %720 = vmatprep.subr.mxu0 0.0
        %721 = vmatpush2.msra.mxu0 0.0
        %722 = vmatprep.mubr.f32.mxu0 0.0
        %723 = vmatmul.mubr.f32.gmra.mxu0 %v656
        %v724 = vpop.f32.mrf.mxu0
        %v725 = vadd.f32 0.0, %v724
        %v726 = vpop.f32.mrf.mxu0
        %727 = vdwg.mxu0
        %v728 = vadd.f32 %v655, %v725
        %v729 = vxor.u32 %v728, 2147483648
        %v730 = vmul.f32 %v729, 1.442695
        %v731 = vpow.pop %v730
        %v732 = vadd.f32 %v731, 1.0
        %v733 = vrcp.pop %v732
        %v734 = vmul.f32 1.0, %v733
        %v735 = vtanh.pop %v728
        %v736 = vmul.f32 %v734, %v642
        %738 = vrot.lane.b32.xlu0 %v735, 64
        %v739 = vpop.permute.xlu0 %738
        %v741 = vmul.f32 %v734, %v739
        %743 = vrot.lane.b32.xlu0 %v741, 32
        %v744 = vpop.permute.xlu0 %743
        %v746 = vadd.f32 %v736, %v744
        %v747 = vtanh.pop %v746
        %749 = vrot.lane.b32.xlu0 %v747, 64
        %v750 = vpop.permute.xlu0 %749
        %v752 = vmul.f32 %v734, %v750
        %754 = vrot.lane.b32.xlu0 %v752, 32
        %v755 = vpop.permute.xlu0 %754
        %s757 = scalar_lea.vmem %s231, 6
        %758 = vst.msk [vmem:[%s757] sm:$0x3] %vm445, %v755
        %v759 = vld [vmem:[#allocation2 + $0x8] sm:$0x3]
        %v760 = vsel %vm342, %v755, 0
        %762 = vmatprep.subr.mxu0 0.0
        %763 = vmatpush1.msra.mxu0 0.0
        %764 = vmatprep.subr.mxu0 0.0
        %765 = vmatpush1.msra.mxu0 0.0
        %766 = vmatprep.subr.mxu0 0.0
        %767 = vmatpush1.msra.mxu0 0.0
        %768 = vmatprep.subr.mxu0 0.0
        %769 = vmatpush1.msra.mxu0 0.0
        %770 = vmatprep.subr.mxu0 0.0
        %771 = vmatpush1.msra.mxu0 0.0
        %772 = vmatprep.subr.mxu0 0.0
        %773 = vmatpush1.msra.mxu0 0.0
        %774 = vmatprep.subr.mxu0 0.0
        %775 = vmatpush1.msra.mxu0 0.0
        %776 = vmatprep.subr.mxu0 0.0
        %777 = vmatpush1.msra.mxu0 0.0
        %778 = vmatprep.subr.mxu0 0.0
        %779 = vmatpush1.msra.mxu0 0.0
        %780 = vmatprep.subr.mxu0 0.0
        %781 = vmatpush1.msra.mxu0 0.0
        %782 = vmatprep.subr.mxu0 0.0
        %783 = vmatpush1.msra.mxu0 0.0
        %784 = vmatprep.subr.mxu0 0.0
        %785 = vmatpush1.msra.mxu0 0.0
        %786 = vmatprep.subr.mxu0 0.0
        %787 = vmatpush1.msra.mxu0 %v336
        %788 = vmatprep.subr.mxu0 0.0
        %789 = vmatpush1.msra.mxu0 %v335
        %790 = vmatprep.subr.mxu0 0.0
        %791 = vmatpush1.msra.mxu0 %v334
        %792 = vmatprep.subr.mxu0 0.0
        %793 = vmatpush1.msra.mxu0 %v333
        %794 = vmatprep.subr.mxu0 0.0
        %795 = vmatpush2.msra.mxu0 0.0
        %796 = vmatprep.subr.mxu0 0.0
        %797 = vmatpush2.msra.mxu0 0.0
        %798 = vmatprep.subr.mxu0 0.0
        %799 = vmatpush2.msra.mxu0 0.0
        %800 = vmatprep.subr.mxu0 0.0
        %801 = vmatpush2.msra.mxu0 0.0
        %802 = vmatprep.subr.mxu0 0.0
        %803 = vmatpush2.msra.mxu0 0.0
        %804 = vmatprep.subr.mxu0 0.0
        %805 = vmatpush2.msra.mxu0 0.0
        %806 = vmatprep.subr.mxu0 0.0
        %807 = vmatpush2.msra.mxu0 0.0
        %808 = vmatprep.subr.mxu0 0.0
        %809 = vmatpush2.msra.mxu0 0.0
        %810 = vmatprep.subr.mxu0 0.0
        %811 = vmatpush2.msra.mxu0 0.0
        %812 = vmatprep.subr.mxu0 0.0
        %813 = vmatpush2.msra.mxu0 0.0
        %814 = vmatprep.subr.mxu0 0.0
        %815 = vmatpush2.msra.mxu0 0.0
        %816 = vmatprep.subr.mxu0 0.0
        %817 = vmatpush2.msra.mxu0 0.0
        %818 = vmatprep.subr.mxu0 0.0
        %819 = vmatpush2.msra.mxu0 0.0
        %820 = vmatprep.subr.mxu0 0.0
        %821 = vmatpush2.msra.mxu0 0.0
        %822 = vmatprep.subr.mxu0 0.0
        %823 = vmatpush2.msra.mxu0 0.0
        %824 = vmatprep.subr.mxu0 0.0
        %825 = vmatpush2.msra.mxu0 0.0
        %826 = vmatprep.mubr.f32.mxu0 0.0
        %827 = vmatmul.mubr.f32.gmra.mxu0 %v760
        %v828 = vpop.f32.mrf.mxu0
        %v829 = vadd.f32 0.0, %v828
        %v830 = vpop.f32.mrf.mxu0
        %831 = vdwg.mxu0
        %v832 = vadd.f32 %v759, %v829
        %v833 = vxor.u32 %v832, 2147483648
        %v834 = vmul.f32 %v833, 1.442695
        %v835 = vpow.pop %v834
        %v836 = vadd.f32 %v835, 1.0
        %v837 = vrcp.pop %v836
        %v838 = vmul.f32 1.0, %v837
        %v839 = vtanh.pop %v832
        %v840 = vmul.f32 %v838, %v746
        %842 = vrot.lane.b32.xlu0 %v839, 64
        %v843 = vpop.permute.xlu0 %842
        %v845 = vmul.f32 %v838, %v843
        %847 = vrot.lane.b32.xlu0 %v845, 32
        %v848 = vpop.permute.xlu0 %847
        %v850 = vadd.f32 %v840, %v848
        %v851 = vtanh.pop %v850
        %853 = vrot.lane.b32.xlu0 %v851, 64
        %v854 = vpop.permute.xlu0 %853
        %v856 = vmul.f32 %v838, %v854
        %858 = vrot.lane.b32.xlu0 %v856, 32
        %v859 = vpop.permute.xlu0 %858
        %s861 = scalar_lea.vmem %s231, 8
        %862 = vst.msk [vmem:[%s861] sm:$0x3] %vm445, %v859
        %v863 = vld [vmem:[#allocation2 + $0xa] sm:$0x3]
        %v864 = vsel %vm342, %v859, 0
        %866 = vmatprep.subr.mxu0 0.0
        %867 = vmatpush1.msra.mxu0 0.0
        %868 = vmatprep.subr.mxu0 0.0
        %869 = vmatpush1.msra.mxu0 0.0
        %870 = vmatprep.subr.mxu0 0.0
        %871 = vmatpush1.msra.mxu0 0.0
        %872 = vmatprep.subr.mxu0 0.0
        %873 = vmatpush1.msra.mxu0 0.0
        %874 = vmatprep.subr.mxu0 0.0
        %875 = vmatpush1.msra.mxu0 0.0
        %876 = vmatprep.subr.mxu0 0.0
        %877 = vmatpush1.msra.mxu0 0.0
        %878 = vmatprep.subr.mxu0 0.0
        %879 = vmatpush1.msra.mxu0 0.0
        %880 = vmatprep.subr.mxu0 0.0
        %881 = vmatpush1.msra.mxu0 0.0
        %882 = vmatprep.subr.mxu0 0.0
        %883 = vmatpush1.msra.mxu0 0.0
        %884 = vmatprep.subr.mxu0 0.0
        %885 = vmatpush1.msra.mxu0 0.0
        %886 = vmatprep.subr.mxu0 0.0
        %887 = vmatpush1.msra.mxu0 0.0
        %888 = vmatprep.subr.mxu0 0.0
        %889 = vmatpush1.msra.mxu0 0.0
        %890 = vmatprep.subr.mxu0 0.0
        %891 = vmatpush1.msra.mxu0 %v336
        %892 = vmatprep.subr.mxu0 0.0
        %893 = vmatpush1.msra.mxu0 %v335
        %894 = vmatprep.subr.mxu0 0.0
        %895 = vmatpush1.msra.mxu0 %v334
        %896 = vmatprep.subr.mxu0 0.0
        %897 = vmatpush1.msra.mxu0 %v333
        %898 = vmatprep.subr.mxu0 0.0
        %899 = vmatpush2.msra.mxu0 0.0
        %900 = vmatprep.subr.mxu0 0.0
        %901 = vmatpush2.msra.mxu0 0.0
        %902 = vmatprep.subr.mxu0 0.0
        %903 = vmatpush2.msra.mxu0 0.0
        %904 = vmatprep.subr.mxu0 0.0
        %905 = vmatpush2.msra.mxu0 0.0
        %906 = vmatprep.subr.mxu0 0.0
        %907 = vmatpush2.msra.mxu0 0.0
        %908 = vmatprep.subr.mxu0 0.0
        %909 = vmatpush2.msra.mxu0 0.0
        %910 = vmatprep.subr.mxu0 0.0
        %911 = vmatpush2.msra.mxu0 0.0
        %912 = vmatprep.subr.mxu0 0.0
        %913 = vmatpush2.msra.mxu0 0.0
        %914 = vmatprep.subr.mxu0 0.0
        %915 = vmatpush2.msra.mxu0 0.0
        %916 = vmatprep.subr.mxu0 0.0
        %917 = vmatpush2.msra.mxu0 0.0
        %918 = vmatprep.subr.mxu0 0.0
        %919 = vmatpush2.msra.mxu0 0.0
        %920 = vmatprep.subr.mxu0 0.0
        %921 = vmatpush2.msra.mxu0 0.0
        %922 = vmatprep.subr.mxu0 0.0
        %923 = vmatpush2.msra.mxu0 0.0
        %924 = vmatprep.subr.mxu0 0.0
        %925 = vmatpush2.msra.mxu0 0.0
        %926 = vmatprep.subr.mxu0 0.0
        %927 = vmatpush2.msra.mxu0 0.0
        %928 = vmatprep.subr.mxu0 0.0
        %929 = vmatpush2.msra.mxu0 0.0
        %930 = vmatprep.mubr.f32.mxu0 0.0
        %931 = vmatmul.mubr.f32.gmra.mxu0 %v864
        %v932 = vpop.f32.mrf.mxu0
        %v933 = vadd.f32 0.0, %v932
        %v934 = vpop.f32.mrf.mxu0
        %935 = vdwg.mxu0
        %v936 = vadd.f32 %v863, %v933
        %v937 = vxor.u32 %v936, 2147483648
        %v938 = vmul.f32 %v937, 1.442695
        %v939 = vpow.pop %v938
        %v940 = vadd.f32 %v939, 1.0
        %v941 = vrcp.pop %v940
        %v942 = vmul.f32 1.0, %v941
        %v943 = vtanh.pop %v936
        %v944 = vmul.f32 %v942, %v850
        %946 = vrot.lane.b32.xlu0 %v943, 64
        %v947 = vpop.permute.xlu0 %946
        %v949 = vmul.f32 %v942, %v947
        %951 = vrot.lane.b32.xlu0 %v949, 32
        %v952 = vpop.permute.xlu0 %951
        %v954 = vadd.f32 %v944, %v952
        %v955 = vtanh.pop %v954
        %957 = vrot.lane.b32.xlu0 %v955, 64
        %v958 = vpop.permute.xlu0 %957
        %v960 = vmul.f32 %v942, %v958
        %962 = vrot.lane.b32.xlu0 %v960, 32
        %v963 = vpop.permute.xlu0 %962
        %s965 = scalar_lea.vmem %s231, 10
        %966 = vst.msk [vmem:[%s965] sm:$0x3] %vm445, %v963
        %v967 = vld [vmem:[#allocation2 + $0xc] sm:$0x3]
        %v968 = vsel %vm342, %v963, 0
        %970 = vmatprep.subr.mxu0 0.0
        %971 = vmatpush1.msra.mxu0 0.0
        %972 = vmatprep.subr.mxu0 0.0
        %973 = vmatpush1.msra.mxu0 0.0
        %974 = vmatprep.subr.mxu0 0.0
        %975 = vmatpush1.msra.mxu0 0.0
        %976 = vmatprep.subr.mxu0 0.0
        %977 = vmatpush1.msra.mxu0 0.0
        %978 = vmatprep.subr.mxu0 0.0
        %979 = vmatpush1.msra.mxu0 0.0
        %980 = vmatprep.subr.mxu0 0.0
        %981 = vmatpush1.msra.mxu0 0.0
        %982 = vmatprep.subr.mxu0 0.0
        %983 = vmatpush1.msra.mxu0 0.0
        %984 = vmatprep.subr.mxu0 0.0
        %985 = vmatpush1.msra.mxu0 0.0
        %986 = vmatprep.subr.mxu0 0.0
        %987 = vmatpush1.msra.mxu0 0.0
        %988 = vmatprep.subr.mxu0 0.0
        %989 = vmatpush1.msra.mxu0 0.0
        %990 = vmatprep.subr.mxu0 0.0
        %991 = vmatpush1.msra.mxu0 0.0
        %992 = vmatprep.subr.mxu0 0.0
        %993 = vmatpush1.msra.mxu0 0.0
        %994 = vmatprep.subr.mxu0 0.0
        %995 = vmatpush1.msra.mxu0 %v336
        %996 = vmatprep.subr.mxu0 0.0
        %997 = vmatpush1.msra.mxu0 %v335
        %998 = vmatprep.subr.mxu0 0.0
        %999 = vmatpush1.msra.mxu0 %v334
        %1000 = vmatprep.subr.mxu0 0.0
        %1001 = vmatpush1.msra.mxu0 %v333
        %1002 = vmatprep.subr.mxu0 0.0
        %1003 = vmatpush2.msra.mxu0 0.0
        %1004 = vmatprep.subr.mxu0 0.0
        %1005 = vmatpush2.msra.mxu0 0.0
        %1006 = vmatprep.subr.mxu0 0.0
        %1007 = vmatpush2.msra.mxu0 0.0
        %1008 = vmatprep.subr.mxu0 0.0
        %1009 = vmatpush2.msra.mxu0 0.0
        %1010 = vmatprep.subr.mxu0 0.0
        %1011 = vmatpush2.msra.mxu0 0.0
        %1012 = vmatprep.subr.mxu0 0.0
        %1013 = vmatpush2.msra.mxu0 0.0
        %1014 = vmatprep.subr.mxu0 0.0
        %1015 = vmatpush2.msra.mxu0 0.0
        %1016 = vmatprep.subr.mxu0 0.0
        %1017 = vmatpush2.msra.mxu0 0.0
        %1018 = vmatprep.subr.mxu0 0.0
        %1019 = vmatpush2.msra.mxu0 0.0
        %1020 = vmatprep.subr.mxu0 0.0
        %1021 = vmatpush2.msra.mxu0 0.0
        %1022 = vmatprep.subr.mxu0 0.0
        %1023 = vmatpush2.msra.mxu0 0.0
        %1024 = vmatprep.subr.mxu0 0.0
        %1025 = vmatpush2.msra.mxu0 0.0
        %1026 = vmatprep.subr.mxu0 0.0
        %1027 = vmatpush2.msra.mxu0 0.0
        %1028 = vmatprep.subr.mxu0 0.0
        %1029 = vmatpush2.msra.mxu0 0.0
        %1030 = vmatprep.subr.mxu0 0.0
        %1031 = vmatpush2.msra.mxu0 0.0
        %1032 = vmatprep.subr.mxu0 0.0
        %1033 = vmatpush2.msra.mxu0 0.0
        %1034 = vmatprep.mubr.f32.mxu0 0.0
        %1035 = vmatmul.mubr.f32.gmra.mxu0 %v968
        %v1036 = vpop.f32.mrf.mxu0
        %v1037 = vadd.f32 0.0, %v1036
        %v1038 = vpop.f32.mrf.mxu0
        %1039 = vdwg.mxu0
        %v1040 = vadd.f32 %v967, %v1037
        %v1041 = vxor.u32 %v1040, 2147483648
        %v1042 = vmul.f32 %v1041, 1.442695
        %v1043 = vpow.pop %v1042
        %v1044 = vadd.f32 %v1043, 1.0
        %v1045 = vrcp.pop %v1044
        %v1046 = vmul.f32 1.0, %v1045
        %v1047 = vtanh.pop %v1040
        %v1048 = vmul.f32 %v1046, %v954
        %1050 = vrot.lane.b32.xlu0 %v1047, 64
        %v1051 = vpop.permute.xlu0 %1050
        %v1053 = vmul.f32 %v1046, %v1051
        %1055 = vrot.lane.b32.xlu0 %v1053, 32
        %v1056 = vpop.permute.xlu0 %1055
        %v1058 = vadd.f32 %v1048, %v1056
        %v1059 = vtanh.pop %v1058
        %1061 = vrot.lane.b32.xlu0 %v1059, 64
        %v1062 = vpop.permute.xlu0 %1061
        %v1064 = vmul.f32 %v1046, %v1062
        %1066 = vrot.lane.b32.xlu0 %v1064, 32
        %v1067 = vpop.permute.xlu0 %1066
        %s1069 = scalar_lea.vmem %s231, 12
        %1070 = vst.msk [vmem:[%s1069] sm:$0x3] %vm445, %v1067
        %v1071 = vld [vmem:[#allocation2 + $0xe] sm:$0x3]
        %v1072 = vsel %vm342, %v1067, 0
        %1074 = vmatprep.subr.mxu0 0.0
        %1075 = vmatpush1.msra.mxu0 0.0
        %1076 = vmatprep.subr.mxu0 0.0
        %1077 = vmatpush1.msra.mxu0 0.0
        %1078 = vmatprep.subr.mxu0 0.0
        %1079 = vmatpush1.msra.mxu0 0.0
        %1080 = vmatprep.subr.mxu0 0.0
        %1081 = vmatpush1.msra.mxu0 0.0
        %1082 = vmatprep.subr.mxu0 0.0
        %1083 = vmatpush1.msra.mxu0 0.0
        %1084 = vmatprep.subr.mxu0 0.0
        %1085 = vmatpush1.msra.mxu0 0.0
        %1086 = vmatprep.subr.mxu0 0.0
        %1087 = vmatpush1.msra.mxu0 0.0
        %1088 = vmatprep.subr.mxu0 0.0
        %1089 = vmatpush1.msra.mxu0 0.0
        %1090 = vmatprep.subr.mxu0 0.0
        %1091 = vmatpush1.msra.mxu0 0.0
        %1092 = vmatprep.subr.mxu0 0.0
        %1093 = vmatpush1.msra.mxu0 0.0
        %1094 = vmatprep.subr.mxu0 0.0
        %1095 = vmatpush1.msra.mxu0 0.0
        %1096 = vmatprep.subr.mxu0 0.0
        %1097 = vmatpush1.msra.mxu0 0.0
        %1098 = vmatprep.subr.mxu0 0.0
        %1099 = vmatpush1.msra.mxu0 %v336
        %1100 = vmatprep.subr.mxu0 0.0
        %1101 = vmatpush1.msra.mxu0 %v335
        %1102 = vmatprep.subr.mxu0 0.0
        %1103 = vmatpush1.msra.mxu0 %v334
        %1104 = vmatprep.subr.mxu0 0.0
        %1105 = vmatpush1.msra.mxu0 %v333
        %1106 = vmatprep.subr.mxu0 0.0
        %1107 = vmatpush2.msra.mxu0 0.0
        %1108 = vmatprep.subr.mxu0 0.0
        %1109 = vmatpush2.msra.mxu0 0.0
        %1110 = vmatprep.subr.mxu0 0.0
        %1111 = vmatpush2.msra.mxu0 0.0
        %1112 = vmatprep.subr.mxu0 0.0
        %1113 = vmatpush2.msra.mxu0 0.0
        %1114 = vmatprep.subr.mxu0 0.0
        %1115 = vmatpush2.msra.mxu0 0.0
        %1116 = vmatprep.subr.mxu0 0.0
        %1117 = vmatpush2.msra.mxu0 0.0
        %1118 = vmatprep.subr.mxu0 0.0
        %1119 = vmatpush2.msra.mxu0 0.0
        %1120 = vmatprep.subr.mxu0 0.0
        %1121 = vmatpush2.msra.mxu0 0.0
        %1122 = vmatprep.subr.mxu0 0.0
        %1123 = vmatpush2.msra.mxu0 0.0
        %1124 = vmatprep.subr.mxu0 0.0
        %1125 = vmatpush2.msra.mxu0 0.0
        %1126 = vmatprep.subr.mxu0 0.0
        %1127 = vmatpush2.msra.mxu0 0.0
        %1128 = vmatprep.subr.mxu0 0.0
        %1129 = vmatpush2.msra.mxu0 0.0
        %1130 = vmatprep.subr.mxu0 0.0
        %1131 = vmatpush2.msra.mxu0 0.0
        %1132 = vmatprep.subr.mxu0 0.0
        %1133 = vmatpush2.msra.mxu0 0.0
        %1134 = vmatprep.subr.mxu0 0.0
        %1135 = vmatpush2.msra.mxu0 0.0
        %1136 = vmatprep.subr.mxu0 0.0
        %1137 = vmatpush2.msra.mxu0 0.0
        %1138 = vmatprep.mubr.f32.mxu0 0.0
        %1139 = vmatmul.mubr.f32.gmra.mxu0 %v1072
        %v1140 = vpop.f32.mrf.mxu0
        %v1141 = vadd.f32 0.0, %v1140
        %v1142 = vpop.f32.mrf.mxu0
        %1143 = vdwg.mxu0
        %v1144 = vadd.f32 %v1071, %v1141
        %v1145 = vxor.u32 %v1144, 2147483648
        %v1146 = vmul.f32 %v1145, 1.442695
        %v1147 = vpow.pop %v1146
        %v1148 = vadd.f32 %v1147, 1.0
        %v1149 = vrcp.pop %v1148
        %v1150 = vmul.f32 1.0, %v1149
        %v1151 = vtanh.pop %v1144
        %v1152 = vmul.f32 %v1150, %v1058
        %1154 = vrot.lane.b32.xlu0 %v1151, 64
        %v1155 = vpop.permute.xlu0 %1154
        %v1157 = vmul.f32 %v1150, %v1155
        %1159 = vrot.lane.b32.xlu0 %v1157, 32
        %v1160 = vpop.permute.xlu0 %1159
        %v1162 = vadd.f32 %v1152, %v1160
        %v1163 = vtanh.pop %v1162
        %1165 = vrot.lane.b32.xlu0 %v1163, 64
        %v1166 = vpop.permute.xlu0 %1165
        %v1168 = vmul.f32 %v1150, %v1166
        %1170 = vrot.lane.b32.xlu0 %v1168, 32
        %v1171 = vpop.permute.xlu0 %1170
        %s1173 = scalar_lea.vmem %s231, 14
        %1174 = vst.msk [vmem:[%s1173] sm:$0x3] %vm445, %v1171
      $region40: #{poem_generator_forward.4} parent=35 // pred_fallthru
        _
      %p1175 = scmp.eq.s32.totalorder %s15, 1
      // Predicated region
      $region41: #{poem_generator_forward.4} parent=35 // pred_check
        %p1176 = pneg %p1175
      $region42: #{poem_generator_forward.4} parent=35 // pred_check_branch
        %1178 = sbr.rel (%p1176) target = $region44
      $region43: #{poem_generator_forward.4} parent=35 // pred_region
        %v1179 = vld [vmem:[#allocation2 + $0xe] sm:$0x3]
        %vm1180 = vcmask 261120
        %v1182 = vsel %vm1180, 0.0, 0
        %1184 = vmatprep.subr.mxu0 0.0
        %1185 = vmatpush1.msra.mxu0 0.0
        %1186 = vmatprep.subr.mxu0 0.0
        %1187 = vmatpush1.msra.mxu0 0.0
        %1188 = vmatprep.subr.mxu0 0.0
        %1189 = vmatpush1.msra.mxu0 0.0
        %1190 = vmatprep.subr.mxu0 0.0
        %1191 = vmatpush1.msra.mxu0 0.0
        %1192 = vmatprep.subr.mxu0 0.0
        %1193 = vmatpush1.msra.mxu0 0.0
        %1194 = vmatprep.subr.mxu0 0.0
        %1195 = vmatpush1.msra.mxu0 0.0
        %1196 = vmatprep.subr.mxu0 0.0
        %1197 = vmatpush1.msra.mxu0 0.0
        %1198 = vmatprep.subr.mxu0 0.0
        %1199 = vmatpush1.msra.mxu0 0.0
        %1200 = vmatprep.subr.mxu0 0.0
        %1201 = vmatpush1.msra.mxu0 0.0
        %1202 = vmatprep.subr.mxu0 0.0
        %1203 = vmatpush1.msra.mxu0 0.0
        %1204 = vmatprep.subr.mxu0 0.0
        %1205 = vmatpush1.msra.mxu0 0.0
        %1206 = vmatprep.subr.mxu0 0.0
        %1207 = vmatpush1.msra.mxu0 0.0
        %1208 = vmatprep.subr.mxu0 0.0
        %1209 = vmatpush1.msra.mxu0 %v336
        %1210 = vmatprep.subr.mxu0 0.0
        %1211 = vmatpush1.msra.mxu0 %v335
        %1212 = vmatprep.subr.mxu0 0.0
        %1213 = vmatpush1.msra.mxu0 %v334
        %1214 = vmatprep.subr.mxu0 0.0
        %1215 = vmatpush1.msra.mxu0 %v333
        %1216 = vmatprep.subr.mxu0 0.0
        %1217 = vmatpush2.msra.mxu0 0.0
        %1218 = vmatprep.subr.mxu0 0.0
        %1219 = vmatpush2.msra.mxu0 0.0
        %1220 = vmatprep.subr.mxu0 0.0
        %1221 = vmatpush2.msra.mxu0 0.0
        %1222 = vmatprep.subr.mxu0 0.0
        %1223 = vmatpush2.msra.mxu0 0.0
        %1224 = vmatprep.subr.mxu0 0.0
        %1225 = vmatpush2.msra.mxu0 0.0
        %1226 = vmatprep.subr.mxu0 0.0
        %1227 = vmatpush2.msra.mxu0 0.0
        %1228 = vmatprep.subr.mxu0 0.0
        %1229 = vmatpush2.msra.mxu0 0.0
        %1230 = vmatprep.subr.mxu0 0.0
        %1231 = vmatpush2.msra.mxu0 0.0
        %1232 = vmatprep.subr.mxu0 0.0
        %1233 = vmatpush2.msra.mxu0 0.0
        %1234 = vmatprep.subr.mxu0 0.0
        %1235 = vmatpush2.msra.mxu0 0.0
        %1236 = vmatprep.subr.mxu0 0.0
        %1237 = vmatpush2.msra.mxu0 0.0
        %1238 = vmatprep.subr.mxu0 0.0
        %1239 = vmatpush2.msra.mxu0 0.0
        %1240 = vmatprep.subr.mxu0 0.0
        %1241 = vmatpush2.msra.mxu0 0.0
        %1242 = vmatprep.subr.mxu0 0.0
        %1243 = vmatpush2.msra.mxu0 0.0
        %1244 = vmatprep.subr.mxu0 0.0
        %1245 = vmatpush2.msra.mxu0 0.0
        %1246 = vmatprep.subr.mxu0 0.0
        %1247 = vmatpush2.msra.mxu0 0.0
        %1248 = vmatprep.mubr.f32.mxu0 0.0
        %1249 = vmatmul.mubr.f32.gmra.mxu0 %v1182
        %v1250 = vpop.f32.mrf.mxu0
        %v1251 = vadd.f32 0.0, %v1250
        %v1252 = vpop.f32.mrf.mxu0
        %1253 = vdwg.mxu0
        %v1254 = vadd.f32 %v1179, %v1251
        %v1255 = vxor.u32 %v1254, 2147483648
        %v1256 = vmul.f32 %v1255, 1.442695
        %v1257 = vpow.pop %v1256
        %v1258 = vadd.f32 %v1257, 1.0
        %v1259 = vrcp.pop %v1258
        %v1260 = vmul.f32 1.0, %v1259
        %v1261 = vtanh.pop %v1254
        %v1262 = vmul.f32 %v1260, 0.0
        %1264 = vrot.lane.b32.xlu0 %v1261, 64
        %v1265 = vpop.permute.xlu0 %1264
        %v1267 = vmul.f32 %v1260, %v1265
        %1269 = vrot.lane.b32.xlu0 %v1267, 32
        %v1270 = vpop.permute.xlu0 %1269
        %v1272 = vadd.f32 %v1262, %v1270
        %v1273 = vtanh.pop %v1272
        %1275 = vrot.lane.b32.xlu0 %v1273, 64
        %v1276 = vpop.permute.xlu0 %1275
        %v1278 = vmul.f32 %v1260, %v1276
        %1280 = vrot.lane.b32.xlu0 %v1278, 32
        %v1281 = vpop.permute.xlu0 %1280
        %s1283 = scalar_lea.vmem %s231, 14
        %vm1284 = vcmask 254976
        %1285 = vst.msk [vmem:[%s1283] sm:$0x3] %vm1284, %v1281
        %v1286 = vld [vmem:[#allocation2 + $0xc] sm:$0x3]
        %v1287 = vsel %vm1180, %v1281, 0
        %1289 = vmatprep.subr.mxu0 0.0
        %1290 = vmatpush1.msra.mxu0 0.0
        %1291 = vmatprep.subr.mxu0 0.0
        %1292 = vmatpush1.msra.mxu0 0.0
        %1293 = vmatprep.subr.mxu0 0.0
        %1294 = vmatpush1.msra.mxu0 0.0
        %1295 = vmatprep.subr.mxu0 0.0
        %1296 = vmatpush1.msra.mxu0 0.0
        %1297 = vmatprep.subr.mxu0 0.0
        %1298 = vmatpush1.msra.mxu0 0.0
        %1299 = vmatprep.subr.mxu0 0.0
        %1300 = vmatpush1.msra.mxu0 0.0
        %1301 = vmatprep.subr.mxu0 0.0
        %1302 = vmatpush1.msra.mxu0 0.0
        %1303 = vmatprep.subr.mxu0 0.0
        %1304 = vmatpush1.msra.mxu0 0.0
        %1305 = vmatprep.subr.mxu0 0.0
        %1306 = vmatpush1.msra.mxu0 0.0
        %1307 = vmatprep.subr.mxu0 0.0
        %1308 = vmatpush1.msra.mxu0 0.0
        %1309 = vmatprep.subr.mxu0 0.0
        %1310 = vmatpush1.msra.mxu0 0.0
        %1311 = vmatprep.subr.mxu0 0.0
        %1312 = vmatpush1.msra.mxu0 0.0
        %1313 = vmatprep.subr.mxu0 0.0
        %1314 = vmatpush1.msra.mxu0 %v336
        %1315 = vmatprep.subr.mxu0 0.0
        %1316 = vmatpush1.msra.mxu0 %v335
        %1317 = vmatprep.subr.mxu0 0.0
        %1318 = vmatpush1.msra.mxu0 %v334
        %1319 = vmatprep.subr.mxu0 0.0
        %1320 = vmatpush1.msra.mxu0 %v333
        %1321 = vmatprep.subr.mxu0 0.0
        %1322 = vmatpush2.msra.mxu0 0.0
        %1323 = vmatprep.subr.mxu0 0.0
        %1324 = vmatpush2.msra.mxu0 0.0
        %1325 = vmatprep.subr.mxu0 0.0
        %1326 = vmatpush2.msra.mxu0 0.0
        %1327 = vmatprep.subr.mxu0 0.0
        %1328 = vmatpush2.msra.mxu0 0.0
        %1329 = vmatprep.subr.mxu0 0.0
        %1330 = vmatpush2.msra.mxu0 0.0
        %1331 = vmatprep.subr.mxu0 0.0
        %1332 = vmatpush2.msra.mxu0 0.0
        %1333 = vmatprep.subr.mxu0 0.0
        %1334 = vmatpush2.msra.mxu0 0.0
        %1335 = vmatprep.subr.mxu0 0.0
        %1336 = vmatpush2.msra.mxu0 0.0
        %1337 = vmatprep.subr.mxu0 0.0
        %1338 = vmatpush2.msra.mxu0 0.0
        %1339 = vmatprep.subr.mxu0 0.0
        %1340 = vmatpush2.msra.mxu0 0.0
        %1341 = vmatprep.subr.mxu0 0.0
        %1342 = vmatpush2.msra.mxu0 0.0
        %1343 = vmatprep.subr.mxu0 0.0
        %1344 = vmatpush2.msra.mxu0 0.0
        %1345 = vmatprep.subr.mxu0 0.0
        %1346 = vmatpush2.msra.mxu0 0.0
        %1347 = vmatprep.subr.mxu0 0.0
        %1348 = vmatpush2.msra.mxu0 0.0
        %1349 = vmatprep.subr.mxu0 0.0
        %1350 = vmatpush2.msra.mxu0 0.0
        %1351 = vmatprep.subr.mxu0 0.0
        %1352 = vmatpush2.msra.mxu0 0.0
        %1353 = vmatprep.mubr.f32.mxu0 0.0
        %1354 = vmatmul.mubr.f32.gmra.mxu0 %v1287
        %v1355 = vpop.f32.mrf.mxu0
        %v1356 = vadd.f32 0.0, %v1355
        %v1357 = vpop.f32.mrf.mxu0
        %1358 = vdwg.mxu0
        %v1359 = vadd.f32 %v1286, %v1356
        %v1360 = vxor.u32 %v1359, 2147483648
        %v1361 = vmul.f32 %v1360, 1.442695
        %v1362 = vpow.pop %v1361
        %v1363 = vadd.f32 %v1362, 1.0
        %v1364 = vrcp.pop %v1363
        %v1365 = vmul.f32 1.0, %v1364
        %v1366 = vtanh.pop %v1359
        %v1367 = vmul.f32 %v1365, %v1272
        %1369 = vrot.lane.b32.xlu0 %v1366, 64
        %v1370 = vpop.permute.xlu0 %1369
        %v1372 = vmul.f32 %v1365, %v1370
        %1374 = vrot.lane.b32.xlu0 %v1372, 32
        %v1375 = vpop.permute.xlu0 %1374
        %v1377 = vadd.f32 %v1367, %v1375
        %v1378 = vtanh.pop %v1377
        %1380 = vrot.lane.b32.xlu0 %v1378, 64
        %v1381 = vpop.permute.xlu0 %1380
        %v1383 = vmul.f32 %v1365, %v1381
        %1385 = vrot.lane.b32.xlu0 %v1383, 32
        %v1386 = vpop.permute.xlu0 %1385
        %s1388 = scalar_lea.vmem %s231, 12
        %1389 = vst.msk [vmem:[%s1388] sm:$0x3] %vm1284, %v1386
        %v1390 = vld [vmem:[#allocation2 + $0xa] sm:$0x3]
        %v1391 = vsel %vm1180, %v1386, 0
        %1393 = vmatprep.subr.mxu0 0.0
        %1394 = vmatpush1.msra.mxu0 0.0
        %1395 = vmatprep.subr.mxu0 0.0
        %1396 = vmatpush1.msra.mxu0 0.0
        %1397 = vmatprep.subr.mxu0 0.0
        %1398 = vmatpush1.msra.mxu0 0.0
        %1399 = vmatprep.subr.mxu0 0.0
        %1400 = vmatpush1.msra.mxu0 0.0
        %1401 = vmatprep.subr.mxu0 0.0
        %1402 = vmatpush1.msra.mxu0 0.0
        %1403 = vmatprep.subr.mxu0 0.0
        %1404 = vmatpush1.msra.mxu0 0.0
        %1405 = vmatprep.subr.mxu0 0.0
        %1406 = vmatpush1.msra.mxu0 0.0
        %1407 = vmatprep.subr.mxu0 0.0
        %1408 = vmatpush1.msra.mxu0 0.0
        %1409 = vmatprep.subr.mxu0 0.0
        %1410 = vmatpush1.msra.mxu0 0.0
        %1411 = vmatprep.subr.mxu0 0.0
        %1412 = vmatpush1.msra.mxu0 0.0
        %1413 = vmatprep.subr.mxu0 0.0
        %1414 = vmatpush1.msra.mxu0 0.0
        %1415 = vmatprep.subr.mxu0 0.0
        %1416 = vmatpush1.msra.mxu0 0.0
        %1417 = vmatprep.subr.mxu0 0.0
        %1418 = vmatpush1.msra.mxu0 %v336
        %1419 = vmatprep.subr.mxu0 0.0
        %1420 = vmatpush1.msra.mxu0 %v335
        %1421 = vmatprep.subr.mxu0 0.0
        %1422 = vmatpush1.msra.mxu0 %v334
        %1423 = vmatprep.subr.mxu0 0.0
        %1424 = vmatpush1.msra.mxu0 %v333
        %1425 = vmatprep.subr.mxu0 0.0
        %1426 = vmatpush2.msra.mxu0 0.0
        %1427 = vmatprep.subr.mxu0 0.0
        %1428 = vmatpush2.msra.mxu0 0.0
        %1429 = vmatprep.subr.mxu0 0.0
        %1430 = vmatpush2.msra.mxu0 0.0
        %1431 = vmatprep.subr.mxu0 0.0
        %1432 = vmatpush2.msra.mxu0 0.0
        %1433 = vmatprep.subr.mxu0 0.0
        %1434 = vmatpush2.msra.mxu0 0.0
        %1435 = vmatprep.subr.mxu0 0.0
        %1436 = vmatpush2.msra.mxu0 0.0
        %1437 = vmatprep.subr.mxu0 0.0
        %1438 = vmatpush2.msra.mxu0 0.0
        %1439 = vmatprep.subr.mxu0 0.0
        %1440 = vmatpush2.msra.mxu0 0.0
        %1441 = vmatprep.subr.mxu0 0.0
        %1442 = vmatpush2.msra.mxu0 0.0
        %1443 = vmatprep.subr.mxu0 0.0
        %1444 = vmatpush2.msra.mxu0 0.0
        %1445 = vmatprep.subr.mxu0 0.0
        %1446 = vmatpush2.msra.mxu0 0.0
        %1447 = vmatprep.subr.mxu0 0.0
        %1448 = vmatpush2.msra.mxu0 0.0
        %1449 = vmatprep.subr.mxu0 0.0
        %1450 = vmatpush2.msra.mxu0 0.0
        %1451 = vmatprep.subr.mxu0 0.0
        %1452 = vmatpush2.msra.mxu0 0.0
        %1453 = vmatprep.subr.mxu0 0.0
        %1454 = vmatpush2.msra.mxu0 0.0
        %1455 = vmatprep.subr.mxu0 0.0
        %1456 = vmatpush2.msra.mxu0 0.0
        %1457 = vmatprep.mubr.f32.mxu0 0.0
        %1458 = vmatmul.mubr.f32.gmra.mxu0 %v1391
        %v1459 = vpop.f32.mrf.mxu0
        %v1460 = vadd.f32 0.0, %v1459
        %v1461 = vpop.f32.mrf.mxu0
        %1462 = vdwg.mxu0
        %v1463 = vadd.f32 %v1390, %v1460
        %v1464 = vxor.u32 %v1463, 2147483648
        %v1465 = vmul.f32 %v1464, 1.442695
        %v1466 = vpow.pop %v1465
        %v1467 = vadd.f32 %v1466, 1.0
        %v1468 = vrcp.pop %v1467
        %v1469 = vmul.f32 1.0, %v1468
        %v1470 = vtanh.pop %v1463
        %v1471 = vmul.f32 %v1469, %v1377
        %1473 = vrot.lane.b32.xlu0 %v1470, 64
        %v1474 = vpop.permute.xlu0 %1473
        %v1476 = vmul.f32 %v1469, %v1474
        %1478 = vrot.lane.b32.xlu0 %v1476, 32
        %v1479 = vpop.permute.xlu0 %1478
        %v1481 = vadd.f32 %v1471, %v1479
        %v1482 = vtanh.pop %v1481
        %1484 = vrot.lane.b32.xlu0 %v1482, 64
        %v1485 = vpop.permute.xlu0 %1484
        %v1487 = vmul.f32 %v1469, %v1485
        %1489 = vrot.lane.b32.xlu0 %v1487, 32
        %v1490 = vpop.permute.xlu0 %1489
        %s1492 = scalar_lea.vmem %s231, 10
        %1493 = vst.msk [vmem:[%s1492] sm:$0x3] %vm1284, %v1490
        %v1494 = vld [vmem:[#allocation2 + $0x8] sm:$0x3]
        %v1495 = vsel %vm1180, %v1490, 0
        %1497 = vmatprep.subr.mxu0 0.0
        %1498 = vmatpush1.msra.mxu0 0.0
        %1499 = vmatprep.subr.mxu0 0.0
        %1500 = vmatpush1.msra.mxu0 0.0
        %1501 = vmatprep.subr.mxu0 0.0
        %1502 = vmatpush1.msra.mxu0 0.0
        %1503 = vmatprep.subr.mxu0 0.0
        %1504 = vmatpush1.msra.mxu0 0.0
        %1505 = vmatprep.subr.mxu0 0.0
        %1506 = vmatpush1.msra.mxu0 0.0
        %1507 = vmatprep.subr.mxu0 0.0
        %1508 = vmatpush1.msra.mxu0 0.0
        %1509 = vmatprep.subr.mxu0 0.0
        %1510 = vmatpush1.msra.mxu0 0.0
        %1511 = vmatprep.subr.mxu0 0.0
        %1512 = vmatpush1.msra.mxu0 0.0
        %1513 = vmatprep.subr.mxu0 0.0
        %1514 = vmatpush1.msra.mxu0 0.0
        %1515 = vmatprep.subr.mxu0 0.0
        %1516 = vmatpush1.msra.mxu0 0.0
        %1517 = vmatprep.subr.mxu0 0.0
        %1518 = vmatpush1.msra.mxu0 0.0
        %1519 = vmatprep.subr.mxu0 0.0
        %1520 = vmatpush1.msra.mxu0 0.0
        %1521 = vmatprep.subr.mxu0 0.0
        %1522 = vmatpush1.msra.mxu0 %v336
        %1523 = vmatprep.subr.mxu0 0.0
        %1524 = vmatpush1.msra.mxu0 %v335
        %1525 = vmatprep.subr.mxu0 0.0
        %1526 = vmatpush1.msra.mxu0 %v334
        %1527 = vmatprep.subr.mxu0 0.0
        %1528 = vmatpush1.msra.mxu0 %v333
        %1529 = vmatprep.subr.mxu0 0.0
        %1530 = vmatpush2.msra.mxu0 0.0
        %1531 = vmatprep.subr.mxu0 0.0
        %1532 = vmatpush2.msra.mxu0 0.0
        %1533 = vmatprep.subr.mxu0 0.0
        %1534 = vmatpush2.msra.mxu0 0.0
        %1535 = vmatprep.subr.mxu0 0.0
        %1536 = vmatpush2.msra.mxu0 0.0
        %1537 = vmatprep.subr.mxu0 0.0
        %1538 = vmatpush2.msra.mxu0 0.0
        %1539 = vmatprep.subr.mxu0 0.0
        %1540 = vmatpush2.msra.mxu0 0.0
        %1541 = vmatprep.subr.mxu0 0.0
        %1542 = vmatpush2.msra.mxu0 0.0
        %1543 = vmatprep.subr.mxu0 0.0
        %1544 = vmatpush2.msra.mxu0 0.0
        %1545 = vmatprep.subr.mxu0 0.0
        %1546 = vmatpush2.msra.mxu0 0.0
        %1547 = vmatprep.subr.mxu0 0.0
        %1548 = vmatpush2.msra.mxu0 0.0
        %1549 = vmatprep.subr.mxu0 0.0
        %1550 = vmatpush2.msra.mxu0 0.0
        %1551 = vmatprep.subr.mxu0 0.0
        %1552 = vmatpush2.msra.mxu0 0.0
        %1553 = vmatprep.subr.mxu0 0.0
        %1554 = vmatpush2.msra.mxu0 0.0
        %1555 = vmatprep.subr.mxu0 0.0
        %1556 = vmatpush2.msra.mxu0 0.0
        %1557 = vmatprep.subr.mxu0 0.0
        %1558 = vmatpush2.msra.mxu0 0.0
        %1559 = vmatprep.subr.mxu0 0.0
        %1560 = vmatpush2.msra.mxu0 0.0
        %1561 = vmatprep.mubr.f32.mxu0 0.0
        %1562 = vmatmul.mubr.f32.gmra.mxu0 %v1495
        %v1563 = vpop.f32.mrf.mxu0
        %v1564 = vadd.f32 0.0, %v1563
        %v1565 = vpop.f32.mrf.mxu0
        %1566 = vdwg.mxu0
        %v1567 = vadd.f32 %v1494, %v1564
        %v1568 = vxor.u32 %v1567, 2147483648
        %v1569 = vmul.f32 %v1568, 1.442695
        %v1570 = vpow.pop %v1569
        %v1571 = vadd.f32 %v1570, 1.0
        %v1572 = vrcp.pop %v1571
        %v1573 = vmul.f32 1.0, %v1572
        %v1574 = vtanh.pop %v1567
        %v1575 = vmul.f32 %v1573, %v1481
        %1577 = vrot.lane.b32.xlu0 %v1574, 64
        %v1578 = vpop.permute.xlu0 %1577
        %v1580 = vmul.f32 %v1573, %v1578
        %1582 = vrot.lane.b32.xlu0 %v1580, 32
        %v1583 = vpop.permute.xlu0 %1582
        %v1585 = vadd.f32 %v1575, %v1583
        %v1586 = vtanh.pop %v1585
        %1588 = vrot.lane.b32.xlu0 %v1586, 64
        %v1589 = vpop.permute.xlu0 %1588
        %v1591 = vmul.f32 %v1573, %v1589
        %1593 = vrot.lane.b32.xlu0 %v1591, 32
        %v1594 = vpop.permute.xlu0 %1593
        %s1596 = scalar_lea.vmem %s231, 8
        %1597 = vst.msk [vmem:[%s1596] sm:$0x3] %vm1284, %v1594
        %v1598 = vld [vmem:[#allocation2 + $0x6] sm:$0x3]
        %v1599 = vsel %vm1180, %v1594, 0
        %1601 = vmatprep.subr.mxu0 0.0
        %1602 = vmatpush1.msra.mxu0 0.0
        %1603 = vmatprep.subr.mxu0 0.0
        %1604 = vmatpush1.msra.mxu0 0.0
        %1605 = vmatprep.subr.mxu0 0.0
        %1606 = vmatpush1.msra.mxu0 0.0
        %1607 = vmatprep.subr.mxu0 0.0
        %1608 = vmatpush1.msra.mxu0 0.0
        %1609 = vmatprep.subr.mxu0 0.0
        %1610 = vmatpush1.msra.mxu0 0.0
        %1611 = vmatprep.subr.mxu0 0.0
        %1612 = vmatpush1.msra.mxu0 0.0
        %1613 = vmatprep.subr.mxu0 0.0
        %1614 = vmatpush1.msra.mxu0 0.0
        %1615 = vmatprep.subr.mxu0 0.0
        %1616 = vmatpush1.msra.mxu0 0.0
        %1617 = vmatprep.subr.mxu0 0.0
        %1618 = vmatpush1.msra.mxu0 0.0
        %1619 = vmatprep.subr.mxu0 0.0
        %1620 = vmatpush1.msra.mxu0 0.0
        %1621 = vmatprep.subr.mxu0 0.0
        %1622 = vmatpush1.msra.mxu0 0.0
        %1623 = vmatprep.subr.mxu0 0.0
        %1624 = vmatpush1.msra.mxu0 0.0
        %1625 = vmatprep.subr.mxu0 0.0
        %1626 = vmatpush1.msra.mxu0 %v336
        %1627 = vmatprep.subr.mxu0 0.0
        %1628 = vmatpush1.msra.mxu0 %v335
        %1629 = vmatprep.subr.mxu0 0.0
        %1630 = vmatpush1.msra.mxu0 %v334
        %1631 = vmatprep.subr.mxu0 0.0
        %1632 = vmatpush1.msra.mxu0 %v333
        %1633 = vmatprep.subr.mxu0 0.0
        %1634 = vmatpush2.msra.mxu0 0.0
        %1635 = vmatprep.subr.mxu0 0.0
        %1636 = vmatpush2.msra.mxu0 0.0
        %1637 = vmatprep.subr.mxu0 0.0
        %1638 = vmatpush2.msra.mxu0 0.0
        %1639 = vmatprep.subr.mxu0 0.0
        %1640 = vmatpush2.msra.mxu0 0.0
        %1641 = vmatprep.subr.mxu0 0.0
        %1642 = vmatpush2.msra.mxu0 0.0
        %1643 = vmatprep.subr.mxu0 0.0
        %1644 = vmatpush2.msra.mxu0 0.0
        %1645 = vmatprep.subr.mxu0 0.0
        %1646 = vmatpush2.msra.mxu0 0.0
        %1647 = vmatprep.subr.mxu0 0.0
        %1648 = vmatpush2.msra.mxu0 0.0
        %1649 = vmatprep.subr.mxu0 0.0
        %1650 = vmatpush2.msra.mxu0 0.0
        %1651 = vmatprep.subr.mxu0 0.0
        %1652 = vmatpush2.msra.mxu0 0.0
        %1653 = vmatprep.subr.mxu0 0.0
        %1654 = vmatpush2.msra.mxu0 0.0
        %1655 = vmatprep.subr.mxu0 0.0
        %1656 = vmatpush2.msra.mxu0 0.0
        %1657 = vmatprep.subr.mxu0 0.0
        %1658 = vmatpush2.msra.mxu0 0.0
        %1659 = vmatprep.subr.mxu0 0.0
        %1660 = vmatpush2.msra.mxu0 0.0
        %1661 = vmatprep.subr.mxu0 0.0
        %1662 = vmatpush2.msra.mxu0 0.0
        %1663 = vmatprep.subr.mxu0 0.0
        %1664 = vmatpush2.msra.mxu0 0.0
        %1665 = vmatprep.mubr.f32.mxu0 0.0
        %1666 = vmatmul.mubr.f32.gmra.mxu0 %v1599
        %v1667 = vpop.f32.mrf.mxu0
        %v1668 = vadd.f32 0.0, %v1667
        %v1669 = vpop.f32.mrf.mxu0
        %1670 = vdwg.mxu0
        %v1671 = vadd.f32 %v1598, %v1668
        %v1672 = vxor.u32 %v1671, 2147483648
        %v1673 = vmul.f32 %v1672, 1.442695
        %v1674 = vpow.pop %v1673
        %v1675 = vadd.f32 %v1674, 1.0
        %v1676 = vrcp.pop %v1675
        %v1677 = vmul.f32 1.0, %v1676
        %v1678 = vtanh.pop %v1671
        %v1679 = vmul.f32 %v1677, %v1585
        %1681 = vrot.lane.b32.xlu0 %v1678, 64
        %v1682 = vpop.permute.xlu0 %1681
        %v1684 = vmul.f32 %v1677, %v1682
        %1686 = vrot.lane.b32.xlu0 %v1684, 32
        %v1687 = vpop.permute.xlu0 %1686
        %v1689 = vadd.f32 %v1679, %v1687
        %v1690 = vtanh.pop %v1689
        %1692 = vrot.lane.b32.xlu0 %v1690, 64
        %v1693 = vpop.permute.xlu0 %1692
        %v1695 = vmul.f32 %v1677, %v1693
        %1697 = vrot.lane.b32.xlu0 %v1695, 32
        %v1698 = vpop.permute.xlu0 %1697
        %s1700 = scalar_lea.vmem %s231, 6
        %1701 = vst.msk [vmem:[%s1700] sm:$0x3] %vm1284, %v1698
        %v1702 = vld [vmem:[#allocation2 + $0x4] sm:$0x3]
        %v1703 = vsel %vm1180, %v1698, 0
        %1705 = vmatprep.subr.mxu0 0.0
        %1706 = vmatpush1.msra.mxu0 0.0
        %1707 = vmatprep.subr.mxu0 0.0
        %1708 = vmatpush1.msra.mxu0 0.0
        %1709 = vmatprep.subr.mxu0 0.0
        %1710 = vmatpush1.msra.mxu0 0.0
        %1711 = vmatprep.subr.mxu0 0.0
        %1712 = vmatpush1.msra.mxu0 0.0
        %1713 = vmatprep.subr.mxu0 0.0
        %1714 = vmatpush1.msra.mxu0 0.0
        %1715 = vmatprep.subr.mxu0 0.0
        %1716 = vmatpush1.msra.mxu0 0.0
        %1717 = vmatprep.subr.mxu0 0.0
        %1718 = vmatpush1.msra.mxu0 0.0
        %1719 = vmatprep.subr.mxu0 0.0
        %1720 = vmatpush1.msra.mxu0 0.0
        %1721 = vmatprep.subr.mxu0 0.0
        %1722 = vmatpush1.msra.mxu0 0.0
        %1723 = vmatprep.subr.mxu0 0.0
        %1724 = vmatpush1.msra.mxu0 0.0
        %1725 = vmatprep.subr.mxu0 0.0
        %1726 = vmatpush1.msra.mxu0 0.0
        %1727 = vmatprep.subr.mxu0 0.0
        %1728 = vmatpush1.msra.mxu0 0.0
        %1729 = vmatprep.subr.mxu0 0.0
        %1730 = vmatpush1.msra.mxu0 %v336
        %1731 = vmatprep.subr.mxu0 0.0
        %1732 = vmatpush1.msra.mxu0 %v335
        %1733 = vmatprep.subr.mxu0 0.0
        %1734 = vmatpush1.msra.mxu0 %v334
        %1735 = vmatprep.subr.mxu0 0.0
        %1736 = vmatpush1.msra.mxu0 %v333
        %1737 = vmatprep.subr.mxu0 0.0
        %1738 = vmatpush2.msra.mxu0 0.0
        %1739 = vmatprep.subr.mxu0 0.0
        %1740 = vmatpush2.msra.mxu0 0.0
        %1741 = vmatprep.subr.mxu0 0.0
        %1742 = vmatpush2.msra.mxu0 0.0
        %1743 = vmatprep.subr.mxu0 0.0
        %1744 = vmatpush2.msra.mxu0 0.0
        %1745 = vmatprep.subr.mxu0 0.0
        %1746 = vmatpush2.msra.mxu0 0.0
        %1747 = vmatprep.subr.mxu0 0.0
        %1748 = vmatpush2.msra.mxu0 0.0
        %1749 = vmatprep.subr.mxu0 0.0
        %1750 = vmatpush2.msra.mxu0 0.0
        %1751 = vmatprep.subr.mxu0 0.0
        %1752 = vmatpush2.msra.mxu0 0.0
        %1753 = vmatprep.subr.mxu0 0.0
        %1754 = vmatpush2.msra.mxu0 0.0
        %1755 = vmatprep.subr.mxu0 0.0
        %1756 = vmatpush2.msra.mxu0 0.0
        %1757 = vmatprep.subr.mxu0 0.0
        %1758 = vmatpush2.msra.mxu0 0.0
        %1759 = vmatprep.subr.mxu0 0.0
        %1760 = vmatpush2.msra.mxu0 0.0
        %1761 = vmatprep.subr.mxu0 0.0
        %1762 = vmatpush2.msra.mxu0 0.0
        %1763 = vmatprep.subr.mxu0 0.0
        %1764 = vmatpush2.msra.mxu0 0.0
        %1765 = vmatprep.subr.mxu0 0.0
        %1766 = vmatpush2.msra.mxu0 0.0
        %1767 = vmatprep.subr.mxu0 0.0
        %1768 = vmatpush2.msra.mxu0 0.0
        %1769 = vmatprep.mubr.f32.mxu0 0.0
        %1770 = vmatmul.mubr.f32.gmra.mxu0 %v1703
        %v1771 = vpop.f32.mrf.mxu0
        %v1772 = vadd.f32 0.0, %v1771
        %v1773 = vpop.f32.mrf.mxu0
        %1774 = vdwg.mxu0
        %v1775 = vadd.f32 %v1702, %v1772
        %v1776 = vxor.u32 %v1775, 2147483648
        %v1777 = vmul.f32 %v1776, 1.442695
        %v1778 = vpow.pop %v1777
        %v1779 = vadd.f32 %v1778, 1.0
        %v1780 = vrcp.pop %v1779
        %v1781 = vmul.f32 1.0, %v1780
        %v1782 = vtanh.pop %v1775
        %v1783 = vmul.f32 %v1781, %v1689
        %1785 = vrot.lane.b32.xlu0 %v1782, 64
        %v1786 = vpop.permute.xlu0 %1785
        %v1788 = vmul.f32 %v1781, %v1786
        %1790 = vrot.lane.b32.xlu0 %v1788, 32
        %v1791 = vpop.permute.xlu0 %1790
        %v1793 = vadd.f32 %v1783, %v1791
        %v1794 = vtanh.pop %v1793
        %1796 = vrot.lane.b32.xlu0 %v1794, 64
        %v1797 = vpop.permute.xlu0 %1796
        %v1799 = vmul.f32 %v1781, %v1797
        %1801 = vrot.lane.b32.xlu0 %v1799, 32
        %v1802 = vpop.permute.xlu0 %1801
        %s1804 = scalar_lea.vmem %s231, 4
        %1805 = vst.msk [vmem:[%s1804] sm:$0x3] %vm1284, %v1802
        %v1806 = vld [vmem:[#allocation2 + $0x2] sm:$0x3]
        %v1807 = vsel %vm1180, %v1802, 0
        %1809 = vmatprep.subr.mxu0 0.0
        %1810 = vmatpush1.msra.mxu0 0.0
        %1811 = vmatprep.subr.mxu0 0.0
        %1812 = vmatpush1.msra.mxu0 0.0
        %1813 = vmatprep.subr.mxu0 0.0
        %1814 = vmatpush1.msra.mxu0 0.0
        %1815 = vmatprep.subr.mxu0 0.0
        %1816 = vmatpush1.msra.mxu0 0.0
        %1817 = vmatprep.subr.mxu0 0.0
        %1818 = vmatpush1.msra.mxu0 0.0
        %1819 = vmatprep.subr.mxu0 0.0
        %1820 = vmatpush1.msra.mxu0 0.0
        %1821 = vmatprep.subr.mxu0 0.0
        %1822 = vmatpush1.msra.mxu0 0.0
        %1823 = vmatprep.subr.mxu0 0.0
        %1824 = vmatpush1.msra.mxu0 0.0
        %1825 = vmatprep.subr.mxu0 0.0
        %1826 = vmatpush1.msra.mxu0 0.0
        %1827 = vmatprep.subr.mxu0 0.0
        %1828 = vmatpush1.msra.mxu0 0.0
        %1829 = vmatprep.subr.mxu0 0.0
        %1830 = vmatpush1.msra.mxu0 0.0
        %1831 = vmatprep.subr.mxu0 0.0
        %1832 = vmatpush1.msra.mxu0 0.0
        %1833 = vmatprep.subr.mxu0 0.0
        %1834 = vmatpush1.msra.mxu0 %v336
        %1835 = vmatprep.subr.mxu0 0.0
        %1836 = vmatpush1.msra.mxu0 %v335
        %1837 = vmatprep.subr.mxu0 0.0
        %1838 = vmatpush1.msra.mxu0 %v334
        %1839 = vmatprep.subr.mxu0 0.0
        %1840 = vmatpush1.msra.mxu0 %v333
        %1841 = vmatprep.subr.mxu0 0.0
        %1842 = vmatpush2.msra.mxu0 0.0
        %1843 = vmatprep.subr.mxu0 0.0
        %1844 = vmatpush2.msra.mxu0 0.0
        %1845 = vmatprep.subr.mxu0 0.0
        %1846 = vmatpush2.msra.mxu0 0.0
        %1847 = vmatprep.subr.mxu0 0.0
        %1848 = vmatpush2.msra.mxu0 0.0
        %1849 = vmatprep.subr.mxu0 0.0
        %1850 = vmatpush2.msra.mxu0 0.0
        %1851 = vmatprep.subr.mxu0 0.0
        %1852 = vmatpush2.msra.mxu0 0.0
        %1853 = vmatprep.subr.mxu0 0.0
        %1854 = vmatpush2.msra.mxu0 0.0
        %1855 = vmatprep.subr.mxu0 0.0
        %1856 = vmatpush2.msra.mxu0 0.0
        %1857 = vmatprep.subr.mxu0 0.0
        %1858 = vmatpush2.msra.mxu0 0.0
        %1859 = vmatprep.subr.mxu0 0.0
        %1860 = vmatpush2.msra.mxu0 0.0
        %1861 = vmatprep.subr.mxu0 0.0
        %1862 = vmatpush2.msra.mxu0 0.0
        %1863 = vmatprep.subr.mxu0 0.0
        %1864 = vmatpush2.msra.mxu0 0.0
        %1865 = vmatprep.subr.mxu0 0.0
        %1866 = vmatpush2.msra.mxu0 0.0
        %1867 = vmatprep.subr.mxu0 0.0
        %1868 = vmatpush2.msra.mxu0 0.0
        %1869 = vmatprep.subr.mxu0 0.0
        %1870 = vmatpush2.msra.mxu0 0.0
        %1871 = vmatprep.subr.mxu0 0.0
        %1872 = vmatpush2.msra.mxu0 0.0
        %1873 = vmatprep.mubr.f32.mxu0 0.0
        %1874 = vmatmul.mubr.f32.gmra.mxu0 %v1807
        %v1875 = vpop.f32.mrf.mxu0
        %v1876 = vadd.f32 0.0, %v1875
        %v1877 = vpop.f32.mrf.mxu0
        %1878 = vdwg.mxu0
        %v1879 = vadd.f32 %v1806, %v1876
        %v1880 = vxor.u32 %v1879, 2147483648
        %v1881 = vmul.f32 %v1880, 1.442695
        %v1882 = vpow.pop %v1881
        %v1883 = vadd.f32 %v1882, 1.0
        %v1884 = vrcp.pop %v1883
        %v1885 = vmul.f32 1.0, %v1884
        %v1886 = vtanh.pop %v1879
        %v1887 = vmul.f32 %v1885, %v1793
        %1889 = vrot.lane.b32.xlu0 %v1886, 64
        %v1890 = vpop.permute.xlu0 %1889
        %v1892 = vmul.f32 %v1885, %v1890
        %1894 = vrot.lane.b32.xlu0 %v1892, 32
        %v1895 = vpop.permute.xlu0 %1894
        %v1897 = vadd.f32 %v1887, %v1895
        %v1898 = vtanh.pop %v1897
        %1900 = vrot.lane.b32.xlu0 %v1898, 64
        %v1901 = vpop.permute.xlu0 %1900
        %v1903 = vmul.f32 %v1885, %v1901
        %1905 = vrot.lane.b32.xlu0 %v1903, 32
        %v1906 = vpop.permute.xlu0 %1905
        %s1908 = scalar_lea.vmem %s231, 2
        %1909 = vst.msk [vmem:[%s1908] sm:$0x3] %vm1284, %v1906
        %v1910 = vld [vmem:[#allocation2] sm:$0x3]
        %v1911 = vsel %vm1180, %v1906, 0
        %1913 = vmatprep.subr.mxu0 0.0
        %1914 = vmatpush1.msra.mxu0 0.0
        %1915 = vmatprep.subr.mxu0 0.0
        %1916 = vmatpush1.msra.mxu0 0.0
        %1917 = vmatprep.subr.mxu0 0.0
        %1918 = vmatpush1.msra.mxu0 0.0
        %1919 = vmatprep.subr.mxu0 0.0
        %1920 = vmatpush1.msra.mxu0 0.0
        %1921 = vmatprep.subr.mxu0 0.0
        %1922 = vmatpush1.msra.mxu0 0.0
        %1923 = vmatprep.subr.mxu0 0.0
        %1924 = vmatpush1.msra.mxu0 0.0
        %1925 = vmatprep.subr.mxu0 0.0
        %1926 = vmatpush1.msra.mxu0 0.0
        %1927 = vmatprep.subr.mxu0 0.0
        %1928 = vmatpush1.msra.mxu0 0.0
        %1929 = vmatprep.subr.mxu0 0.0
        %1930 = vmatpush1.msra.mxu0 0.0
        %1931 = vmatprep.subr.mxu0 0.0
        %1932 = vmatpush1.msra.mxu0 0.0
        %1933 = vmatprep.subr.mxu0 0.0
        %1934 = vmatpush1.msra.mxu0 0.0
        %1935 = vmatprep.subr.mxu0 0.0
        %1936 = vmatpush1.msra.mxu0 0.0
        %1937 = vmatprep.subr.mxu0 0.0
        %1938 = vmatpush1.msra.mxu0 %v336
        %1939 = vmatprep.subr.mxu0 0.0
        %1940 = vmatpush1.msra.mxu0 %v335
        %1941 = vmatprep.subr.mxu0 0.0
        %1942 = vmatpush1.msra.mxu0 %v334
        %1943 = vmatprep.subr.mxu0 0.0
        %1944 = vmatpush1.msra.mxu0 %v333
        %1945 = vmatprep.subr.mxu0 0.0
        %1946 = vmatpush2.msra.mxu0 0.0
        %1947 = vmatprep.subr.mxu0 0.0
        %1948 = vmatpush2.msra.mxu0 0.0
        %1949 = vmatprep.subr.mxu0 0.0
        %1950 = vmatpush2.msra.mxu0 0.0
        %1951 = vmatprep.subr.mxu0 0.0
        %1952 = vmatpush2.msra.mxu0 0.0
        %1953 = vmatprep.subr.mxu0 0.0
        %1954 = vmatpush2.msra.mxu0 0.0
        %1955 = vmatprep.subr.mxu0 0.0
        %1956 = vmatpush2.msra.mxu0 0.0
        %1957 = vmatprep.subr.mxu0 0.0
        %1958 = vmatpush2.msra.mxu0 0.0
        %1959 = vmatprep.subr.mxu0 0.0
        %1960 = vmatpush2.msra.mxu0 0.0
        %1961 = vmatprep.subr.mxu0 0.0
        %1962 = vmatpush2.msra.mxu0 0.0
        %1963 = vmatprep.subr.mxu0 0.0
        %1964 = vmatpush2.msra.mxu0 0.0
        %1965 = vmatprep.subr.mxu0 0.0
        %1966 = vmatpush2.msra.mxu0 0.0
        %1967 = vmatprep.subr.mxu0 0.0
        %1968 = vmatpush2.msra.mxu0 0.0
        %1969 = vmatprep.subr.mxu0 0.0
        %1970 = vmatpush2.msra.mxu0 0.0
        %1971 = vmatprep.subr.mxu0 0.0
        %1972 = vmatpush2.msra.mxu0 0.0
        %1973 = vmatprep.subr.mxu0 0.0
        %1974 = vmatpush2.msra.mxu0 0.0
        %1975 = vmatprep.subr.mxu0 0.0
        %1976 = vmatpush2.msra.mxu0 0.0
        %1977 = vmatprep.mubr.f32.mxu0 0.0
        %1978 = vmatmul.mubr.f32.gmra.mxu0 %v1911
        %v1979 = vpop.f32.mrf.mxu0
        %v1980 = vadd.f32 0.0, %v1979
        %v1981 = vpop.f32.mrf.mxu0
        %1982 = vdwg.mxu0
        %v1983 = vadd.f32 %v1910, %v1980
        %v1984 = vxor.u32 %v1983, 2147483648
        %v1985 = vmul.f32 %v1984, 1.442695
        %v1986 = vpow.pop %v1985
        %v1987 = vadd.f32 %v1986, 1.0
        %v1988 = vrcp.pop %v1987
        %v1989 = vmul.f32 1.0, %v1988
        %v1990 = vtanh.pop %v1983
        %v1991 = vmul.f32 %v1989, %v1897
        %1993 = vrot.lane.b32.xlu0 %v1990, 64
        %v1994 = vpop.permute.xlu0 %1993
        %v1996 = vmul.f32 %v1989, %v1994
        %1998 = vrot.lane.b32.xlu0 %v1996, 32
        %v1999 = vpop.permute.xlu0 %1998
        %v2001 = vadd.f32 %v1991, %v1999
        %v2002 = vtanh.pop %v2001
        %2004 = vrot.lane.b32.xlu0 %v2002, 64
        %v2005 = vpop.permute.xlu0 %2004
        %v2007 = vmul.f32 %v1989, %v2005
        %2009 = vrot.lane.b32.xlu0 %v2007, 32
        %v2010 = vpop.permute.xlu0 %2009
        %2012 = vst.msk [vmem:[%s231] sm:$0x3] %vm1284, %v2010
      $region44: #{poem_generator_forward.4} parent=35 // pred_fallthru
        _
      %p2013 = scmp.lt.s32.totalorder %s15, 1
      %s2014 = scalar_select %p2013, %s15, 1
      %s2015 = smul.addr %s2014, 8
      %s2016 = smul.addr %s2015, 2
      %s2017 = scalar_lea.vmem %s4, %s2016
      // Predicated region
      $region45: #{poem_generator_forward.4} parent=35 // pred_check
        %p2018 = pneg %p132
      $region46: #{poem_generator_forward.4} parent=35 // pred_check_branch
        %2020 = sbr.rel (%p2018) target = $region48
      $region47: #{poem_generator_forward.4} parent=35 // pred_region
        _
      $region48: #{poem_generator_forward.4} parent=35 // pred_fallthru
        _
    $region36: #{poem_generator_forward.4} parent=5 // pred_fallthru
      _
    %p2021 = scmp.le.s32.totalorder 2, %s10
    // Predicated region
    $region49: #{poem_generator_forward.4} parent=5 // pred_check
      %p2022 = pneg %p2021
    $region50: #{poem_generator_forward.4} parent=5 // pred_check_branch
      %2024 = sbr.rel (%p2022) target = $region52
    $region51: #{poem_generator_forward.4} parent=5 // pred_region
      %s2025 = ssub.s32 %s10, 2
      // Predicated region
      $region53: #{poem_generator_forward.4} parent=51 // pred_check
        %p2026 = pneg %p138
      $region54: #{poem_generator_forward.4} parent=51 // pred_check_branch
        %2028 = sbr.rel (%p2026) target = $region56
      $region55: #{poem_generator_forward.4} parent=51 // pred_region
        %p2029 = scmp.lt.s32.totalorder %s16, 1
        %s2030 = scalar_select %p2029, %s16, 1
        %s2031 = smul.addr %s2030, 8
        %s2032 = smul.addr %s2031, 2
        %s2033 = scalar_lea.vmem %s4, %s2032
      $region56: #{poem_generator_forward.4} parent=51 // pred_fallthru
        _
    $region52: #{poem_generator_forward.4} parent=5 // pred_fallthru
      _
  $region6: #{poem_generator_forward.4} parent=0 // loop_footer
    %s14 = sadd.s32 1, %s10
  $region7: #{poem_generator_forward.4} parent=0 // loop_footer_branch
    %9 = sbr.rel target = $region3
  $region8: #{poem_generator_forward.4} parent=0 // loop_exit
    _

// kernel: poem_generator_forward.3
$region0: #{poem_generator_forward.3}
  #allocation0 [shape = 'u32[]', space=smem, size = 0x4, offset = 0x4, fixed_abs, tag = 'smem constant byte address 0x4 - core index']
  #allocation1 [shape = 'u32[144,128]{1,0:T(1,128)}', space=vmem, size = 0x12000, scoped, tag = 'internal scratch']
  #allocation2 [shape = 'f32[16,128]{1,0:T(8,128)}', space=vmem, size = 0x2000, scoped, tag = 'scratch operand']
  %s0 = inlined_call_operand.vmem [shape: f32[16,32], index: 0, kind: input, shape index: {}]
  %s1 = inlined_call_operand.vmem [shape: f32[2,32,128], index: 1, kind: input, shape index: {}]
  %s2 = inlined_call_operand.vmem [shape: f32[2,32,128], index: 2, kind: input, shape index: {}]
  %s3 = inlined_call_operand.vmem [shape: f32[2,1,128], index: 3, kind: input, shape index: {}]
  %s4 = inlined_call_operand.vmem [shape: f32[2,8,2,32], index: 4, kind: output, shape index: {}]
  %s5 = sld [smem:[#allocation0]]
  $region57: #{poem_generator_forward.3} parent=0
    _
  %s7 = ssub.s32 1, %s5
  %s8 = scalar_select 0, %s7, %s5
  loop: start=0, step=1, limit=4
  $region2: #{poem_generator_forward.3} parent=0 // loop_pre_header
    _
  $region3: #{poem_generator_forward.3} parent=0 // loop_header
    %s10 = sphi 0, %s14
    %p11 = scmp.ge.s32.totalorder %s10, 4
    %s18 = sphi 0, %s18
    %s20 = sphi 0, %s18
    %s21 = sphi 0, %s20
    %s35 = sphi 0, %s21
    %s41 = sphi 0, %s43
    %s44 = sphi 0, %s41
    %s45 = sphi 0, %s44
    %s61 = sphi 0, %s45
    %s67 = sphi 0, %s69
    %s70 = sphi 0, %s67
    %s71 = sphi 0, %s70
    %s87 = sphi 0, %s71
    %s93 = sphi 0, %s95
    %s96 = sphi 0, %s93
    %s97 = sphi 0, %s96
    %s113 = sphi 0, %s97
    %s119 = sphi 0, %s121
    %s122 = sphi 0, %s119
    %s123 = sphi 0, %s122
    %s139 = sphi 0, %s123
  $region4: #{poem_generator_forward.3} parent=0 // loop_header_branch
    %13 = sbr.rel (%p11) target = $region8
  $region5: #{poem_generator_forward.3} parent=0 // loop_body
    %s15 = ssub.s32 %s10, 1
    %s16 = ssub.s32 %s10, 2
    %s17 = sadd.s32 %s10, 1
    %s19 = sadd.s32 %s18, 1
    %p22 = scmp.eq.s32.totalorder %s10, 1
    %p23 = scmp.ne.s32.totalorder %s18, %s20
    %p24 = scmp.eq.s32.totalorder %s10, 0
    %p25 = por %p23, %p24
    %p26 = scmp.ne.s32.totalorder %s18, %s20
    %p27 = scmp.eq.s32.totalorder %s15, 1
    %p28 = por %p26, %p27
    %p29 = scmp.ne.s32.totalorder %s20, %s21
    %p30 = scmp.eq.s32.totalorder %s15, 0
    %p31 = por %p29, %p30
    %p32 = scmp.ne.s32.totalorder %s20, %s21
    %p33 = scmp.eq.s32.totalorder %s16, 1
    %p34 = por %p32, %p33
    %p36 = scmp.ne.s32.totalorder %s21, %s35
    %p37 = scmp.eq.s32.totalorder %s16, 0
    %p38 = por %p36, %p37
    %s39 = ssub.s32 %s10, %s17
    %p40 = scmp.eq.s32.totalorder %s39, 0
    %s42 = sadd.s32 %s41, 1
    %s43 = scalar_select %p40, %s41, %s42
    %p46 = pneg %p40
    %p47 = scmp.eq.s32.totalorder %s10, 1
    %p48 = por %p46, %p47
    %p49 = scmp.ne.s32.totalorder %s41, %s44
    %p50 = scmp.eq.s32.totalorder %s10, 0
    %p51 = por %p49, %p50
    %p52 = scmp.ne.s32.totalorder %s41, %s44
    %p53 = scmp.eq.s32.totalorder %s15, 1
    %p54 = por %p52, %p53
    %p55 = scmp.ne.s32.totalorder %s44, %s45
    %p56 = scmp.eq.s32.totalorder %s15, 0
    %p57 = por %p55, %p56
    %p58 = scmp.ne.s32.totalorder %s44, %s45
    %p59 = scmp.eq.s32.totalorder %s16, 1
    %p60 = por %p58, %p59
    %p62 = scmp.ne.s32.totalorder %s45, %s61
    %p63 = scmp.eq.s32.totalorder %s16, 0
    %p64 = por %p62, %p63
    %s65 = ssub.s32 %s10, %s17
    %p66 = scmp.eq.s32.totalorder %s65, 0
    %s68 = sadd.s32 %s67, 1
    %s69 = scalar_select %p66, %s67, %s68
    %p72 = pneg %p66
    %p73 = scmp.eq.s32.totalorder %s10, 1
    %p74 = por %p72, %p73
    %p75 = scmp.ne.s32.totalorder %s67, %s70
    %p76 = scmp.eq.s32.totalorder %s10, 0
    %p77 = por %p75, %p76
    %p78 = scmp.ne.s32.totalorder %s67, %s70
    %p79 = scmp.eq.s32.totalorder %s15, 1
    %p80 = por %p78, %p79
    %p81 = scmp.ne.s32.totalorder %s70, %s71
    %p82 = scmp.eq.s32.totalorder %s15, 0
    %p83 = por %p81, %p82
    %p84 = scmp.ne.s32.totalorder %s70, %s71
    %p85 = scmp.eq.s32.totalorder %s16, 1
    %p86 = por %p84, %p85
    %p88 = scmp.ne.s32.totalorder %s71, %s87
    %p89 = scmp.eq.s32.totalorder %s16, 0
    %p90 = por %p88, %p89
    %s91 = ssub.s32 %s10, %s17
    %p92 = scmp.eq.s32.totalorder %s91, 0
    %s94 = sadd.s32 %s93, 1
    %s95 = scalar_select %p92, %s93, %s94
    %p98 = pneg %p92
    %p99 = scmp.eq.s32.totalorder %s10, 1
    %p100 = por %p98, %p99
    %p101 = scmp.ne.s32.totalorder %s93, %s96
    %p102 = scmp.eq.s32.totalorder %s10, 0
    %p103 = por %p101, %p102
    %p104 = scmp.ne.s32.totalorder %s93, %s96
    %p105 = scmp.eq.s32.totalorder %s15, 1
    %p106 = por %p104, %p105
    %p107 = scmp.ne.s32.totalorder %s96, %s97
    %p108 = scmp.eq.s32.totalorder %s15, 0
    %p109 = por %p107, %p108
    %p110 = scmp.ne.s32.totalorder %s96, %s97
    %p111 = scmp.eq.s32.totalorder %s16, 1
    %p112 = por %p110, %p111
    %p114 = scmp.ne.s32.totalorder %s97, %s113
    %p115 = scmp.eq.s32.totalorder %s16, 0
    %p116 = por %p114, %p115
    %s117 = ssub.s32 %s10, %s17
    %p118 = scmp.eq.s32.totalorder %s117, 0
    %s120 = sadd.s32 %s119, 1
    %s121 = scalar_select %p118, %s119, %s120
    %p124 = pneg %p118
    %p125 = scmp.eq.s32.totalorder %s10, 1
    %p126 = por %p124, %p125
    %p127 = scmp.ne.s32.totalorder %s119, %s122
    %p128 = scmp.eq.s32.totalorder %s10, 0
    %p129 = por %p127, %p128
    %p130 = scmp.ne.s32.totalorder %s119, %s122
    %p131 = scmp.eq.s32.totalorder %s15, 1
    %p132 = por %p130, %p131
    %p133 = scmp.ne.s32.totalorder %s122, %s123
    %p134 = scmp.eq.s32.totalorder %s15, 0
    %p135 = por %p133, %p134
    %p136 = scmp.ne.s32.totalorder %s122, %s123
    %p137 = scmp.eq.s32.totalorder %s16, 1
    %p138 = por %p136, %p137
    %p140 = scmp.ne.s32.totalorder %s123, %s139
    %p141 = scmp.eq.s32.totalorder %s16, 0
    %p142 = por %p140, %p141
    %p143 = scmp.le.s32.totalorder 1, %s10
    %p144 = scmp.lt.s32.totalorder %s10, 3
    %p145 = pnand %p143, %p144
    %p146 = pneg %p145
    // Predicated region
    $region9: #{poem_generator_forward.3} parent=5 // pred_check
      _
    $region10: #{poem_generator_forward.3} parent=5 // pred_check_branch
      %148 = sbr.rel (%p145) target = $region12
    $region11: #{poem_generator_forward.3} parent=5 // pred_region
      %s149 = ssub.s32 %s10, 1
      // Predicated region
      $region13: #{poem_generator_forward.3} parent=11 // pred_check
        %p150 = pneg %p31
      $region14: #{poem_generator_forward.3} parent=11 // pred_check_branch
        %152 = sbr.rel (%p150) target = $region16
      $region15: #{poem_generator_forward.3} parent=11 // pred_region
        _
      $region16: #{poem_generator_forward.3} parent=11 // pred_fallthru
        _
    $region12: #{poem_generator_forward.3} parent=5 // pred_fallthru
      _
    %p153 = scmp.lt.s32.totalorder %s10, 2
    // Predicated region
    $region17: #{poem_generator_forward.3} parent=5 // pred_check
      %p154 = pneg %p153
    $region18: #{poem_generator_forward.3} parent=5 // pred_check_branch
      %156 = sbr.rel (%p154) target = $region20
    $region19: #{poem_generator_forward.3} parent=5 // pred_region
      // Predicated region
      $region21: #{poem_generator_forward.3} parent=19 // pred_check
        %p157 = pneg %p51
      $region22: #{poem_generator_forward.3} parent=19 // pred_check_branch
        %159 = sbr.rel (%p157) target = $region24
      $region23: #{poem_generator_forward.3} parent=19 // pred_region
        %p160 = scmp.lt.s32.totalorder %s10, 1
        %s161 = scalar_select %p160, %s10, 1
        %s162 = smul.addr %s161, 4
        %s163 = smul.addr %s162, 8
        %s164 = scalar_lea.vmem %s1, %s163
      $region24: #{poem_generator_forward.3} parent=19 // pred_fallthru
        _
      // Predicated region
      $region25: #{poem_generator_forward.3} parent=19 // pred_check
        %p165 = pneg %p77
      $region26: #{poem_generator_forward.3} parent=19 // pred_check_branch
        %167 = sbr.rel (%p165) target = $region28
      $region27: #{poem_generator_forward.3} parent=19 // pred_region
        %p168 = scmp.lt.s32.totalorder %s10, 1
        %s169 = scalar_select %p168, %s10, 1
        %s170 = smul.addr %s169, 4
        %s171 = smul.addr %s170, 8
        %s172 = scalar_lea.vmem %s2, %s171
      $region28: #{poem_generator_forward.3} parent=19 // pred_fallthru
        _
      // Predicated region
      $region29: #{poem_generator_forward.3} parent=19 // pred_check
        %p173 = pneg %p103
      $region30: #{poem_generator_forward.3} parent=19 // pred_check_branch
        %175 = sbr.rel (%p173) target = $region32
      $region31: #{poem_generator_forward.3} parent=19 // pred_region
        %p176 = scmp.lt.s32.totalorder %s10, 1
        %s177 = scalar_select %p176, %s10, 1
        %s178 = scalar_lea.vmem %s3, %s177
      $region32: #{poem_generator_forward.3} parent=19 // pred_fallthru
        _
    $region20: #{poem_generator_forward.3} parent=5 // pred_fallthru
      _
    %p179 = scmp.le.s32.totalorder 1, %s10
    %p180 = scmp.lt.s32.totalorder %s10, 3
    %p181 = pnand %p179, %p180
    %p182 = pneg %p181
    // Predicated region
    $region33: #{poem_generator_forward.3} parent=5 // pred_check
      _
    $region34: #{poem_generator_forward.3} parent=5 // pred_check_branch
      %184 = sbr.rel (%p181) target = $region36
    $region35: #{poem_generator_forward.3} parent=5 // pred_region
      %s185 = ssub.s32 %s10, 1
      %p186 = pneg %p31
      %p187 = pneg %p28
      %p188 = scmp.lt.s32.totalorder %s15, 1
      %s189 = scalar_select %p188, %s15, 1
      %s190 = smul.addr %s189, 4
      %s191 = smul.addr %s190, 8
      %s192 = scalar_lea.vmem %s1, %s191
      %p193 = pneg %p57
      %p194 = pneg %p54
      %p195 = scmp.lt.s32.totalorder %s15, 1
      %s196 = scalar_select %p195, %s15, 1
      %s197 = smul.addr %s196, 4
      %s198 = smul.addr %s197, 8
      %s199 = scalar_lea.vmem %s2, %s198
      %p200 = pneg %p83
      %p201 = pneg %p80
      %p202 = scmp.lt.s32.totalorder %s15, 1
      %s203 = scalar_select %p202, %s15, 1
      %s204 = scalar_lea.vmem %s3, %s203
      %p205 = pneg %p109
      %p206 = pneg %p106
      %p207 = pneg %p135
      %p208 = pneg %p132
      %p209 = scmp.lt.s32.totalorder %s15, 1
      %s210 = scalar_select %p209, %s15, 1
      %s211 = smul.addr %s210, 8
      %s212 = smul.addr %s211, 2
      %s213 = scalar_lea.vmem %s4, %s212
      %p214 = scmp.lt.s32.totalorder %s15, 1
      %s215 = scalar_select %p214, %s15, 1
      %s216 = smul.addr %s215, 4
      %s217 = smul.addr %s216, 8
      %s218 = scalar_lea.vmem %s1, %s217
      %p219 = scmp.lt.s32.totalorder %s15, 1
      %s220 = scalar_select %p219, %s15, 1
      %s221 = smul.addr %s220, 4
      %s222 = smul.addr %s221, 8
      %s223 = scalar_lea.vmem %s2, %s222
      %p224 = scmp.lt.s32.totalorder %s15, 1
      %s225 = scalar_select %p224, %s15, 1
      %s226 = scalar_lea.vmem %s3, %s225
      %p227 = scmp.lt.s32.totalorder %s15, 1
      %s228 = scalar_select %p227, %s15, 1
      %s229 = smul.addr %s228, 8
      %s230 = smul.addr %s229, 2
      %s231 = scalar_lea.vmem %s4, %s230
      %v232 = vld [vmem:[%s0] sm:$0xff]
      %v233 = vld [vmem:[%s0 + $0x8] sm:$0xff]
      %v234 = vld [vmem:[%s218] sm:$0xff]
      %v235 = vld [vmem:[%s218 + $0x8] sm:$0xff]
      %v236 = vld [vmem:[%s218 + $0x10] sm:$0xff]
      %v237 = vld [vmem:[%s218 + $0x18] sm:$0xff]
      %v238 = vld [vmem:[%s226] sm:$0x1]
      %v240 = vlaneseq
      %v241 = vshrl.u32 %v240, 7
      %v242 = vsub.s32 0, %v241
      %v243 = vrot.slane %v238, %v242
      %vm245 = vcmask 261120
      %v247 = vsel %vm245, %v232, 0
      %v250 = vsel %vm245, %v233, 0
      %252 = vmatprep.subr.mxu0 0.0
      %253 = vmatpush1.msra.mxu0 0.0
      %254 = vmatprep.subr.mxu0 0.0
      %255 = vmatpush1.msra.mxu0 0.0
      %256 = vmatprep.subr.mxu0 0.0
      %257 = vmatpush1.msra.mxu0 0.0
      %258 = vmatprep.subr.mxu0 0.0
      %259 = vmatpush1.msra.mxu0 0.0
      %260 = vmatprep.subr.mxu0 0.0
      %261 = vmatpush1.msra.mxu0 0.0
      %262 = vmatprep.subr.mxu0 0.0
      %263 = vmatpush1.msra.mxu0 0.0
      %264 = vmatprep.subr.mxu0 0.0
      %265 = vmatpush1.msra.mxu0 0.0
      %266 = vmatprep.subr.mxu0 0.0
      %267 = vmatpush1.msra.mxu0 0.0
      %268 = vmatprep.subr.mxu0 0.0
      %269 = vmatpush1.msra.mxu0 0.0
      %270 = vmatprep.subr.mxu0 0.0
      %271 = vmatpush1.msra.mxu0 0.0
      %272 = vmatprep.subr.mxu0 0.0
      %273 = vmatpush1.msra.mxu0 0.0
      %274 = vmatprep.subr.mxu0 0.0
      %275 = vmatpush1.msra.mxu0 0.0
      %276 = vmatprep.subr.mxu0 0.0
      %277 = vmatpush1.msra.mxu0 %v237
      %278 = vmatprep.subr.mxu0 0.0
      %279 = vmatpush1.msra.mxu0 %v236
      %280 = vmatprep.subr.mxu0 0.0
      %281 = vmatpush1.msra.mxu0 %v235
      %282 = vmatprep.subr.mxu0 0.0
      %283 = vmatpush1.msra.mxu0 %v234
      %284 = vmatprep.subr.mxu0 0.0
      %285 = vmatpush2.msra.mxu0 0.0
      %286 = vmatprep.subr.mxu0 0.0
      %287 = vmatpush2.msra.mxu0 0.0
      %288 = vmatprep.subr.mxu0 0.0
      %289 = vmatpush2.msra.mxu0 0.0
      %290 = vmatprep.subr.mxu0 0.0
      %291 = vmatpush2.msra.mxu0 0.0
      %292 = vmatprep.subr.mxu0 0.0
      %293 = vmatpush2.msra.mxu0 0.0
      %294 = vmatprep.subr.mxu0 0.0
      %295 = vmatpush2.msra.mxu0 0.0
      %296 = vmatprep.subr.mxu0 0.0
      %297 = vmatpush2.msra.mxu0 0.0
      %298 = vmatprep.subr.mxu0 0.0
      %299 = vmatpush2.msra.mxu0 0.0
      %300 = vmatprep.subr.mxu0 0.0
      %301 = vmatpush2.msra.mxu0 0.0
      %302 = vmatprep.subr.mxu0 0.0
      %303 = vmatpush2.msra.mxu0 0.0
      %304 = vmatprep.subr.mxu0 0.0
      %305 = vmatpush2.msra.mxu0 0.0
      %306 = vmatprep.subr.mxu0 0.0
      %307 = vmatpush2.msra.mxu0 0.0
      %308 = vmatprep.subr.mxu0 0.0
      %309 = vmatpush2.msra.mxu0 0.0
      %310 = vmatprep.subr.mxu0 0.0
      %311 = vmatpush2.msra.mxu0 0.0
      %312 = vmatprep.subr.mxu0 0.0
      %313 = vmatpush2.msra.mxu0 0.0
      %314 = vmatprep.subr.mxu0 0.0
      %315 = vmatpush2.msra.mxu0 0.0
      %316 = vmatprep.mubr.f32.mxu0 0.0
      %317 = vmatmul.mubr.f32.gmra.mxu0 %v247
      %v318 = vpop.f32.mrf.mxu0
      %v319 = vadd.f32 %v243, %v318
      %v320 = vpop.f32.mrf.mxu0
      %321 = vmatprep.mubr.f32.mxu0 0.0
      %322 = vmatmul.mubr.f32.gmra.mxu0 %v250
      %v323 = vpop.f32.mrf.mxu0
      %v324 = vadd.f32 %v243, %v323
      %v325 = vpop.f32.mrf.mxu0
      %326 = vdwg.mxu0
      %327 = vst [vmem:[#allocation2] sm:$0xff] %v319
      %328 = vst [vmem:[#allocation2 + $0x8] sm:$0xff] %v324
      %v329 = vld [vmem:[%s223] sm:$0xff]
      %v330 = vld [vmem:[%s223 + $0x8] sm:$0xff]
      %v331 = vld [vmem:[%s223 + $0x10] sm:$0xff]
      %v332 = vld [vmem:[%s223 + $0x18] sm:$0xff]
      %p333 = scmp.eq.s32.totalorder %s15, 0
      // Predicated region
      $region37: #{poem_generator_forward.3} parent=35 // pred_check
        %p334 = pneg %p333
      $region38: #{poem_generator_forward.3} parent=35 // pred_check_branch
        %336 = sbr.rel (%p334) target = $region40
      $region39: #{poem_generator_forward.3} parent=35 // pred_region
        %v337 = vld [vmem:[#allocation2] sm:$0x3]
        %v339 = vsel %vm245, 0.0, 0
        %341 = vmatprep.subr.mxu0 0.0
        %342 = vmatpush1.msra.mxu0 0.0
        %343 = vmatprep.subr.mxu0 0.0
        %344 = vmatpush1.msra.mxu0 0.0
        %345 = vmatprep.subr.mxu0 0.0
        %346 = vmatpush1.msra.mxu0 0.0
        %347 = vmatprep.subr.mxu0 0.0
        %348 = vmatpush1.msra.mxu0 0.0
        %349 = vmatprep.subr.mxu0 0.0
        %350 = vmatpush1.msra.mxu0 0.0
        %351 = vmatprep.subr.mxu0 0.0
        %352 = vmatpush1.msra.mxu0 0.0
        %353 = vmatprep.subr.mxu0 0.0
        %354 = vmatpush1.msra.mxu0 0.0
        %355 = vmatprep.subr.mxu0 0.0
        %356 = vmatpush1.msra.mxu0 0.0
        %357 = vmatprep.subr.mxu0 0.0
        %358 = vmatpush1.msra.mxu0 0.0
        %359 = vmatprep.subr.mxu0 0.0
        %360 = vmatpush1.msra.mxu0 0.0
        %361 = vmatprep.subr.mxu0 0.0
        %362 = vmatpush1.msra.mxu0 0.0
        %363 = vmatprep.subr.mxu0 0.0
        %364 = vmatpush1.msra.mxu0 0.0
        %365 = vmatprep.subr.mxu0 0.0
        %366 = vmatpush1.msra.mxu0 %v332
        %367 = vmatprep.subr.mxu0 0.0
        %368 = vmatpush1.msra.mxu0 %v331
        %369 = vmatprep.subr.mxu0 0.0
        %370 = vmatpush1.msra.mxu0 %v330
        %371 = vmatprep.subr.mxu0 0.0
        %372 = vmatpush1.msra.mxu0 %v329
        %373 = vmatprep.subr.mxu0 0.0
        %374 = vmatpush2.msra.mxu0 0.0
        %375 = vmatprep.subr.mxu0 0.0
        %376 = vmatpush2.msra.mxu0 0.0
        %377 = vmatprep.subr.mxu0 0.0
        %378 = vmatpush2.msra.mxu0 0.0
        %379 = vmatprep.subr.mxu0 0.0
        %380 = vmatpush2.msra.mxu0 0.0
        %381 = vmatprep.subr.mxu0 0.0
        %382 = vmatpush2.msra.mxu0 0.0
        %383 = vmatprep.subr.mxu0 0.0
        %384 = vmatpush2.msra.mxu0 0.0
        %385 = vmatprep.subr.mxu0 0.0
        %386 = vmatpush2.msra.mxu0 0.0
        %387 = vmatprep.subr.mxu0 0.0
        %388 = vmatpush2.msra.mxu0 0.0
        %389 = vmatprep.subr.mxu0 0.0
        %390 = vmatpush2.msra.mxu0 0.0
        %391 = vmatprep.subr.mxu0 0.0
        %392 = vmatpush2.msra.mxu0 0.0
        %393 = vmatprep.subr.mxu0 0.0
        %394 = vmatpush2.msra.mxu0 0.0
        %395 = vmatprep.subr.mxu0 0.0
        %396 = vmatpush2.msra.mxu0 0.0
        %397 = vmatprep.subr.mxu0 0.0
        %398 = vmatpush2.msra.mxu0 0.0
        %399 = vmatprep.subr.mxu0 0.0
        %400 = vmatpush2.msra.mxu0 0.0
        %401 = vmatprep.subr.mxu0 0.0
        %402 = vmatpush2.msra.mxu0 0.0
        %403 = vmatprep.subr.mxu0 0.0
        %404 = vmatpush2.msra.mxu0 0.0
        %405 = vmatprep.mubr.f32.mxu0 0.0
        %406 = vmatmul.mubr.f32.gmra.mxu0 %v339
        %v407 = vpop.f32.mrf.mxu0
        %v408 = vadd.f32 0.0, %v407
        %v409 = vpop.f32.mrf.mxu0
        %410 = vdwg.mxu0
        %v411 = vadd.f32 %v337, %v408
        %v412 = vxor.u32 %v411, 2147483648
        %v413 = vmul.f32 %v412, 1.442695
        %v414 = vpow.pop %v413
        %v415 = vadd.f32 %v414, 1.0
        %v416 = vrcp.pop %v415
        %v417 = vmul.f32 1.0, %v416
        %v418 = vtanh.pop %v411
        %v419 = vmul.f32 %v417, 0.0
        %421 = vrot.lane.b32.xlu0 %v418, 64
        %v422 = vpop.permute.xlu0 %421
        %v424 = vmul.f32 %v417, %v422
        %426 = vrot.lane.b32.xlu0 %v424, 32
        %v427 = vpop.permute.xlu0 %426
        %v429 = vadd.f32 %v419, %v427
        %v430 = vtanh.pop %v429
        %432 = vrot.lane.b32.xlu0 %v430, 64
        %v433 = vpop.permute.xlu0 %432
        %v435 = vmul.f32 %v417, %v433
        %437 = vrot.lane.b32.xlu0 %v435, 32
        %v438 = vpop.permute.xlu0 %437
        %vm440 = vcmask 254976
        %441 = vst.msk [vmem:[%s231] sm:$0x3] %vm440, %v438
        %v442 = vld [vmem:[#allocation2 + $0x2] sm:$0x3]
        %v443 = vsel %vm245, %v438, 0
        %445 = vmatprep.subr.mxu0 0.0
        %446 = vmatpush1.msra.mxu0 0.0
        %447 = vmatprep.subr.mxu0 0.0
        %448 = vmatpush1.msra.mxu0 0.0
        %449 = vmatprep.subr.mxu0 0.0
        %450 = vmatpush1.msra.mxu0 0.0
        %451 = vmatprep.subr.mxu0 0.0
        %452 = vmatpush1.msra.mxu0 0.0
        %453 = vmatprep.subr.mxu0 0.0
        %454 = vmatpush1.msra.mxu0 0.0
        %455 = vmatprep.subr.mxu0 0.0
        %456 = vmatpush1.msra.mxu0 0.0
        %457 = vmatprep.subr.mxu0 0.0
        %458 = vmatpush1.msra.mxu0 0.0
        %459 = vmatprep.subr.mxu0 0.0
        %460 = vmatpush1.msra.mxu0 0.0
        %461 = vmatprep.subr.mxu0 0.0
        %462 = vmatpush1.msra.mxu0 0.0
        %463 = vmatprep.subr.mxu0 0.0
        %464 = vmatpush1.msra.mxu0 0.0
        %465 = vmatprep.subr.mxu0 0.0
        %466 = vmatpush1.msra.mxu0 0.0
        %467 = vmatprep.subr.mxu0 0.0
        %468 = vmatpush1.msra.mxu0 0.0
        %469 = vmatprep.subr.mxu0 0.0
        %470 = vmatpush1.msra.mxu0 %v332
        %471 = vmatprep.subr.mxu0 0.0
        %472 = vmatpush1.msra.mxu0 %v331
        %473 = vmatprep.subr.mxu0 0.0
        %474 = vmatpush1.msra.mxu0 %v330
        %475 = vmatprep.subr.mxu0 0.0
        %476 = vmatpush1.msra.mxu0 %v329
        %477 = vmatprep.subr.mxu0 0.0
        %478 = vmatpush2.msra.mxu0 0.0
        %479 = vmatprep.subr.mxu0 0.0
        %480 = vmatpush2.msra.mxu0 0.0
        %481 = vmatprep.subr.mxu0 0.0
        %482 = vmatpush2.msra.mxu0 0.0
        %483 = vmatprep.subr.mxu0 0.0
        %484 = vmatpush2.msra.mxu0 0.0
        %485 = vmatprep.subr.mxu0 0.0
        %486 = vmatpush2.msra.mxu0 0.0
        %487 = vmatprep.subr.mxu0 0.0
        %488 = vmatpush2.msra.mxu0 0.0
        %489 = vmatprep.subr.mxu0 0.0
        %490 = vmatpush2.msra.mxu0 0.0
        %491 = vmatprep.subr.mxu0 0.0
        %492 = vmatpush2.msra.mxu0 0.0
        %493 = vmatprep.subr.mxu0 0.0
        %494 = vmatpush2.msra.mxu0 0.0
        %495 = vmatprep.subr.mxu0 0.0
        %496 = vmatpush2.msra.mxu0 0.0
        %497 = vmatprep.subr.mxu0 0.0
        %498 = vmatpush2.msra.mxu0 0.0
        %499 = vmatprep.subr.mxu0 0.0
        %500 = vmatpush2.msra.mxu0 0.0
        %501 = vmatprep.subr.mxu0 0.0
        %502 = vmatpush2.msra.mxu0 0.0
        %503 = vmatprep.subr.mxu0 0.0
        %504 = vmatpush2.msra.mxu0 0.0
        %505 = vmatprep.subr.mxu0 0.0
        %506 = vmatpush2.msra.mxu0 0.0
        %507 = vmatprep.subr.mxu0 0.0
        %508 = vmatpush2.msra.mxu0 0.0
        %509 = vmatprep.mubr.f32.mxu0 0.0
        %510 = vmatmul.mubr.f32.gmra.mxu0 %v443
        %v511 = vpop.f32.mrf.mxu0
        %v512 = vadd.f32 0.0, %v511
        %v513 = vpop.f32.mrf.mxu0
        %514 = vdwg.mxu0
        %v515 = vadd.f32 %v442, %v512
        %v516 = vxor.u32 %v515, 2147483648
        %v517 = vmul.f32 %v516, 1.442695
        %v518 = vpow.pop %v517
        %v519 = vadd.f32 %v518, 1.0
        %v520 = vrcp.pop %v519
        %v521 = vmul.f32 1.0, %v520
        %v522 = vtanh.pop %v515
        %v523 = vmul.f32 %v521, %v429
        %525 = vrot.lane.b32.xlu0 %v522, 64
        %v526 = vpop.permute.xlu0 %525
        %v528 = vmul.f32 %v521, %v526
        %530 = vrot.lane.b32.xlu0 %v528, 32
        %v531 = vpop.permute.xlu0 %530
        %v533 = vadd.f32 %v523, %v531
        %v534 = vtanh.pop %v533
        %536 = vrot.lane.b32.xlu0 %v534, 64
        %v537 = vpop.permute.xlu0 %536
        %v539 = vmul.f32 %v521, %v537
        %541 = vrot.lane.b32.xlu0 %v539, 32
        %v542 = vpop.permute.xlu0 %541
        %s544 = scalar_lea.vmem %s231, 2
        %545 = vst.msk [vmem:[%s544] sm:$0x3] %vm440, %v542
        %v546 = vld [vmem:[#allocation2 + $0x4] sm:$0x3]
        %v547 = vsel %vm245, %v542, 0
        %549 = vmatprep.subr.mxu0 0.0
        %550 = vmatpush1.msra.mxu0 0.0
        %551 = vmatprep.subr.mxu0 0.0
        %552 = vmatpush1.msra.mxu0 0.0
        %553 = vmatprep.subr.mxu0 0.0
        %554 = vmatpush1.msra.mxu0 0.0
        %555 = vmatprep.subr.mxu0 0.0
        %556 = vmatpush1.msra.mxu0 0.0
        %557 = vmatprep.subr.mxu0 0.0
        %558 = vmatpush1.msra.mxu0 0.0
        %559 = vmatprep.subr.mxu0 0.0
        %560 = vmatpush1.msra.mxu0 0.0
        %561 = vmatprep.subr.mxu0 0.0
        %562 = vmatpush1.msra.mxu0 0.0
        %563 = vmatprep.subr.mxu0 0.0
        %564 = vmatpush1.msra.mxu0 0.0
        %565 = vmatprep.subr.mxu0 0.0
        %566 = vmatpush1.msra.mxu0 0.0
        %567 = vmatprep.subr.mxu0 0.0
        %568 = vmatpush1.msra.mxu0 0.0
        %569 = vmatprep.subr.mxu0 0.0
        %570 = vmatpush1.msra.mxu0 0.0
        %571 = vmatprep.subr.mxu0 0.0
        %572 = vmatpush1.msra.mxu0 0.0
        %573 = vmatprep.subr.mxu0 0.0
        %574 = vmatpush1.msra.mxu0 %v332
        %575 = vmatprep.subr.mxu0 0.0
        %576 = vmatpush1.msra.mxu0 %v331
        %577 = vmatprep.subr.mxu0 0.0
        %578 = vmatpush1.msra.mxu0 %v330
        %579 = vmatprep.subr.mxu0 0.0
        %580 = vmatpush1.msra.mxu0 %v329
        %581 = vmatprep.subr.mxu0 0.0
        %582 = vmatpush2.msra.mxu0 0.0
        %583 = vmatprep.subr.mxu0 0.0
        %584 = vmatpush2.msra.mxu0 0.0
        %585 = vmatprep.subr.mxu0 0.0
        %586 = vmatpush2.msra.mxu0 0.0
        %587 = vmatprep.subr.mxu0 0.0
        %588 = vmatpush2.msra.mxu0 0.0
        %589 = vmatprep.subr.mxu0 0.0
        %590 = vmatpush2.msra.mxu0 0.0
        %591 = vmatprep.subr.mxu0 0.0
        %592 = vmatpush2.msra.mxu0 0.0
        %593 = vmatprep.subr.mxu0 0.0
        %594 = vmatpush2.msra.mxu0 0.0
        %595 = vmatprep.subr.mxu0 0.0
        %596 = vmatpush2.msra.mxu0 0.0
        %597 = vmatprep.subr.mxu0 0.0
        %598 = vmatpush2.msra.mxu0 0.0
        %599 = vmatprep.subr.mxu0 0.0
        %600 = vmatpush2.msra.mxu0 0.0
        %601 = vmatprep.subr.mxu0 0.0
        %602 = vmatpush2.msra.mxu0 0.0
        %603 = vmatprep.subr.mxu0 0.0
        %604 = vmatpush2.msra.mxu0 0.0
        %605 = vmatprep.subr.mxu0 0.0
        %606 = vmatpush2.msra.mxu0 0.0
        %607 = vmatprep.subr.mxu0 0.0
        %608 = vmatpush2.msra.mxu0 0.0
        %609 = vmatprep.subr.mxu0 0.0
        %610 = vmatpush2.msra.mxu0 0.0
        %611 = vmatprep.subr.mxu0 0.0
        %612 = vmatpush2.msra.mxu0 0.0
        %613 = vmatprep.mubr.f32.mxu0 0.0
        %614 = vmatmul.mubr.f32.gmra.mxu0 %v547
        %v615 = vpop.f32.mrf.mxu0
        %v616 = vadd.f32 0.0, %v615
        %v617 = vpop.f32.mrf.mxu0
        %618 = vdwg.mxu0
        %v619 = vadd.f32 %v546, %v616
        %v620 = vxor.u32 %v619, 2147483648
        %v621 = vmul.f32 %v620, 1.442695
        %v622 = vpow.pop %v621
        %v623 = vadd.f32 %v622, 1.0
        %v624 = vrcp.pop %v623
        %v625 = vmul.f32 1.0, %v624
        %v626 = vtanh.pop %v619
        %v627 = vmul.f32 %v625, %v533
        %629 = vrot.lane.b32.xlu0 %v626, 64
        %v630 = vpop.permute.xlu0 %629
        %v632 = vmul.f32 %v625, %v630
        %634 = vrot.lane.b32.xlu0 %v632, 32
        %v635 = vpop.permute.xlu0 %634
        %v637 = vadd.f32 %v627, %v635
        %v638 = vtanh.pop %v637
        %640 = vrot.lane.b32.xlu0 %v638, 64
        %v641 = vpop.permute.xlu0 %640
        %v643 = vmul.f32 %v625, %v641
        %645 = vrot.lane.b32.xlu0 %v643, 32
        %v646 = vpop.permute.xlu0 %645
        %s648 = scalar_lea.vmem %s231, 4
        %649 = vst.msk [vmem:[%s648] sm:$0x3] %vm440, %v646
        %v650 = vld [vmem:[#allocation2 + $0x6] sm:$0x3]
        %v651 = vsel %vm245, %v646, 0
        %653 = vmatprep.subr.mxu0 0.0
        %654 = vmatpush1.msra.mxu0 0.0
        %655 = vmatprep.subr.mxu0 0.0
        %656 = vmatpush1.msra.mxu0 0.0
        %657 = vmatprep.subr.mxu0 0.0
        %658 = vmatpush1.msra.mxu0 0.0
        %659 = vmatprep.subr.mxu0 0.0
        %660 = vmatpush1.msra.mxu0 0.0
        %661 = vmatprep.subr.mxu0 0.0
        %662 = vmatpush1.msra.mxu0 0.0
        %663 = vmatprep.subr.mxu0 0.0
        %664 = vmatpush1.msra.mxu0 0.0
        %665 = vmatprep.subr.mxu0 0.0
        %666 = vmatpush1.msra.mxu0 0.0
        %667 = vmatprep.subr.mxu0 0.0
        %668 = vmatpush1.msra.mxu0 0.0
        %669 = vmatprep.subr.mxu0 0.0
        %670 = vmatpush1.msra.mxu0 0.0
        %671 = vmatprep.subr.mxu0 0.0
        %672 = vmatpush1.msra.mxu0 0.0
        %673 = vmatprep.subr.mxu0 0.0
        %674 = vmatpush1.msra.mxu0 0.0
        %675 = vmatprep.subr.mxu0 0.0
        %676 = vmatpush1.msra.mxu0 0.0
        %677 = vmatprep.subr.mxu0 0.0
        %678 = vmatpush1.msra.mxu0 %v332
        %679 = vmatprep.subr.mxu0 0.0
        %680 = vmatpush1.msra.mxu0 %v331
        %681 = vmatprep.subr.mxu0 0.0
        %682 = vmatpush1.msra.mxu0 %v330
        %683 = vmatprep.subr.mxu0 0.0
        %684 = vmatpush1.msra.mxu0 %v329
        %685 = vmatprep.subr.mxu0 0.0
        %686 = vmatpush2.msra.mxu0 0.0
        %687 = vmatprep.subr.mxu0 0.0
        %688 = vmatpush2.msra.mxu0 0.0
        %689 = vmatprep.subr.mxu0 0.0
        %690 = vmatpush2.msra.mxu0 0.0
        %691 = vmatprep.subr.mxu0 0.0
        %692 = vmatpush2.msra.mxu0 0.0
        %693 = vmatprep.subr.mxu0 0.0
        %694 = vmatpush2.msra.mxu0 0.0
        %695 = vmatprep.subr.mxu0 0.0
        %696 = vmatpush2.msra.mxu0 0.0
        %697 = vmatprep.subr.mxu0 0.0
        %698 = vmatpush2.msra.mxu0 0.0
        %699 = vmatprep.subr.mxu0 0.0
        %700 = vmatpush2.msra.mxu0 0.0
        %701 = vmatprep.subr.mxu0 0.0
        %702 = vmatpush2.msra.mxu0 0.0
        %703 = vmatprep.subr.mxu0 0.0
        %704 = vmatpush2.msra.mxu0 0.0
        %705 = vmatprep.subr.mxu0 0.0
        %706 = vmatpush2.msra.mxu0 0.0
        %707 = vmatprep.subr.mxu0 0.0
        %708 = vmatpush2.msra.mxu0 0.0
        %709 = vmatprep.subr.mxu0 0.0
        %710 = vmatpush2.msra.mxu0 0.0
        %711 = vmatprep.subr.mxu0 0.0
        %712 = vmatpush2.msra.mxu0 0.0
        %713 = vmatprep.subr.mxu0 0.0
        %714 = vmatpush2.msra.mxu0 0.0
        %715 = vmatprep.subr.mxu0 0.0
        %716 = vmatpush2.msra.mxu0 0.0
        %717 = vmatprep.mubr.f32.mxu0 0.0
        %718 = vmatmul.mubr.f32.gmra.mxu0 %v651
        %v719 = vpop.f32.mrf.mxu0
        %v720 = vadd.f32 0.0, %v719
        %v721 = vpop.f32.mrf.mxu0
        %722 = vdwg.mxu0
        %v723 = vadd.f32 %v650, %v720
        %v724 = vxor.u32 %v723, 2147483648
        %v725 = vmul.f32 %v724, 1.442695
        %v726 = vpow.pop %v725
        %v727 = vadd.f32 %v726, 1.0
        %v728 = vrcp.pop %v727
        %v729 = vmul.f32 1.0, %v728
        %v730 = vtanh.pop %v723
        %v731 = vmul.f32 %v729, %v637
        %733 = vrot.lane.b32.xlu0 %v730, 64
        %v734 = vpop.permute.xlu0 %733
        %v736 = vmul.f32 %v729, %v734
        %738 = vrot.lane.b32.xlu0 %v736, 32
        %v739 = vpop.permute.xlu0 %738
        %v741 = vadd.f32 %v731, %v739
        %v742 = vtanh.pop %v741
        %744 = vrot.lane.b32.xlu0 %v742, 64
        %v745 = vpop.permute.xlu0 %744
        %v747 = vmul.f32 %v729, %v745
        %749 = vrot.lane.b32.xlu0 %v747, 32
        %v750 = vpop.permute.xlu0 %749
        %s752 = scalar_lea.vmem %s231, 6
        %753 = vst.msk [vmem:[%s752] sm:$0x3] %vm440, %v750
        %v754 = vld [vmem:[#allocation2 + $0x8] sm:$0x3]
        %v755 = vsel %vm245, %v750, 0
        %757 = vmatprep.subr.mxu0 0.0
        %758 = vmatpush1.msra.mxu0 0.0
        %759 = vmatprep.subr.mxu0 0.0
        %760 = vmatpush1.msra.mxu0 0.0
        %761 = vmatprep.subr.mxu0 0.0
        %762 = vmatpush1.msra.mxu0 0.0
        %763 = vmatprep.subr.mxu0 0.0
        %764 = vmatpush1.msra.mxu0 0.0
        %765 = vmatprep.subr.mxu0 0.0
        %766 = vmatpush1.msra.mxu0 0.0
        %767 = vmatprep.subr.mxu0 0.0
        %768 = vmatpush1.msra.mxu0 0.0
        %769 = vmatprep.subr.mxu0 0.0
        %770 = vmatpush1.msra.mxu0 0.0
        %771 = vmatprep.subr.mxu0 0.0
        %772 = vmatpush1.msra.mxu0 0.0
        %773 = vmatprep.subr.mxu0 0.0
        %774 = vmatpush1.msra.mxu0 0.0
        %775 = vmatprep.subr.mxu0 0.0
        %776 = vmatpush1.msra.mxu0 0.0
        %777 = vmatprep.subr.mxu0 0.0
        %778 = vmatpush1.msra.mxu0 0.0
        %779 = vmatprep.subr.mxu0 0.0
        %780 = vmatpush1.msra.mxu0 0.0
        %781 = vmatprep.subr.mxu0 0.0
        %782 = vmatpush1.msra.mxu0 %v332
        %783 = vmatprep.subr.mxu0 0.0
        %784 = vmatpush1.msra.mxu0 %v331
        %785 = vmatprep.subr.mxu0 0.0
        %786 = vmatpush1.msra.mxu0 %v330
        %787 = vmatprep.subr.mxu0 0.0
        %788 = vmatpush1.msra.mxu0 %v329
        %789 = vmatprep.subr.mxu0 0.0
        %790 = vmatpush2.msra.mxu0 0.0
        %791 = vmatprep.subr.mxu0 0.0
        %792 = vmatpush2.msra.mxu0 0.0
        %793 = vmatprep.subr.mxu0 0.0
        %794 = vmatpush2.msra.mxu0 0.0
        %795 = vmatprep.subr.mxu0 0.0
        %796 = vmatpush2.msra.mxu0 0.0
        %797 = vmatprep.subr.mxu0 0.0
        %798 = vmatpush2.msra.mxu0 0.0
        %799 = vmatprep.subr.mxu0 0.0
        %800 = vmatpush2.msra.mxu0 0.0
        %801 = vmatprep.subr.mxu0 0.0
        %802 = vmatpush2.msra.mxu0 0.0
        %803 = vmatprep.subr.mxu0 0.0
        %804 = vmatpush2.msra.mxu0 0.0
        %805 = vmatprep.subr.mxu0 0.0
        %806 = vmatpush2.msra.mxu0 0.0
        %807 = vmatprep.subr.mxu0 0.0
        %808 = vmatpush2.msra.mxu0 0.0
        %809 = vmatprep.subr.mxu0 0.0
        %810 = vmatpush2.msra.mxu0 0.0
        %811 = vmatprep.subr.mxu0 0.0
        %812 = vmatpush2.msra.mxu0 0.0
        %813 = vmatprep.subr.mxu0 0.0
        %814 = vmatpush2.msra.mxu0 0.0
        %815 = vmatprep.subr.mxu0 0.0
        %816 = vmatpush2.msra.mxu0 0.0
        %817 = vmatprep.subr.mxu0 0.0
        %818 = vmatpush2.msra.mxu0 0.0
        %819 = vmatprep.subr.mxu0 0.0
        %820 = vmatpush2.msra.mxu0 0.0
        %821 = vmatprep.mubr.f32.mxu0 0.0
        %822 = vmatmul.mubr.f32.gmra.mxu0 %v755
        %v823 = vpop.f32.mrf.mxu0
        %v824 = vadd.f32 0.0, %v823
        %v825 = vpop.f32.mrf.mxu0
        %826 = vdwg.mxu0
        %v827 = vadd.f32 %v754, %v824
        %v828 = vxor.u32 %v827, 2147483648
        %v829 = vmul.f32 %v828, 1.442695
        %v830 = vpow.pop %v829
        %v831 = vadd.f32 %v830, 1.0
        %v832 = vrcp.pop %v831
        %v833 = vmul.f32 1.0, %v832
        %v834 = vtanh.pop %v827
        %v835 = vmul.f32 %v833, %v741
        %837 = vrot.lane.b32.xlu0 %v834, 64
        %v838 = vpop.permute.xlu0 %837
        %v840 = vmul.f32 %v833, %v838
        %842 = vrot.lane.b32.xlu0 %v840, 32
        %v843 = vpop.permute.xlu0 %842
        %v845 = vadd.f32 %v835, %v843
        %v846 = vtanh.pop %v845
        %848 = vrot.lane.b32.xlu0 %v846, 64
        %v849 = vpop.permute.xlu0 %848
        %v851 = vmul.f32 %v833, %v849
        %853 = vrot.lane.b32.xlu0 %v851, 32
        %v854 = vpop.permute.xlu0 %853
        %s856 = scalar_lea.vmem %s231, 8
        %857 = vst.msk [vmem:[%s856] sm:$0x3] %vm440, %v854
        %v858 = vld [vmem:[#allocation2 + $0xa] sm:$0x3]
        %v859 = vsel %vm245, %v854, 0
        %861 = vmatprep.subr.mxu0 0.0
        %862 = vmatpush1.msra.mxu0 0.0
        %863 = vmatprep.subr.mxu0 0.0
        %864 = vmatpush1.msra.mxu0 0.0
        %865 = vmatprep.subr.mxu0 0.0
        %866 = vmatpush1.msra.mxu0 0.0
        %867 = vmatprep.subr.mxu0 0.0
        %868 = vmatpush1.msra.mxu0 0.0
        %869 = vmatprep.subr.mxu0 0.0
        %870 = vmatpush1.msra.mxu0 0.0
        %871 = vmatprep.subr.mxu0 0.0
        %872 = vmatpush1.msra.mxu0 0.0
        %873 = vmatprep.subr.mxu0 0.0
        %874 = vmatpush1.msra.mxu0 0.0
        %875 = vmatprep.subr.mxu0 0.0
        %876 = vmatpush1.msra.mxu0 0.0
        %877 = vmatprep.subr.mxu0 0.0
        %878 = vmatpush1.msra.mxu0 0.0
        %879 = vmatprep.subr.mxu0 0.0
        %880 = vmatpush1.msra.mxu0 0.0
        %881 = vmatprep.subr.mxu0 0.0
        %882 = vmatpush1.msra.mxu0 0.0
        %883 = vmatprep.subr.mxu0 0.0
        %884 = vmatpush1.msra.mxu0 0.0
        %885 = vmatprep.subr.mxu0 0.0
        %886 = vmatpush1.msra.mxu0 %v332
        %887 = vmatprep.subr.mxu0 0.0
        %888 = vmatpush1.msra.mxu0 %v331
        %889 = vmatprep.subr.mxu0 0.0
        %890 = vmatpush1.msra.mxu0 %v330
        %891 = vmatprep.subr.mxu0 0.0
        %892 = vmatpush1.msra.mxu0 %v329
        %893 = vmatprep.subr.mxu0 0.0
        %894 = vmatpush2.msra.mxu0 0.0
        %895 = vmatprep.subr.mxu0 0.0
        %896 = vmatpush2.msra.mxu0 0.0
        %897 = vmatprep.subr.mxu0 0.0
        %898 = vmatpush2.msra.mxu0 0.0
        %899 = vmatprep.subr.mxu0 0.0
        %900 = vmatpush2.msra.mxu0 0.0
        %901 = vmatprep.subr.mxu0 0.0
        %902 = vmatpush2.msra.mxu0 0.0
        %903 = vmatprep.subr.mxu0 0.0
        %904 = vmatpush2.msra.mxu0 0.0
        %905 = vmatprep.subr.mxu0 0.0
        %906 = vmatpush2.msra.mxu0 0.0
        %907 = vmatprep.subr.mxu0 0.0
        %908 = vmatpush2.msra.mxu0 0.0
        %909 = vmatprep.subr.mxu0 0.0
        %910 = vmatpush2.msra.mxu0 0.0
        %911 = vmatprep.subr.mxu0 0.0
        %912 = vmatpush2.msra.mxu0 0.0
        %913 = vmatprep.subr.mxu0 0.0
        %914 = vmatpush2.msra.mxu0 0.0
        %915 = vmatprep.subr.mxu0 0.0
        %916 = vmatpush2.msra.mxu0 0.0
        %917 = vmatprep.subr.mxu0 0.0
        %918 = vmatpush2.msra.mxu0 0.0
        %919 = vmatprep.subr.mxu0 0.0
        %920 = vmatpush2.msra.mxu0 0.0
        %921 = vmatprep.subr.mxu0 0.0
        %922 = vmatpush2.msra.mxu0 0.0
        %923 = vmatprep.subr.mxu0 0.0
        %924 = vmatpush2.msra.mxu0 0.0
        %925 = vmatprep.mubr.f32.mxu0 0.0
        %926 = vmatmul.mubr.f32.gmra.mxu0 %v859
        %v927 = vpop.f32.mrf.mxu0
        %v928 = vadd.f32 0.0, %v927
        %v929 = vpop.f32.mrf.mxu0
        %930 = vdwg.mxu0
        %v931 = vadd.f32 %v858, %v928
        %v932 = vxor.u32 %v931, 2147483648
        %v933 = vmul.f32 %v932, 1.442695
        %v934 = vpow.pop %v933
        %v935 = vadd.f32 %v934, 1.0
        %v936 = vrcp.pop %v935
        %v937 = vmul.f32 1.0, %v936
        %v938 = vtanh.pop %v931
        %v939 = vmul.f32 %v937, %v845
        %941 = vrot.lane.b32.xlu0 %v938, 64
        %v942 = vpop.permute.xlu0 %941
        %v944 = vmul.f32 %v937, %v942
        %946 = vrot.lane.b32.xlu0 %v944, 32
        %v947 = vpop.permute.xlu0 %946
        %v949 = vadd.f32 %v939, %v947
        %v950 = vtanh.pop %v949
        %952 = vrot.lane.b32.xlu0 %v950, 64
        %v953 = vpop.permute.xlu0 %952
        %v955 = vmul.f32 %v937, %v953
        %957 = vrot.lane.b32.xlu0 %v955, 32
        %v958 = vpop.permute.xlu0 %957
        %s960 = scalar_lea.vmem %s231, 10
        %961 = vst.msk [vmem:[%s960] sm:$0x3] %vm440, %v958
        %v962 = vld [vmem:[#allocation2 + $0xc] sm:$0x3]
        %v963 = vsel %vm245, %v958, 0
        %965 = vmatprep.subr.mxu0 0.0
        %966 = vmatpush1.msra.mxu0 0.0
        %967 = vmatprep.subr.mxu0 0.0
        %968 = vmatpush1.msra.mxu0 0.0
        %969 = vmatprep.subr.mxu0 0.0
        %970 = vmatpush1.msra.mxu0 0.0
        %971 = vmatprep.subr.mxu0 0.0
        %972 = vmatpush1.msra.mxu0 0.0
        %973 = vmatprep.subr.mxu0 0.0
        %974 = vmatpush1.msra.mxu0 0.0
        %975 = vmatprep.subr.mxu0 0.0
        %976 = vmatpush1.msra.mxu0 0.0
        %977 = vmatprep.subr.mxu0 0.0
        %978 = vmatpush1.msra.mxu0 0.0
        %979 = vmatprep.subr.mxu0 0.0
        %980 = vmatpush1.msra.mxu0 0.0
        %981 = vmatprep.subr.mxu0 0.0
        %982 = vmatpush1.msra.mxu0 0.0
        %983 = vmatprep.subr.mxu0 0.0
        %984 = vmatpush1.msra.mxu0 0.0
        %985 = vmatprep.subr.mxu0 0.0
        %986 = vmatpush1.msra.mxu0 0.0
        %987 = vmatprep.subr.mxu0 0.0
        %988 = vmatpush1.msra.mxu0 0.0
        %989 = vmatprep.subr.mxu0 0.0
        %990 = vmatpush1.msra.mxu0 %v332
        %991 = vmatprep.subr.mxu0 0.0
        %992 = vmatpush1.msra.mxu0 %v331
        %993 = vmatprep.subr.mxu0 0.0
        %994 = vmatpush1.msra.mxu0 %v330
        %995 = vmatprep.subr.mxu0 0.0
        %996 = vmatpush1.msra.mxu0 %v329
        %997 = vmatprep.subr.mxu0 0.0
        %998 = vmatpush2.msra.mxu0 0.0
        %999 = vmatprep.subr.mxu0 0.0
        %1000 = vmatpush2.msra.mxu0 0.0
        %1001 = vmatprep.subr.mxu0 0.0
        %1002 = vmatpush2.msra.mxu0 0.0
        %1003 = vmatprep.subr.mxu0 0.0
        %1004 = vmatpush2.msra.mxu0 0.0
        %1005 = vmatprep.subr.mxu0 0.0
        %1006 = vmatpush2.msra.mxu0 0.0
        %1007 = vmatprep.subr.mxu0 0.0
        %1008 = vmatpush2.msra.mxu0 0.0
        %1009 = vmatprep.subr.mxu0 0.0
        %1010 = vmatpush2.msra.mxu0 0.0
        %1011 = vmatprep.subr.mxu0 0.0
        %1012 = vmatpush2.msra.mxu0 0.0
        %1013 = vmatprep.subr.mxu0 0.0
        %1014 = vmatpush2.msra.mxu0 0.0
        %1015 = vmatprep.subr.mxu0 0.0
        %1016 = vmatpush2.msra.mxu0 0.0
        %1017 = vmatprep.subr.mxu0 0.0
        %1018 = vmatpush2.msra.mxu0 0.0
        %1019 = vmatprep.subr.mxu0 0.0
        %1020 = vmatpush2.msra.mxu0 0.0
        %1021 = vmatprep.subr.mxu0 0.0
        %1022 = vmatpush2.msra.mxu0 0.0
        %1023 = vmatprep.subr.mxu0 0.0
        %1024 = vmatpush2.msra.mxu0 0.0
        %1025 = vmatprep.subr.mxu0 0.0
        %1026 = vmatpush2.msra.mxu0 0.0
        %1027 = vmatprep.subr.mxu0 0.0
        %1028 = vmatpush2.msra.mxu0 0.0
        %1029 = vmatprep.mubr.f32.mxu0 0.0
        %1030 = vmatmul.mubr.f32.gmra.mxu0 %v963
        %v1031 = vpop.f32.mrf.mxu0
        %v1032 = vadd.f32 0.0, %v1031
        %v1033 = vpop.f32.mrf.mxu0
        %1034 = vdwg.mxu0
        %v1035 = vadd.f32 %v962, %v1032
        %v1036 = vxor.u32 %v1035, 2147483648
        %v1037 = vmul.f32 %v1036, 1.442695
        %v1038 = vpow.pop %v1037
        %v1039 = vadd.f32 %v1038, 1.0
        %v1040 = vrcp.pop %v1039
        %v1041 = vmul.f32 1.0, %v1040
        %v1042 = vtanh.pop %v1035
        %v1043 = vmul.f32 %v1041, %v949
        %1045 = vrot.lane.b32.xlu0 %v1042, 64
        %v1046 = vpop.permute.xlu0 %1045
        %v1048 = vmul.f32 %v1041, %v1046
        %1050 = vrot.lane.b32.xlu0 %v1048, 32
        %v1051 = vpop.permute.xlu0 %1050
        %v1053 = vadd.f32 %v1043, %v1051
        %v1054 = vtanh.pop %v1053
        %1056 = vrot.lane.b32.xlu0 %v1054, 64
        %v1057 = vpop.permute.xlu0 %1056
        %v1059 = vmul.f32 %v1041, %v1057
        %1061 = vrot.lane.b32.xlu0 %v1059, 32
        %v1062 = vpop.permute.xlu0 %1061
        %s1064 = scalar_lea.vmem %s231, 12
        %1065 = vst.msk [vmem:[%s1064] sm:$0x3] %vm440, %v1062
        %v1066 = vld [vmem:[#allocation2 + $0xe] sm:$0x3]
        %v1067 = vsel %vm245, %v1062, 0
        %1069 = vmatprep.subr.mxu0 0.0
        %1070 = vmatpush1.msra.mxu0 0.0
        %1071 = vmatprep.subr.mxu0 0.0
        %1072 = vmatpush1.msra.mxu0 0.0
        %1073 = vmatprep.subr.mxu0 0.0
        %1074 = vmatpush1.msra.mxu0 0.0
        %1075 = vmatprep.subr.mxu0 0.0
        %1076 = vmatpush1.msra.mxu0 0.0
        %1077 = vmatprep.subr.mxu0 0.0
        %1078 = vmatpush1.msra.mxu0 0.0
        %1079 = vmatprep.subr.mxu0 0.0
        %1080 = vmatpush1.msra.mxu0 0.0
        %1081 = vmatprep.subr.mxu0 0.0
        %1082 = vmatpush1.msra.mxu0 0.0
        %1083 = vmatprep.subr.mxu0 0.0
        %1084 = vmatpush1.msra.mxu0 0.0
        %1085 = vmatprep.subr.mxu0 0.0
        %1086 = vmatpush1.msra.mxu0 0.0
        %1087 = vmatprep.subr.mxu0 0.0
        %1088 = vmatpush1.msra.mxu0 0.0
        %1089 = vmatprep.subr.mxu0 0.0
        %1090 = vmatpush1.msra.mxu0 0.0
        %1091 = vmatprep.subr.mxu0 0.0
        %1092 = vmatpush1.msra.mxu0 0.0
        %1093 = vmatprep.subr.mxu0 0.0
        %1094 = vmatpush1.msra.mxu0 %v332
        %1095 = vmatprep.subr.mxu0 0.0
        %1096 = vmatpush1.msra.mxu0 %v331
        %1097 = vmatprep.subr.mxu0 0.0
        %1098 = vmatpush1.msra.mxu0 %v330
        %1099 = vmatprep.subr.mxu0 0.0
        %1100 = vmatpush1.msra.mxu0 %v329
        %1101 = vmatprep.subr.mxu0 0.0
        %1102 = vmatpush2.msra.mxu0 0.0
        %1103 = vmatprep.subr.mxu0 0.0
        %1104 = vmatpush2.msra.mxu0 0.0
        %1105 = vmatprep.subr.mxu0 0.0
        %1106 = vmatpush2.msra.mxu0 0.0
        %1107 = vmatprep.subr.mxu0 0.0
        %1108 = vmatpush2.msra.mxu0 0.0
        %1109 = vmatprep.subr.mxu0 0.0
        %1110 = vmatpush2.msra.mxu0 0.0
        %1111 = vmatprep.subr.mxu0 0.0
        %1112 = vmatpush2.msra.mxu0 0.0
        %1113 = vmatprep.subr.mxu0 0.0
        %1114 = vmatpush2.msra.mxu0 0.0
        %1115 = vmatprep.subr.mxu0 0.0
        %1116 = vmatpush2.msra.mxu0 0.0
        %1117 = vmatprep.subr.mxu0 0.0
        %1118 = vmatpush2.msra.mxu0 0.0
        %1119 = vmatprep.subr.mxu0 0.0
        %1120 = vmatpush2.msra.mxu0 0.0
        %1121 = vmatprep.subr.mxu0 0.0
        %1122 = vmatpush2.msra.mxu0 0.0
        %1123 = vmatprep.subr.mxu0 0.0
        %1124 = vmatpush2.msra.mxu0 0.0
        %1125 = vmatprep.subr.mxu0 0.0
        %1126 = vmatpush2.msra.mxu0 0.0
        %1127 = vmatprep.subr.mxu0 0.0
        %1128 = vmatpush2.msra.mxu0 0.0
        %1129 = vmatprep.subr.mxu0 0.0
        %1130 = vmatpush2.msra.mxu0 0.0
        %1131 = vmatprep.subr.mxu0 0.0
        %1132 = vmatpush2.msra.mxu0 0.0
        %1133 = vmatprep.mubr.f32.mxu0 0.0
        %1134 = vmatmul.mubr.f32.gmra.mxu0 %v1067
        %v1135 = vpop.f32.mrf.mxu0
        %v1136 = vadd.f32 0.0, %v1135
        %v1137 = vpop.f32.mrf.mxu0
        %1138 = vdwg.mxu0
        %v1139 = vadd.f32 %v1066, %v1136
        %v1140 = vxor.u32 %v1139, 2147483648
        %v1141 = vmul.f32 %v1140, 1.442695
        %v1142 = vpow.pop %v1141
        %v1143 = vadd.f32 %v1142, 1.0
        %v1144 = vrcp.pop %v1143
        %v1145 = vmul.f32 1.0, %v1144
        %v1146 = vtanh.pop %v1139
        %v1147 = vmul.f32 %v1145, %v1053
        %1149 = vrot.lane.b32.xlu0 %v1146, 64
        %v1150 = vpop.permute.xlu0 %1149
        %v1152 = vmul.f32 %v1145, %v1150
        %1154 = vrot.lane.b32.xlu0 %v1152, 32
        %v1155 = vpop.permute.xlu0 %1154
        %v1157 = vadd.f32 %v1147, %v1155
        %v1158 = vtanh.pop %v1157
        %1160 = vrot.lane.b32.xlu0 %v1158, 64
        %v1161 = vpop.permute.xlu0 %1160
        %v1163 = vmul.f32 %v1145, %v1161
        %1165 = vrot.lane.b32.xlu0 %v1163, 32
        %v1166 = vpop.permute.xlu0 %1165
        %s1168 = scalar_lea.vmem %s231, 14
        %1169 = vst.msk [vmem:[%s1168] sm:$0x3] %vm440, %v1166
      $region40: #{poem_generator_forward.3} parent=35 // pred_fallthru
        _
      %p1170 = scmp.eq.s32.totalorder %s15, 1
      // Predicated region
      $region41: #{poem_generator_forward.3} parent=35 // pred_check
        %p1171 = pneg %p1170
      $region42: #{poem_generator_forward.3} parent=35 // pred_check_branch
        %1173 = sbr.rel (%p1171) target = $region44
      $region43: #{poem_generator_forward.3} parent=35 // pred_region
        %v1174 = vld [vmem:[#allocation2 + $0xe] sm:$0x3]
        %v1176 = vsel %vm245, 0.0, 0
        %1178 = vmatprep.subr.mxu0 0.0
        %1179 = vmatpush1.msra.mxu0 0.0
        %1180 = vmatprep.subr.mxu0 0.0
        %1181 = vmatpush1.msra.mxu0 0.0
        %1182 = vmatprep.subr.mxu0 0.0
        %1183 = vmatpush1.msra.mxu0 0.0
        %1184 = vmatprep.subr.mxu0 0.0
        %1185 = vmatpush1.msra.mxu0 0.0
        %1186 = vmatprep.subr.mxu0 0.0
        %1187 = vmatpush1.msra.mxu0 0.0
        %1188 = vmatprep.subr.mxu0 0.0
        %1189 = vmatpush1.msra.mxu0 0.0
        %1190 = vmatprep.subr.mxu0 0.0
        %1191 = vmatpush1.msra.mxu0 0.0
        %1192 = vmatprep.subr.mxu0 0.0
        %1193 = vmatpush1.msra.mxu0 0.0
        %1194 = vmatprep.subr.mxu0 0.0
        %1195 = vmatpush1.msra.mxu0 0.0
        %1196 = vmatprep.subr.mxu0 0.0
        %1197 = vmatpush1.msra.mxu0 0.0
        %1198 = vmatprep.subr.mxu0 0.0
        %1199 = vmatpush1.msra.mxu0 0.0
        %1200 = vmatprep.subr.mxu0 0.0
        %1201 = vmatpush1.msra.mxu0 0.0
        %1202 = vmatprep.subr.mxu0 0.0
        %1203 = vmatpush1.msra.mxu0 %v332
        %1204 = vmatprep.subr.mxu0 0.0
        %1205 = vmatpush1.msra.mxu0 %v331
        %1206 = vmatprep.subr.mxu0 0.0
        %1207 = vmatpush1.msra.mxu0 %v330
        %1208 = vmatprep.subr.mxu0 0.0
        %1209 = vmatpush1.msra.mxu0 %v329
        %1210 = vmatprep.subr.mxu0 0.0
        %1211 = vmatpush2.msra.mxu0 0.0
        %1212 = vmatprep.subr.mxu0 0.0
        %1213 = vmatpush2.msra.mxu0 0.0
        %1214 = vmatprep.subr.mxu0 0.0
        %1215 = vmatpush2.msra.mxu0 0.0
        %1216 = vmatprep.subr.mxu0 0.0
        %1217 = vmatpush2.msra.mxu0 0.0
        %1218 = vmatprep.subr.mxu0 0.0
        %1219 = vmatpush2.msra.mxu0 0.0
        %1220 = vmatprep.subr.mxu0 0.0
        %1221 = vmatpush2.msra.mxu0 0.0
        %1222 = vmatprep.subr.mxu0 0.0
        %1223 = vmatpush2.msra.mxu0 0.0
        %1224 = vmatprep.subr.mxu0 0.0
        %1225 = vmatpush2.msra.mxu0 0.0
        %1226 = vmatprep.subr.mxu0 0.0
        %1227 = vmatpush2.msra.mxu0 0.0
        %1228 = vmatprep.subr.mxu0 0.0
        %1229 = vmatpush2.msra.mxu0 0.0
        %1230 = vmatprep.subr.mxu0 0.0
        %1231 = vmatpush2.msra.mxu0 0.0
        %1232 = vmatprep.subr.mxu0 0.0
        %1233 = vmatpush2.msra.mxu0 0.0
        %1234 = vmatprep.subr.mxu0 0.0
        %1235 = vmatpush2.msra.mxu0 0.0
        %1236 = vmatprep.subr.mxu0 0.0
        %1237 = vmatpush2.msra.mxu0 0.0
        %1238 = vmatprep.subr.mxu0 0.0
        %1239 = vmatpush2.msra.mxu0 0.0
        %1240 = vmatprep.subr.mxu0 0.0
        %1241 = vmatpush2.msra.mxu0 0.0
        %1242 = vmatprep.mubr.f32.mxu0 0.0
        %1243 = vmatmul.mubr.f32.gmra.mxu0 %v1176
        %v1244 = vpop.f32.mrf.mxu0
        %v1245 = vadd.f32 0.0, %v1244
        %v1246 = vpop.f32.mrf.mxu0
        %1247 = vdwg.mxu0
        %v1248 = vadd.f32 %v1174, %v1245
        %v1249 = vxor.u32 %v1248, 2147483648
        %v1250 = vmul.f32 %v1249, 1.442695
        %v1251 = vpow.pop %v1250
        %v1252 = vadd.f32 %v1251, 1.0
        %v1253 = vrcp.pop %v1252
        %v1254 = vmul.f32 1.0, %v1253
        %v1255 = vtanh.pop %v1248
        %v1256 = vmul.f32 %v1254, 0.0
        %1258 = vrot.lane.b32.xlu0 %v1255, 64
        %v1259 = vpop.permute.xlu0 %1258
        %v1261 = vmul.f32 %v1254, %v1259
        %1263 = vrot.lane.b32.xlu0 %v1261, 32
        %v1264 = vpop.permute.xlu0 %1263
        %v1266 = vadd.f32 %v1256, %v1264
        %v1267 = vtanh.pop %v1266
        %1269 = vrot.lane.b32.xlu0 %v1267, 64
        %v1270 = vpop.permute.xlu0 %1269
        %v1272 = vmul.f32 %v1254, %v1270
        %1274 = vrot.lane.b32.xlu0 %v1272, 32
        %v1275 = vpop.permute.xlu0 %1274
        %s1277 = scalar_lea.vmem %s231, 14
        %vm1278 = vcmask 254976
        %1279 = vst.msk [vmem:[%s1277] sm:$0x3] %vm1278, %v1275
        %v1280 = vld [vmem:[#allocation2 + $0xc] sm:$0x3]
        %v1281 = vsel %vm245, %v1275, 0
        %1283 = vmatprep.subr.mxu0 0.0
        %1284 = vmatpush1.msra.mxu0 0.0
        %1285 = vmatprep.subr.mxu0 0.0
        %1286 = vmatpush1.msra.mxu0 0.0
        %1287 = vmatprep.subr.mxu0 0.0
        %1288 = vmatpush1.msra.mxu0 0.0
        %1289 = vmatprep.subr.mxu0 0.0
        %1290 = vmatpush1.msra.mxu0 0.0
        %1291 = vmatprep.subr.mxu0 0.0
        %1292 = vmatpush1.msra.mxu0 0.0
        %1293 = vmatprep.subr.mxu0 0.0
        %1294 = vmatpush1.msra.mxu0 0.0
        %1295 = vmatprep.subr.mxu0 0.0
        %1296 = vmatpush1.msra.mxu0 0.0
        %1297 = vmatprep.subr.mxu0 0.0
        %1298 = vmatpush1.msra.mxu0 0.0
        %1299 = vmatprep.subr.mxu0 0.0
        %1300 = vmatpush1.msra.mxu0 0.0
        %1301 = vmatprep.subr.mxu0 0.0
        %1302 = vmatpush1.msra.mxu0 0.0
        %1303 = vmatprep.subr.mxu0 0.0
        %1304 = vmatpush1.msra.mxu0 0.0
        %1305 = vmatprep.subr.mxu0 0.0
        %1306 = vmatpush1.msra.mxu0 0.0
        %1307 = vmatprep.subr.mxu0 0.0
        %1308 = vmatpush1.msra.mxu0 %v332
        %1309 = vmatprep.subr.mxu0 0.0
        %1310 = vmatpush1.msra.mxu0 %v331
        %1311 = vmatprep.subr.mxu0 0.0
        %1312 = vmatpush1.msra.mxu0 %v330
        %1313 = vmatprep.subr.mxu0 0.0
        %1314 = vmatpush1.msra.mxu0 %v329
        %1315 = vmatprep.subr.mxu0 0.0
        %1316 = vmatpush2.msra.mxu0 0.0
        %1317 = vmatprep.subr.mxu0 0.0
        %1318 = vmatpush2.msra.mxu0 0.0
        %1319 = vmatprep.subr.mxu0 0.0
        %1320 = vmatpush2.msra.mxu0 0.0
        %1321 = vmatprep.subr.mxu0 0.0
        %1322 = vmatpush2.msra.mxu0 0.0
        %1323 = vmatprep.subr.mxu0 0.0
        %1324 = vmatpush2.msra.mxu0 0.0
        %1325 = vmatprep.subr.mxu0 0.0
        %1326 = vmatpush2.msra.mxu0 0.0
        %1327 = vmatprep.subr.mxu0 0.0
        %1328 = vmatpush2.msra.mxu0 0.0
        %1329 = vmatprep.subr.mxu0 0.0
        %1330 = vmatpush2.msra.mxu0 0.0
        %1331 = vmatprep.subr.mxu0 0.0
        %1332 = vmatpush2.msra.mxu0 0.0
        %1333 = vmatprep.subr.mxu0 0.0
        %1334 = vmatpush2.msra.mxu0 0.0
        %1335 = vmatprep.subr.mxu0 0.0
        %1336 = vmatpush2.msra.mxu0 0.0
        %1337 = vmatprep.subr.mxu0 0.0
        %1338 = vmatpush2.msra.mxu0 0.0
        %1339 = vmatprep.subr.mxu0 0.0
        %1340 = vmatpush2.msra.mxu0 0.0
        %1341 = vmatprep.subr.mxu0 0.0
        %1342 = vmatpush2.msra.mxu0 0.0
        %1343 = vmatprep.subr.mxu0 0.0
        %1344 = vmatpush2.msra.mxu0 0.0
        %1345 = vmatprep.subr.mxu0 0.0
        %1346 = vmatpush2.msra.mxu0 0.0
        %1347 = vmatprep.mubr.f32.mxu0 0.0
        %1348 = vmatmul.mubr.f32.gmra.mxu0 %v1281
        %v1349 = vpop.f32.mrf.mxu0
        %v1350 = vadd.f32 0.0, %v1349
        %v1351 = vpop.f32.mrf.mxu0
        %1352 = vdwg.mxu0
        %v1353 = vadd.f32 %v1280, %v1350
        %v1354 = vxor.u32 %v1353, 2147483648
        %v1355 = vmul.f32 %v1354, 1.442695
        %v1356 = vpow.pop %v1355
        %v1357 = vadd.f32 %v1356, 1.0
        %v1358 = vrcp.pop %v1357
        %v1359 = vmul.f32 1.0, %v1358
        %v1360 = vtanh.pop %v1353
        %v1361 = vmul.f32 %v1359, %v1266
        %1363 = vrot.lane.b32.xlu0 %v1360, 64
        %v1364 = vpop.permute.xlu0 %1363
        %v1366 = vmul.f32 %v1359, %v1364
        %1368 = vrot.lane.b32.xlu0 %v1366, 32
        %v1369 = vpop.permute.xlu0 %1368
        %v1371 = vadd.f32 %v1361, %v1369
        %v1372 = vtanh.pop %v1371
        %1374 = vrot.lane.b32.xlu0 %v1372, 64
        %v1375 = vpop.permute.xlu0 %1374
        %v1377 = vmul.f32 %v1359, %v1375
        %1379 = vrot.lane.b32.xlu0 %v1377, 32
        %v1380 = vpop.permute.xlu0 %1379
        %s1382 = scalar_lea.vmem %s231, 12
        %1383 = vst.msk [vmem:[%s1382] sm:$0x3] %vm1278, %v1380
        %v1384 = vld [vmem:[#allocation2 + $0xa] sm:$0x3]
        %v1385 = vsel %vm245, %v1380, 0
        %1387 = vmatprep.subr.mxu0 0.0
        %1388 = vmatpush1.msra.mxu0 0.0
        %1389 = vmatprep.subr.mxu0 0.0
        %1390 = vmatpush1.msra.mxu0 0.0
        %1391 = vmatprep.subr.mxu0 0.0
        %1392 = vmatpush1.msra.mxu0 0.0
        %1393 = vmatprep.subr.mxu0 0.0
        %1394 = vmatpush1.msra.mxu0 0.0
        %1395 = vmatprep.subr.mxu0 0.0
        %1396 = vmatpush1.msra.mxu0 0.0
        %1397 = vmatprep.subr.mxu0 0.0
        %1398 = vmatpush1.msra.mxu0 0.0
        %1399 = vmatprep.subr.mxu0 0.0
        %1400 = vmatpush1.msra.mxu0 0.0
        %1401 = vmatprep.subr.mxu0 0.0
        %1402 = vmatpush1.msra.mxu0 0.0
        %1403 = vmatprep.subr.mxu0 0.0
        %1404 = vmatpush1.msra.mxu0 0.0
        %1405 = vmatprep.subr.mxu0 0.0
        %1406 = vmatpush1.msra.mxu0 0.0
        %1407 = vmatprep.subr.mxu0 0.0
        %1408 = vmatpush1.msra.mxu0 0.0
        %1409 = vmatprep.subr.mxu0 0.0
        %1410 = vmatpush1.msra.mxu0 0.0
        %1411 = vmatprep.subr.mxu0 0.0
        %1412 = vmatpush1.msra.mxu0 %v332
        %1413 = vmatprep.subr.mxu0 0.0
        %1414 = vmatpush1.msra.mxu0 %v331
        %1415 = vmatprep.subr.mxu0 0.0
        %1416 = vmatpush1.msra.mxu0 %v330
        %1417 = vmatprep.subr.mxu0 0.0
        %1418 = vmatpush1.msra.mxu0 %v329
        %1419 = vmatprep.subr.mxu0 0.0
        %1420 = vmatpush2.msra.mxu0 0.0
        %1421 = vmatprep.subr.mxu0 0.0
        %1422 = vmatpush2.msra.mxu0 0.0
        %1423 = vmatprep.subr.mxu0 0.0
        %1424 = vmatpush2.msra.mxu0 0.0
        %1425 = vmatprep.subr.mxu0 0.0
        %1426 = vmatpush2.msra.mxu0 0.0
        %1427 = vmatprep.subr.mxu0 0.0
        %1428 = vmatpush2.msra.mxu0 0.0
        %1429 = vmatprep.subr.mxu0 0.0
        %1430 = vmatpush2.msra.mxu0 0.0
        %1431 = vmatprep.subr.mxu0 0.0
        %1432 = vmatpush2.msra.mxu0 0.0
        %1433 = vmatprep.subr.mxu0 0.0
        %1434 = vmatpush2.msra.mxu0 0.0
        %1435 = vmatprep.subr.mxu0 0.0
        %1436 = vmatpush2.msra.mxu0 0.0
        %1437 = vmatprep.subr.mxu0 0.0
        %1438 = vmatpush2.msra.mxu0 0.0
        %1439 = vmatprep.subr.mxu0 0.0
        %1440 = vmatpush2.msra.mxu0 0.0
        %1441 = vmatprep.subr.mxu0 0.0
        %1442 = vmatpush2.msra.mxu0 0.0
        %1443 = vmatprep.subr.mxu0 0.0
        %1444 = vmatpush2.msra.mxu0 0.0
        %1445 = vmatprep.subr.mxu0 0.0
        %1446 = vmatpush2.msra.mxu0 0.0
        %1447 = vmatprep.subr.mxu0 0.0
        %1448 = vmatpush2.msra.mxu0 0.0
        %1449 = vmatprep.subr.mxu0 0.0
        %1450 = vmatpush2.msra.mxu0 0.0
        %1451 = vmatprep.mubr.f32.mxu0 0.0
        %1452 = vmatmul.mubr.f32.gmra.mxu0 %v1385
        %v1453 = vpop.f32.mrf.mxu0
        %v1454 = vadd.f32 0.0, %v1453
        %v1455 = vpop.f32.mrf.mxu0
        %1456 = vdwg.mxu0
        %v1457 = vadd.f32 %v1384, %v1454
        %v1458 = vxor.u32 %v1457, 2147483648
        %v1459 = vmul.f32 %v1458, 1.442695
        %v1460 = vpow.pop %v1459
        %v1461 = vadd.f32 %v1460, 1.0
        %v1462 = vrcp.pop %v1461
        %v1463 = vmul.f32 1.0, %v1462
        %v1464 = vtanh.pop %v1457
        %v1465 = vmul.f32 %v1463, %v1371
        %1467 = vrot.lane.b32.xlu0 %v1464, 64
        %v1468 = vpop.permute.xlu0 %1467
        %v1470 = vmul.f32 %v1463, %v1468
        %1472 = vrot.lane.b32.xlu0 %v1470, 32
        %v1473 = vpop.permute.xlu0 %1472
        %v1475 = vadd.f32 %v1465, %v1473
        %v1476 = vtanh.pop %v1475
        %1478 = vrot.lane.b32.xlu0 %v1476, 64
        %v1479 = vpop.permute.xlu0 %1478
        %v1481 = vmul.f32 %v1463, %v1479
        %1483 = vrot.lane.b32.xlu0 %v1481, 32
        %v1484 = vpop.permute.xlu0 %1483
        %s1486 = scalar_lea.vmem %s231, 10
        %1487 = vst.msk [vmem:[%s1486] sm:$0x3] %vm1278, %v1484
        %v1488 = vld [vmem:[#allocation2 + $0x8] sm:$0x3]
        %v1489 = vsel %vm245, %v1484, 0
        %1491 = vmatprep.subr.mxu0 0.0
        %1492 = vmatpush1.msra.mxu0 0.0
        %1493 = vmatprep.subr.mxu0 0.0
        %1494 = vmatpush1.msra.mxu0 0.0
        %1495 = vmatprep.subr.mxu0 0.0
        %1496 = vmatpush1.msra.mxu0 0.0
        %1497 = vmatprep.subr.mxu0 0.0
        %1498 = vmatpush1.msra.mxu0 0.0
        %1499 = vmatprep.subr.mxu0 0.0
        %1500 = vmatpush1.msra.mxu0 0.0
        %1501 = vmatprep.subr.mxu0 0.0
        %1502 = vmatpush1.msra.mxu0 0.0
        %1503 = vmatprep.subr.mxu0 0.0
        %1504 = vmatpush1.msra.mxu0 0.0
        %1505 = vmatprep.subr.mxu0 0.0
        %1506 = vmatpush1.msra.mxu0 0.0
        %1507 = vmatprep.subr.mxu0 0.0
        %1508 = vmatpush1.msra.mxu0 0.0
        %1509 = vmatprep.subr.mxu0 0.0
        %1510 = vmatpush1.msra.mxu0 0.0
        %1511 = vmatprep.subr.mxu0 0.0
        %1512 = vmatpush1.msra.mxu0 0.0
        %1513 = vmatprep.subr.mxu0 0.0
        %1514 = vmatpush1.msra.mxu0 0.0
        %1515 = vmatprep.subr.mxu0 0.0
        %1516 = vmatpush1.msra.mxu0 %v332
        %1517 = vmatprep.subr.mxu0 0.0
        %1518 = vmatpush1.msra.mxu0 %v331
        %1519 = vmatprep.subr.mxu0 0.0
        %1520 = vmatpush1.msra.mxu0 %v330
        %1521 = vmatprep.subr.mxu0 0.0
        %1522 = vmatpush1.msra.mxu0 %v329
        %1523 = vmatprep.subr.mxu0 0.0
        %1524 = vmatpush2.msra.mxu0 0.0
        %1525 = vmatprep.subr.mxu0 0.0
        %1526 = vmatpush2.msra.mxu0 0.0
        %1527 = vmatprep.subr.mxu0 0.0
        %1528 = vmatpush2.msra.mxu0 0.0
        %1529 = vmatprep.subr.mxu0 0.0
        %1530 = vmatpush2.msra.mxu0 0.0
        %1531 = vmatprep.subr.mxu0 0.0
        %1532 = vmatpush2.msra.mxu0 0.0
        %1533 = vmatprep.subr.mxu0 0.0
        %1534 = vmatpush2.msra.mxu0 0.0
        %1535 = vmatprep.subr.mxu0 0.0
        %1536 = vmatpush2.msra.mxu0 0.0
        %1537 = vmatprep.subr.mxu0 0.0
        %1538 = vmatpush2.msra.mxu0 0.0
        %1539 = vmatprep.subr.mxu0 0.0
        %1540 = vmatpush2.msra.mxu0 0.0
        %1541 = vmatprep.subr.mxu0 0.0
        %1542 = vmatpush2.msra.mxu0 0.0
        %1543 = vmatprep.subr.mxu0 0.0
        %1544 = vmatpush2.msra.mxu0 0.0
        %1545 = vmatprep.subr.mxu0 0.0
        %1546 = vmatpush2.msra.mxu0 0.0
        %1547 = vmatprep.subr.mxu0 0.0
        %1548 = vmatpush2.msra.mxu0 0.0
        %1549 = vmatprep.subr.mxu0 0.0
        %1550 = vmatpush2.msra.mxu0 0.0
        %1551 = vmatprep.subr.mxu0 0.0
        %1552 = vmatpush2.msra.mxu0 0.0
        %1553 = vmatprep.subr.mxu0 0.0
        %1554 = vmatpush2.msra.mxu0 0.0
        %1555 = vmatprep.mubr.f32.mxu0 0.0
        %1556 = vmatmul.mubr.f32.gmra.mxu0 %v1489
        %v1557 = vpop.f32.mrf.mxu0
        %v1558 = vadd.f32 0.0, %v1557
        %v1559 = vpop.f32.mrf.mxu0
        %1560 = vdwg.mxu0
        %v1561 = vadd.f32 %v1488, %v1558
        %v1562 = vxor.u32 %v1561, 2147483648
        %v1563 = vmul.f32 %v1562, 1.442695
        %v1564 = vpow.pop %v1563
        %v1565 = vadd.f32 %v1564, 1.0
        %v1566 = vrcp.pop %v1565
        %v1567 = vmul.f32 1.0, %v1566
        %v1568 = vtanh.pop %v1561
        %v1569 = vmul.f32 %v1567, %v1475
        %1571 = vrot.lane.b32.xlu0 %v1568, 64
        %v1572 = vpop.permute.xlu0 %1571
        %v1574 = vmul.f32 %v1567, %v1572
        %1576 = vrot.lane.b32.xlu0 %v1574, 32
        %v1577 = vpop.permute.xlu0 %1576
        %v1579 = vadd.f32 %v1569, %v1577
        %v1580 = vtanh.pop %v1579
        %1582 = vrot.lane.b32.xlu0 %v1580, 64
        %v1583 = vpop.permute.xlu0 %1582
        %v1585 = vmul.f32 %v1567, %v1583
        %1587 = vrot.lane.b32.xlu0 %v1585, 32
        %v1588 = vpop.permute.xlu0 %1587
        %s1590 = scalar_lea.vmem %s231, 8
        %1591 = vst.msk [vmem:[%s1590] sm:$0x3] %vm1278, %v1588
        %v1592 = vld [vmem:[#allocation2 + $0x6] sm:$0x3]
        %v1593 = vsel %vm245, %v1588, 0
        %1595 = vmatprep.subr.mxu0 0.0
        %1596 = vmatpush1.msra.mxu0 0.0
        %1597 = vmatprep.subr.mxu0 0.0
        %1598 = vmatpush1.msra.mxu0 0.0
        %1599 = vmatprep.subr.mxu0 0.0
        %1600 = vmatpush1.msra.mxu0 0.0
        %1601 = vmatprep.subr.mxu0 0.0
        %1602 = vmatpush1.msra.mxu0 0.0
        %1603 = vmatprep.subr.mxu0 0.0
        %1604 = vmatpush1.msra.mxu0 0.0
        %1605 = vmatprep.subr.mxu0 0.0
        %1606 = vmatpush1.msra.mxu0 0.0
        %1607 = vmatprep.subr.mxu0 0.0
        %1608 = vmatpush1.msra.mxu0 0.0
        %1609 = vmatprep.subr.mxu0 0.0
        %1610 = vmatpush1.msra.mxu0 0.0
        %1611 = vmatprep.subr.mxu0 0.0
        %1612 = vmatpush1.msra.mxu0 0.0
        %1613 = vmatprep.subr.mxu0 0.0
        %1614 = vmatpush1.msra.mxu0 0.0
        %1615 = vmatprep.subr.mxu0 0.0
        %1616 = vmatpush1.msra.mxu0 0.0
        %1617 = vmatprep.subr.mxu0 0.0
        %1618 = vmatpush1.msra.mxu0 0.0
        %1619 = vmatprep.subr.mxu0 0.0
        %1620 = vmatpush1.msra.mxu0 %v332
        %1621 = vmatprep.subr.mxu0 0.0
        %1622 = vmatpush1.msra.mxu0 %v331
        %1623 = vmatprep.subr.mxu0 0.0
        %1624 = vmatpush1.msra.mxu0 %v330
        %1625 = vmatprep.subr.mxu0 0.0
        %1626 = vmatpush1.msra.mxu0 %v329
        %1627 = vmatprep.subr.mxu0 0.0
        %1628 = vmatpush2.msra.mxu0 0.0
        %1629 = vmatprep.subr.mxu0 0.0
        %1630 = vmatpush2.msra.mxu0 0.0
        %1631 = vmatprep.subr.mxu0 0.0
        %1632 = vmatpush2.msra.mxu0 0.0
        %1633 = vmatprep.subr.mxu0 0.0
        %1634 = vmatpush2.msra.mxu0 0.0
        %1635 = vmatprep.subr.mxu0 0.0
        %1636 = vmatpush2.msra.mxu0 0.0
        %1637 = vmatprep.subr.mxu0 0.0
        %1638 = vmatpush2.msra.mxu0 0.0
        %1639 = vmatprep.subr.mxu0 0.0
        %1640 = vmatpush2.msra.mxu0 0.0
        %1641 = vmatprep.subr.mxu0 0.0
        %1642 = vmatpush2.msra.mxu0 0.0
        %1643 = vmatprep.subr.mxu0 0.0
        %1644 = vmatpush2.msra.mxu0 0.0
        %1645 = vmatprep.subr.mxu0 0.0
        %1646 = vmatpush2.msra.mxu0 0.0
        %1647 = vmatprep.subr.mxu0 0.0
        %1648 = vmatpush2.msra.mxu0 0.0
        %1649 = vmatprep.subr.mxu0 0.0
        %1650 = vmatpush2.msra.mxu0 0.0
        %1651 = vmatprep.subr.mxu0 0.0
        %1652 = vmatpush2.msra.mxu0 0.0
        %1653 = vmatprep.subr.mxu0 0.0
        %1654 = vmatpush2.msra.mxu0 0.0
        %1655 = vmatprep.subr.mxu0 0.0
        %1656 = vmatpush2.msra.mxu0 0.0
        %1657 = vmatprep.subr.mxu0 0.0
        %1658 = vmatpush2.msra.mxu0 0.0
        %1659 = vmatprep.mubr.f32.mxu0 0.0
        %1660 = vmatmul.mubr.f32.gmra.mxu0 %v1593
        %v1661 = vpop.f32.mrf.mxu0
        %v1662 = vadd.f32 0.0, %v1661
        %v1663 = vpop.f32.mrf.mxu0
        %1664 = vdwg.mxu0
        %v1665 = vadd.f32 %v1592, %v1662
        %v1666 = vxor.u32 %v1665, 2147483648
        %v1667 = vmul.f32 %v1666, 1.442695
        %v1668 = vpow.pop %v1667
        %v1669 = vadd.f32 %v1668, 1.0
        %v1670 = vrcp.pop %v1669
        %v1671 = vmul.f32 1.0, %v1670
        %v1672 = vtanh.pop %v1665
        %v1673 = vmul.f32 %v1671, %v1579
        %1675 = vrot.lane.b32.xlu0 %v1672, 64
        %v1676 = vpop.permute.xlu0 %1675
        %v1678 = vmul.f32 %v1671, %v1676
        %1680 = vrot.lane.b32.xlu0 %v1678, 32
        %v1681 = vpop.permute.xlu0 %1680
        %v1683 = vadd.f32 %v1673, %v1681
        %v1684 = vtanh.pop %v1683
        %1686 = vrot.lane.b32.xlu0 %v1684, 64
        %v1687 = vpop.permute.xlu0 %1686
        %v1689 = vmul.f32 %v1671, %v1687
        %1691 = vrot.lane.b32.xlu0 %v1689, 32
        %v1692 = vpop.permute.xlu0 %1691
        %s1694 = scalar_lea.vmem %s231, 6
        %1695 = vst.msk [vmem:[%s1694] sm:$0x3] %vm1278, %v1692
        %v1696 = vld [vmem:[#allocation2 + $0x4] sm:$0x3]
        %v1697 = vsel %vm245, %v1692, 0
        %1699 = vmatprep.subr.mxu0 0.0
        %1700 = vmatpush1.msra.mxu0 0.0
        %1701 = vmatprep.subr.mxu0 0.0
        %1702 = vmatpush1.msra.mxu0 0.0
        %1703 = vmatprep.subr.mxu0 0.0
        %1704 = vmatpush1.msra.mxu0 0.0
        %1705 = vmatprep.subr.mxu0 0.0
        %1706 = vmatpush1.msra.mxu0 0.0
        %1707 = vmatprep.subr.mxu0 0.0
        %1708 = vmatpush1.msra.mxu0 0.0
        %1709 = vmatprep.subr.mxu0 0.0
        %1710 = vmatpush1.msra.mxu0 0.0
        %1711 = vmatprep.subr.mxu0 0.0
        %1712 = vmatpush1.msra.mxu0 0.0
        %1713 = vmatprep.subr.mxu0 0.0
        %1714 = vmatpush1.msra.mxu0 0.0
        %1715 = vmatprep.subr.mxu0 0.0
        %1716 = vmatpush1.msra.mxu0 0.0
        %1717 = vmatprep.subr.mxu0 0.0
        %1718 = vmatpush1.msra.mxu0 0.0
        %1719 = vmatprep.subr.mxu0 0.0
        %1720 = vmatpush1.msra.mxu0 0.0
        %1721 = vmatprep.subr.mxu0 0.0
        %1722 = vmatpush1.msra.mxu0 0.0
        %1723 = vmatprep.subr.mxu0 0.0
        %1724 = vmatpush1.msra.mxu0 %v332
        %1725 = vmatprep.subr.mxu0 0.0
        %1726 = vmatpush1.msra.mxu0 %v331
        %1727 = vmatprep.subr.mxu0 0.0
        %1728 = vmatpush1.msra.mxu0 %v330
        %1729 = vmatprep.subr.mxu0 0.0
        %1730 = vmatpush1.msra.mxu0 %v329
        %1731 = vmatprep.subr.mxu0 0.0
        %1732 = vmatpush2.msra.mxu0 0.0
        %1733 = vmatprep.subr.mxu0 0.0
        %1734 = vmatpush2.msra.mxu0 0.0
        %1735 = vmatprep.subr.mxu0 0.0
        %1736 = vmatpush2.msra.mxu0 0.0
        %1737 = vmatprep.subr.mxu0 0.0
        %1738 = vmatpush2.msra.mxu0 0.0
        %1739 = vmatprep.subr.mxu0 0.0
        %1740 = vmatpush2.msra.mxu0 0.0
        %1741 = vmatprep.subr.mxu0 0.0
        %1742 = vmatpush2.msra.mxu0 0.0
        %1743 = vmatprep.subr.mxu0 0.0
        %1744 = vmatpush2.msra.mxu0 0.0
        %1745 = vmatprep.subr.mxu0 0.0
        %1746 = vmatpush2.msra.mxu0 0.0
        %1747 = vmatprep.subr.mxu0 0.0
        %1748 = vmatpush2.msra.mxu0 0.0
        %1749 = vmatprep.subr.mxu0 0.0
        %1750 = vmatpush2.msra.mxu0 0.0
        %1751 = vmatprep.subr.mxu0 0.0
        %1752 = vmatpush2.msra.mxu0 0.0
        %1753 = vmatprep.subr.mxu0 0.0
        %1754 = vmatpush2.msra.mxu0 0.0
        %1755 = vmatprep.subr.mxu0 0.0
        %1756 = vmatpush2.msra.mxu0 0.0
        %1757 = vmatprep.subr.mxu0 0.0
        %1758 = vmatpush2.msra.mxu0 0.0
        %1759 = vmatprep.subr.mxu0 0.0
        %1760 = vmatpush2.msra.mxu0 0.0
        %1761 = vmatprep.subr.mxu0 0.0
        %1762 = vmatpush2.msra.mxu0 0.0
        %1763 = vmatprep.mubr.f32.mxu0 0.0
        %1764 = vmatmul.mubr.f32.gmra.mxu0 %v1697
        %v1765 = vpop.f32.mrf.mxu0
        %v1766 = vadd.f32 0.0, %v1765
        %v1767 = vpop.f32.mrf.mxu0
        %1768 = vdwg.mxu0
        %v1769 = vadd.f32 %v1696, %v1766
        %v1770 = vxor.u32 %v1769, 2147483648
        %v1771 = vmul.f32 %v1770, 1.442695
        %v1772 = vpow.pop %v1771
        %v1773 = vadd.f32 %v1772, 1.0
        %v1774 = vrcp.pop %v1773
        %v1775 = vmul.f32 1.0, %v1774
        %v1776 = vtanh.pop %v1769
        %v1777 = vmul.f32 %v1775, %v1683
        %1779 = vrot.lane.b32.xlu0 %v1776, 64
        %v1780 = vpop.permute.xlu0 %1779
        %v1782 = vmul.f32 %v1775, %v1780
        %1784 = vrot.lane.b32.xlu0 %v1782, 32
        %v1785 = vpop.permute.xlu0 %1784
        %v1787 = vadd.f32 %v1777, %v1785
        %v1788 = vtanh.pop %v1787
        %1790 = vrot.lane.b32.xlu0 %v1788, 64
        %v1791 = vpop.permute.xlu0 %1790
        %v1793 = vmul.f32 %v1775, %v1791
        %1795 = vrot.lane.b32.xlu0 %v1793, 32
        %v1796 = vpop.permute.xlu0 %1795
        %s1798 = scalar_lea.vmem %s231, 4
        %1799 = vst.msk [vmem:[%s1798] sm:$0x3] %vm1278, %v1796
        %v1800 = vld [vmem:[#allocation2 + $0x2] sm:$0x3]
        %v1801 = vsel %vm245, %v1796, 0
        %1803 = vmatprep.subr.mxu0 0.0
        %1804 = vmatpush1.msra.mxu0 0.0
        %1805 = vmatprep.subr.mxu0 0.0
        %1806 = vmatpush1.msra.mxu0 0.0
        %1807 = vmatprep.subr.mxu0 0.0
        %1808 = vmatpush1.msra.mxu0 0.0
        %1809 = vmatprep.subr.mxu0 0.0
        %1810 = vmatpush1.msra.mxu0 0.0
        %1811 = vmatprep.subr.mxu0 0.0
        %1812 = vmatpush1.msra.mxu0 0.0
        %1813 = vmatprep.subr.mxu0 0.0
        %1814 = vmatpush1.msra.mxu0 0.0
        %1815 = vmatprep.subr.mxu0 0.0
        %1816 = vmatpush1.msra.mxu0 0.0
        %1817 = vmatprep.subr.mxu0 0.0
        %1818 = vmatpush1.msra.mxu0 0.0
        %1819 = vmatprep.subr.mxu0 0.0
        %1820 = vmatpush1.msra.mxu0 0.0
        %1821 = vmatprep.subr.mxu0 0.0
        %1822 = vmatpush1.msra.mxu0 0.0
        %1823 = vmatprep.subr.mxu0 0.0
        %1824 = vmatpush1.msra.mxu0 0.0
        %1825 = vmatprep.subr.mxu0 0.0
        %1826 = vmatpush1.msra.mxu0 0.0
        %1827 = vmatprep.subr.mxu0 0.0
        %1828 = vmatpush1.msra.mxu0 %v332
        %1829 = vmatprep.subr.mxu0 0.0
        %1830 = vmatpush1.msra.mxu0 %v331
        %1831 = vmatprep.subr.mxu0 0.0
        %1832 = vmatpush1.msra.mxu0 %v330
        %1833 = vmatprep.subr.mxu0 0.0
        %1834 = vmatpush1.msra.mxu0 %v329
        %1835 = vmatprep.subr.mxu0 0.0
        %1836 = vmatpush2.msra.mxu0 0.0
        %1837 = vmatprep.subr.mxu0 0.0
        %1838 = vmatpush2.msra.mxu0 0.0
        %1839 = vmatprep.subr.mxu0 0.0
        %1840 = vmatpush2.msra.mxu0 0.0
        %1841 = vmatprep.subr.mxu0 0.0
        %1842 = vmatpush2.msra.mxu0 0.0
        %1843 = vmatprep.subr.mxu0 0.0
        %1844 = vmatpush2.msra.mxu0 0.0
        %1845 = vmatprep.subr.mxu0 0.0
        %1846 = vmatpush2.msra.mxu0 0.0
        %1847 = vmatprep.subr.mxu0 0.0
        %1848 = vmatpush2.msra.mxu0 0.0
        %1849 = vmatprep.subr.mxu0 0.0
        %1850 = vmatpush2.msra.mxu0 0.0
        %1851 = vmatprep.subr.mxu0 0.0
        %1852 = vmatpush2.msra.mxu0 0.0
        %1853 = vmatprep.subr.mxu0 0.0
        %1854 = vmatpush2.msra.mxu0 0.0
        %1855 = vmatprep.subr.mxu0 0.0
        %1856 = vmatpush2.msra.mxu0 0.0
        %1857 = vmatprep.subr.mxu0 0.0
        %1858 = vmatpush2.msra.mxu0 0.0
        %1859 = vmatprep.subr.mxu0 0.0
        %1860 = vmatpush2.msra.mxu0 0.0
        %1861 = vmatprep.subr.mxu0 0.0
        %1862 = vmatpush2.msra.mxu0 0.0
        %1863 = vmatprep.subr.mxu0 0.0
        %1864 = vmatpush2.msra.mxu0 0.0
        %1865 = vmatprep.subr.mxu0 0.0
        %1866 = vmatpush2.msra.mxu0 0.0
        %1867 = vmatprep.mubr.f32.mxu0 0.0
        %1868 = vmatmul.mubr.f32.gmra.mxu0 %v1801
        %v1869 = vpop.f32.mrf.mxu0
        %v1870 = vadd.f32 0.0, %v1869
        %v1871 = vpop.f32.mrf.mxu0
        %1872 = vdwg.mxu0
        %v1873 = vadd.f32 %v1800, %v1870
        %v1874 = vxor.u32 %v1873, 2147483648
        %v1875 = vmul.f32 %v1874, 1.442695
        %v1876 = vpow.pop %v1875
        %v1877 = vadd.f32 %v1876, 1.0
        %v1878 = vrcp.pop %v1877
        %v1879 = vmul.f32 1.0, %v1878
        %v1880 = vtanh.pop %v1873
        %v1881 = vmul.f32 %v1879, %v1787
        %1883 = vrot.lane.b32.xlu0 %v1880, 64
        %v1884 = vpop.permute.xlu0 %1883
        %v1886 = vmul.f32 %v1879, %v1884
        %1888 = vrot.lane.b32.xlu0 %v1886, 32
        %v1889 = vpop.permute.xlu0 %1888
        %v1891 = vadd.f32 %v1881, %v1889
        %v1892 = vtanh.pop %v1891
        %1894 = vrot.lane.b32.xlu0 %v1892, 64
        %v1895 = vpop.permute.xlu0 %1894
        %v1897 = vmul.f32 %v1879, %v1895
        %1899 = vrot.lane.b32.xlu0 %v1897, 32
        %v1900 = vpop.permute.xlu0 %1899
        %s1902 = scalar_lea.vmem %s231, 2
        %1903 = vst.msk [vmem:[%s1902] sm:$0x3] %vm1278, %v1900
        %v1904 = vld [vmem:[#allocation2] sm:$0x3]
        %v1905 = vsel %vm245, %v1900, 0
        %1907 = vmatprep.subr.mxu0 0.0
        %1908 = vmatpush1.msra.mxu0 0.0
        %1909 = vmatprep.subr.mxu0 0.0
        %1910 = vmatpush1.msra.mxu0 0.0
        %1911 = vmatprep.subr.mxu0 0.0
        %1912 = vmatpush1.msra.mxu0 0.0
        %1913 = vmatprep.subr.mxu0 0.0
        %1914 = vmatpush1.msra.mxu0 0.0
        %1915 = vmatprep.subr.mxu0 0.0
        %1916 = vmatpush1.msra.mxu0 0.0
        %1917 = vmatprep.subr.mxu0 0.0
        %1918 = vmatpush1.msra.mxu0 0.0
        %1919 = vmatprep.subr.mxu0 0.0
        %1920 = vmatpush1.msra.mxu0 0.0
        %1921 = vmatprep.subr.mxu0 0.0
        %1922 = vmatpush1.msra.mxu0 0.0
        %1923 = vmatprep.subr.mxu0 0.0
        %1924 = vmatpush1.msra.mxu0 0.0
        %1925 = vmatprep.subr.mxu0 0.0
        %1926 = vmatpush1.msra.mxu0 0.0
        %1927 = vmatprep.subr.mxu0 0.0
        %1928 = vmatpush1.msra.mxu0 0.0
        %1929 = vmatprep.subr.mxu0 0.0
        %1930 = vmatpush1.msra.mxu0 0.0
        %1931 = vmatprep.subr.mxu0 0.0
        %1932 = vmatpush1.msra.mxu0 %v332
        %1933 = vmatprep.subr.mxu0 0.0
        %1934 = vmatpush1.msra.mxu0 %v331
        %1935 = vmatprep.subr.mxu0 0.0
        %1936 = vmatpush1.msra.mxu0 %v330
        %1937 = vmatprep.subr.mxu0 0.0
        %1938 = vmatpush1.msra.mxu0 %v329
        %1939 = vmatprep.subr.mxu0 0.0
        %1940 = vmatpush2.msra.mxu0 0.0
        %1941 = vmatprep.subr.mxu0 0.0
        %1942 = vmatpush2.msra.mxu0 0.0
        %1943 = vmatprep.subr.mxu0 0.0
        %1944 = vmatpush2.msra.mxu0 0.0
        %1945 = vmatprep.subr.mxu0 0.0
        %1946 = vmatpush2.msra.mxu0 0.0
        %1947 = vmatprep.subr.mxu0 0.0
        %1948 = vmatpush2.msra.mxu0 0.0
        %1949 = vmatprep.subr.mxu0 0.0
        %1950 = vmatpush2.msra.mxu0 0.0
        %1951 = vmatprep.subr.mxu0 0.0
        %1952 = vmatpush2.msra.mxu0 0.0
        %1953 = vmatprep.subr.mxu0 0.0
        %1954 = vmatpush2.msra.mxu0 0.0
        %1955 = vmatprep.subr.mxu0 0.0
        %1956 = vmatpush2.msra.mxu0 0.0
        %1957 = vmatprep.subr.mxu0 0.0
        %1958 = vmatpush2.msra.mxu0 0.0
        %1959 = vmatprep.subr.mxu0 0.0
        %1960 = vmatpush2.msra.mxu0 0.0
        %1961 = vmatprep.subr.mxu0 0.0
        %1962 = vmatpush2.msra.mxu0 0.0
        %1963 = vmatprep.subr.mxu0 0.0
        %1964 = vmatpush2.msra.mxu0 0.0
        %1965 = vmatprep.subr.mxu0 0.0
        %1966 = vmatpush2.msra.mxu0 0.0
        %1967 = vmatprep.subr.mxu0 0.0
        %1968 = vmatpush2.msra.mxu0 0.0
        %1969 = vmatprep.subr.mxu0 0.0
        %1970 = vmatpush2.msra.mxu0 0.0
        %1971 = vmatprep.mubr.f32.mxu0 0.0
        %1972 = vmatmul.mubr.f32.gmra.mxu0 %v1905
        %v1973 = vpop.f32.mrf.mxu0
        %v1974 = vadd.f32 0.0, %v1973
        %v1975 = vpop.f32.mrf.mxu0
        %1976 = vdwg.mxu0
        %v1977 = vadd.f32 %v1904, %v1974
        %v1978 = vxor.u32 %v1977, 2147483648
        %v1979 = vmul.f32 %v1978, 1.442695
        %v1980 = vpow.pop %v1979
        %v1981 = vadd.f32 %v1980, 1.0
        %v1982 = vrcp.pop %v1981
        %v1983 = vmul.f32 1.0, %v1982
        %v1984 = vtanh.pop %v1977
        %v1985 = vmul.f32 %v1983, %v1891
        %1987 = vrot.lane.b32.xlu0 %v1984, 64
        %v1988 = vpop.permute.xlu0 %1987
        %v1990 = vmul.f32 %v1983, %v1988
        %1992 = vrot.lane.b32.xlu0 %v1990, 32
        %v1993 = vpop.permute.xlu0 %1992
        %v1995 = vadd.f32 %v1985, %v1993
        %v1996 = vtanh.pop %v1995
        %1998 = vrot.lane.b32.xlu0 %v1996, 64
        %v1999 = vpop.permute.xlu0 %1998
        %v2001 = vmul.f32 %v1983, %v1999
        %2003 = vrot.lane.b32.xlu0 %v2001, 32
        %v2004 = vpop.permute.xlu0 %2003
        %2006 = vst.msk [vmem:[%s231] sm:$0x3] %vm1278, %v2004
      $region44: #{poem_generator_forward.3} parent=35 // pred_fallthru
        _
      %p2007 = scmp.lt.s32.totalorder %s15, 1
      %s2008 = scalar_select %p2007, %s15, 1
      %s2009 = smul.addr %s2008, 8
      %s2010 = smul.addr %s2009, 2
      %s2011 = scalar_lea.vmem %s4, %s2010
      // Predicated region
      $region45: #{poem_generator_forward.3} parent=35 // pred_check
        %p2012 = pneg %p132
      $region46: #{poem_generator_forward.3} parent=35 // pred_check_branch
        %2014 = sbr.rel (%p2012) target = $region48
      $region47: #{poem_generator_forward.3} parent=35 // pred_region
        _
      $region48: #{poem_generator_forward.3} parent=35 // pred_fallthru
        _
    $region36: #{poem_generator_forward.3} parent=5 // pred_fallthru
      _
    %p2015 = scmp.le.s32.totalorder 2, %s10
    // Predicated region
    $region49: #{poem_generator_forward.3} parent=5 // pred_check
      %p2016 = pneg %p2015
    $region50: #{poem_generator_forward.3} parent=5 // pred_check_branch
      %2018 = sbr.rel (%p2016) target = $region52
    $region51: #{poem_generator_forward.3} parent=5 // pred_region
      %s2019 = ssub.s32 %s10, 2
      // Predicated region
      $region53: #{poem_generator_forward.3} parent=51 // pred_check
        %p2020 = pneg %p138
      $region54: #{poem_generator_forward.3} parent=51 // pred_check_branch
        %2022 = sbr.rel (%p2020) target = $region56
      $region55: #{poem_generator_forward.3} parent=51 // pred_region
        %p2023 = scmp.lt.s32.totalorder %s16, 1
        %s2024 = scalar_select %p2023, %s16, 1
        %s2025 = smul.addr %s2024, 8
        %s2026 = smul.addr %s2025, 2
        %s2027 = scalar_lea.vmem %s4, %s2026
      $region56: #{poem_generator_forward.3} parent=51 // pred_fallthru
        _
    $region52: #{poem_generator_forward.3} parent=5 // pred_fallthru
      _
  $region6: #{poem_generator_forward.3} parent=0 // loop_footer
    %s14 = sadd.s32 1, %s10
  $region7: #{poem_generator_forward.3} parent=0 // loop_footer_branch
    %9 = sbr.rel target = $region3
  $region8: #{poem_generator_forward.3} parent=0 // loop_exit
    _

</llo_original>
